<compile_context>
chip_gen: v7x
topology: tpu7x:2x2x1
jax: 0.10.0
libtpu: 0.0.40
codegen_flags: <defaults>
</compile_context>

<pallas_src>
import math
import functools

import jax
import jax.numpy as jnp
from jax import lax
from jax.experimental import pallas as pl
from jax.experimental.pallas import tpu as pltpu


# ---------------------------------------------------------------------------
# Fused kernel: per-head-block QKV projection + attention + output projection
# ---------------------------------------------------------------------------
def mha_fused_kernel(x_ref, wq_ref, wk_ref, wv_ref, wo_ref, o_ref, *rest,
                     heads_per_block, compute_dtype, return_attn):
    """One grid step processes `heads_per_block` attention heads.

    x_ref     : (S, F)           resident input (same block every step)
    wq/wk/wv  : (Hb, F, d_k)     per-head projection slabs (scale in wq)
    wo_ref    : (Hb*d_k, F)      this head-block's rows of Wo^T
    o_ref     : (S, F)           final output, written once on the last step
    attn_ref  : (Hb, S, S)       attention probabilities (optional output)
    acc_ref   : (S, F) f32       VMEM scratch accumulator (persists across steps)
    """
    if return_attn:
        attn_ref, acc_ref = rest
    else:
        (acc_ref,) = rest

    hb = pl.program_id(0)
    cd = compute_dtype

    def mm(a, b):                       # (M,K) @ (K,N), f32 accumulation
        return jnp.dot(a.astype(cd), b.astype(cd),
                       preferred_element_type=jnp.float32)

    def mm_nt(a, b):                    # a @ b.T, contract last axes (no transpose)
        return lax.dot_general(a.astype(cd), b.astype(cd),
                               (((1,), (1,)), ((), ())),
                               preferred_element_type=jnp.float32)

    x = x_ref[...]                      # (S, F), already in compute dtype

    y_parts = []
    for i in range(heads_per_block):    # static unroll over heads in this block
        q = mm(x, wq_ref[i])            # (S, d_k); 1/sqrt(d_k) folded into wq
        k = mm(x, wk_ref[i])            # (S, d_k)
        v = mm(x, wv_ref[i])            # (S, d_k)

        s = mm_nt(q, k)                 # (S, S) f32 scores
        m = jnp.max(s, axis=-1, keepdims=True)
        p = jnp.exp(s - m)
        l = jnp.sum(p, axis=-1, keepdims=True)
        attn = p * (1.0 / l)            # exact softmax (stored module output)

        if return_attn:
            attn_ref[i] = attn.astype(attn_ref.dtype)

        y_parts.append(mm(attn, v))     # (S, d_k) f32; dropout = identity (eval)

    # Merge this block's heads and apply their slice of Wo in ONE matmul
    # (K = Hb*d_k instead of Hb separate K = d_k matmuls).
    y_blk = (jnp.concatenate(y_parts, axis=-1)
             if heads_per_block > 1 else y_parts[0])          # (S, Hb*d_k)
    part = mm(y_blk, wo_ref[...])                             # (S, F) f32

    @pl.when(hb == 0)
    def _init():
        acc_ref[...] = jnp.zeros_like(acc_ref)

    acc_ref[...] += part

    @pl.when(hb == pl.num_programs(0) - 1)
    def _finalize():
        o_ref[...] = acc_ref[...].astype(o_ref.dtype)


# ---------------------------------------------------------------------------
# One-time parameter preparation (outside the hot path)
# ---------------------------------------------------------------------------
def prepare_mha_params(wq, wk, wv, wo, num_head):
    """PyTorch Linear weights (out_features, in_features) -> kernel layouts.

    Returns:
      wq_h, wk_h, wv_h : (H, F, d_k)  per-head column slabs of W^T so the
                         kernel computes x @ slab directly (no in-kernel
                         transposes, no non-lane-aligned Q/K/V slicing).
                         1/sqrt(d_k) is folded into wq_h.
      wo_t             : (F, F)       fc weight transposed; rows
                         [h*d_k, (h+1)*d_k) belong to head h.
    """
    F = wq.shape[0]
    d_k = F // num_head
    scale = 1.0 / math.sqrt(d_k)

    def per_head(w):                    # (F_out, F_in) -> (H, F_in, d_k)
        return jnp.transpose(w.T.reshape(F, num_head, d_k), (1, 0, 2))

    wq_h = per_head(wq) * scale
    wk_h = per_head(wk)
    wv_h = per_head(wv)
    return wq_h, wk_h, wv_h, wo.T


# ---------------------------------------------------------------------------
# Wrapper
# ---------------------------------------------------------------------------
def multi_head_attention(x, wq_h, wk_h, wv_h, wo_t, *,
                         heads_per_block=None,
                         compute_dtype=jnp.bfloat16,
                         attn_dtype=jnp.float32,
                         out_dtype=jnp.float32,
                         return_attn=True):
    """x: (1, S, F); wq_h/wk_h/wv_h: (H, F, d_k); wo_t: (F, F)."""
    _, S, F = x.shape
    num_head, _, d_k = wq_h.shape
    if heads_per_block is None:
        heads_per_block = num_head      # single grid step, single full-K Wo matmul
    assert num_head % heads_per_block == 0
    Hb = heads_per_block
    n_blocks = num_head // Hb

    # Pre-cast once (outside the kernel) so there are no per-step VPU casts.
    x2 = x[0].astype(compute_dtype)
    wq_c = wq_h.astype(compute_dtype)
    wk_c = wk_h.astype(compute_dtype)
    wv_c = wv_h.astype(compute_dtype)
    wo_c = wo_t.astype(compute_dtype)

    kernel = functools.partial(mha_fused_kernel, heads_per_block=Hb,
                               compute_dtype=compute_dtype,
                               return_attn=return_attn)

    # Explicit VMEM budget (v5e default scoped limit is only 16 MiB).
    esz = jnp.dtype(compute_dtype).itemsize
    asz = jnp.dtype(attn_dtype).itemsize
    need = (S * F * esz                                   # resident x
            + 2 * S * F * 4                               # output + f32 accumulator
            + 2 * (3 * Hb * F * d_k + Hb * d_k * F) * esz  # weights (double-buffered)
            + (2 * Hb * S * S * asz if return_attn else 0))
    vmem_limit = int(min(max(2 * need, 32 * 1024 * 1024), 64 * 1024 * 1024))

    y_spec = pl.BlockSpec((S, F), lambda hb: (0, 0))
    in_specs = [
        pl.BlockSpec((S, F), lambda hb: (0, 0)),             # x (resident)
        pl.BlockSpec((Hb, F, d_k), lambda hb: (hb, 0, 0)),   # Wq slabs
        pl.BlockSpec((Hb, F, d_k), lambda hb: (hb, 0, 0)),   # Wk slabs
        pl.BlockSpec((Hb, F, d_k), lambda hb: (hb, 0, 0)),   # Wv slabs
        pl.BlockSpec((Hb * d_k, F), lambda hb: (hb, 0)),     # Wo^T row-slice
    ]
    if return_attn:
        out_shape = (jax.ShapeDtypeStruct((S, F), out_dtype),
                     jax.ShapeDtypeStruct((num_head, S, S), attn_dtype))
        out_specs = (y_spec, pl.BlockSpec((Hb, S, S), lambda hb: (hb, 0, 0)))
    else:
        out_shape = jax.ShapeDtypeStruct((S, F), out_dtype)
        out_specs = y_spec

    outs = pl.pallas_call(
        kernel,
        out_shape=out_shape,
        grid=(n_blocks,),
        in_specs=in_specs,
        out_specs=out_specs,
        scratch_shapes=[pltpu.VMEM((S, F), jnp.float32)],
        compiler_params=pltpu.CompilerParams(
            dimension_semantics=("arbitrary",),   # cross-block Wo accumulation
            vmem_limit_bytes=vmem_limit),
    )(x2, wq_c, wk_c, wv_c, wo_c)

    if return_attn:
        y, attn = outs
        return y[None], attn
    return outs[None], None


# ---------------------------------------------------------------------------
# Pure-JAX reference (mirrors the PyTorch forward, eval mode)
# ---------------------------------------------------------------------------
def reference(x, wq, wk, wv, wo, num_head):
    _, S, F = x.shape
    d_k = F // num_head
    with jax.default_matmul_precision("highest"):
        x2 = x[0]
        Q = x2 @ wq.T
        K = x2 @ wk.T
        V = x2 @ wv.T
        Qh = Q.reshape(S, num_head, d_k).transpose(1, 0, 2)
        Kh = K.reshape(S, num_head, d_k).transpose(1, 0, 2)
        Vh = V.reshape(S, num_head, d_k).transpose(1, 0, 2)
        s = jnp.einsum("hqd,hkd->hqk", Qh, Kh) / math.sqrt(d_k)
        attn = jax.nn.softmax(s, axis=-1)
        y = jnp.einsum("hqk,hkd->hqd", attn, Vh)
        y = y.transpose(1, 0, 2).reshape(S, F)
        y = y @ wo.T
    return y[None], attn


# ---------------------------------------------------------------------------
if __name__ == "__main__":
    num_head = 8
    num_feature = 256       # small stand-in for 1024; d_k = 32
    seq_len = 128           # multiple of 128 -> lane-dense score/attn stores
    batch = 1               # PyTorch forward hard-codes batch = 1

    key = jax.random.PRNGKey(0)
    kx, kq, kk, kv, ko = jax.random.split(key, 5)
    wscale = 1.0 / math.sqrt(num_feature)
    x = jax.random.normal(kx, (batch, seq_len, num_feature), jnp.float32)
    wq = jax.random.normal(kq, (num_feature, num_feature), jnp.float32) * wscale
    wk = jax.random.normal(kk, (num_feature, num_feature), jnp.float32) * wscale
    wv = jax.random.normal(kv, (num_feature, num_feature), jnp.float32) * wscale
    wo = jax.random.normal(ko, (num_feature, num_feature), jnp.float32) * wscale

    # One-time weight layout prep (outside the hot path).
    wq_h, wk_h, wv_h, wo_t = prepare_mha_params(wq, wk, wv, wo, num_head)

    y_ref, attn_ref = reference(x, wq, wk, wv, wo, num_head)

    # (a) f32 path, 2 heads per grid step (exercises the multi-step
    #     scratch-accumulation path), attention probabilities returned.
    y32, attn32 = multi_head_attention(
        x, wq_h, wk_h, wv_h, wo_t,
        heads_per_block=2, compute_dtype=jnp.float32, return_attn=True)
    y32 = jax.block_until_ready(y32)
    attn32 = jax.block_until_ready(attn32)

    assert y32.shape == (batch, seq_len, num_feature)
    assert attn32.shape == (num_head, seq_len, seq_len)
    assert bool(jnp.all(jnp.isfinite(y32)))
    assert bool(jnp.allclose(y32, y_ref, atol=1e-2, rtol=1e-2)), (
        "y mismatch, max|dy|=%g" % float(jnp.max(jnp.abs(y32 - y_ref))))
    assert bool(jnp.allclose(attn32, attn_ref, atol=1e-2, rtol=1e-2)), (
        "attn mismatch, max|da|=%g" % float(jnp.max(jnp.abs(attn32 - attn_ref))))

    # (b) bf16 MXU path, all heads fused into one grid step (single full-K Wo
    #     matmul), attention output dropped (no (H,S,S) HBM writeback).
    y16, _ = multi_head_attention(
        x, wq_h, wk_h, wv_h, wo_t,
        compute_dtype=jnp.bfloat16, return_attn=False)
    y16 = jax.block_until_ready(y16)
    assert y16.shape == (batch, seq_len, num_feature)
    assert bool(jnp.allclose(y16.astype(jnp.float32), y_ref, atol=1e-1, rtol=1e-1))

    print("KERNEL_OK")
</pallas_src>

<mosaic_0001>
module attributes {stable_mosaic.version = 11 : i64} {
  func.func @mha_fused_kernel(%arg0: i32, %arg1: memref<128x256xf32, #tpu.memory_space<vmem>>, %arg2: memref<2x256x32xf32, #tpu.memory_space<vmem>>, %arg3: memref<2x256x32xf32, #tpu.memory_space<vmem>>, %arg4: memref<2x256x32xf32, #tpu.memory_space<vmem>>, %arg5: memref<64x256xf32, #tpu.memory_space<vmem>>, %arg6: memref<128x256xf32, #tpu.memory_space<vmem>>, %arg7: memref<2x128x128xf32, #tpu.memory_space<vmem>>, %arg8: memref<128x256xf32, #tpu.memory_space<vmem>>) attributes {dimension_semantics = [#tpu.dimension_semantics<arbitrary>], iteration_bounds = array<i64: 4>, scalar_prefetch = 0 : i64, scratch_operands = 1 : i64, tpu.core_type = #tpu.core_type<tc>, window_params = [{pipeline_mode = #tpu.pipeline_mode<synchronous>, transform_indices = @transform_0, window_bounds = array<i64: 128, 256>}, {transform_indices = @transform_1, window_bounds = array<i64: 2, 256, 32>}, {transform_indices = @transform_2, window_bounds = array<i64: 2, 256, 32>}, {transform_indices = @transform_3, window_bounds = array<i64: 2, 256, 32>}, {transform_indices = @transform_4, window_bounds = array<i64: 64, 256>}, {pipeline_mode = #tpu.pipeline_mode<synchronous>, transform_indices = @transform_5, window_bounds = array<i64: 128, 256>}, {transform_indices = @transform_6, window_bounds = array<i64: 2, 128, 128>}]} {
    %c0 = arith.constant 0 : index
    %c0_0 = arith.constant 0 : index
    %0 = vector.load %arg1[%c0, %c0_0] : memref<128x256xf32, #tpu.memory_space<vmem>>, vector<128x256xf32>
    %c0_1 = arith.constant 0 : index
    %c0_2 = arith.constant 0 : index
    %c0_3 = arith.constant 0 : index
    %1 = vector.load %arg2[%c0_1, %c0_2, %c0_3] : memref<2x256x32xf32, #tpu.memory_space<vmem>>, vector<1x256x32xf32>
    %2 = vector.shape_cast %1 : vector<1x256x32xf32> to vector<256x32xf32>
    %cst = arith.constant dense<0.000000e+00> : vector<128x32xf32>
    %3 = tpu.matmul %0, %2, %cst {dimension_numbers = #tpu.dot_dimension_numbers<[1], [0], [0], [1], [0, 0, 1, 1], [], []>} : vector<128x256xf32>, vector<256x32xf32>, vector<128x32xf32> -> vector<128x32xf32>
    %c0_4 = arith.constant 0 : index
    %c0_5 = arith.constant 0 : index
    %c0_6 = arith.constant 0 : index
    %4 = vector.load %arg3[%c0_4, %c0_5, %c0_6] : memref<2x256x32xf32, #tpu.memory_space<vmem>>, vector<1x256x32xf32>
    %5 = vector.shape_cast %4 : vector<1x256x32xf32> to vector<256x32xf32>
    %cst_7 = arith.constant dense<0.000000e+00> : vector<128x32xf32>
    %6 = tpu.matmul %0, %5, %cst_7 {dimension_numbers = #tpu.dot_dimension_numbers<[1], [0], [0], [1], [0, 0, 1, 1], [], []>} : vector<128x256xf32>, vector<256x32xf32>, vector<128x32xf32> -> vector<128x32xf32>
    %c0_8 = arith.constant 0 : index
    %c0_9 = arith.constant 0 : index
    %c0_10 = arith.constant 0 : index
    %7 = vector.load %arg4[%c0_8, %c0_9, %c0_10] : memref<2x256x32xf32, #tpu.memory_space<vmem>>, vector<1x256x32xf32>
    %8 = vector.shape_cast %7 : vector<1x256x32xf32> to vector<256x32xf32>
    %cst_11 = arith.constant dense<0.000000e+00> : vector<128x32xf32>
    %9 = tpu.matmul %0, %8, %cst_11 {dimension_numbers = #tpu.dot_dimension_numbers<[1], [0], [0], [1], [0, 0, 1, 1], [], []>} : vector<128x256xf32>, vector<256x32xf32>, vector<128x32xf32> -> vector<128x32xf32>
    %cst_12 = arith.constant dense<0.000000e+00> : vector<128x128xf32>
    %10 = tpu.matmul %3, %6, %cst_12 {dimension_numbers = #tpu.dot_dimension_numbers<[1], [1], [0], [0], [0, 0, 1, 0], [], []>} : vector<128x32xf32>, vector<128x32xf32>, vector<128x128xf32> -> vector<128x128xf32>
    %cst_13 = arith.constant dense<0xFF800000> : vector<128xf32>
    %11 = vector.multi_reduction <maximumf>, %10, %cst_13 [1] : vector<128x128xf32> to vector<128xf32>
    %12 = vector.shape_cast %11 : vector<128xf32> to vector<128x1xf32>
    %13 = vector.broadcast %12 : vector<128x1xf32> to vector<128x128xf32>
    %14 = arith.subf %10, %13 : vector<128x128xf32>
    %15 = math.exp %14 : vector<128x128xf32>
    %cst_14 = arith.constant dense<0.000000e+00> : vector<128xf32>
    %16 = vector.multi_reduction <add>, %15, %cst_14 [1] : vector<128x128xf32> to vector<128xf32>
    %17 = vector.shape_cast %16 : vector<128xf32> to vector<128x1xf32>
    %cst_15 = arith.constant 1.000000e+00 : f32
    %18 = vector.broadcast %cst_15 : f32 to vector<128x1xf32>
    %19 = arith.divf %18, %17 : vector<128x1xf32>
    %20 = vector.broadcast %19 : vector<128x1xf32> to vector<128x128xf32>
    %21 = arith.mulf %15, %20 : vector<128x128xf32>
    %c0_16 = arith.constant 0 : index
    %c0_17 = arith.constant 0 : index
    %c0_18 = arith.constant 0 : index
    %22 = vector.load %arg7[%c0_16, %c0_17, %c0_18] : memref<2x128x128xf32, #tpu.memory_space<vmem>>, vector<1x128x128xf32>
    %23 = vector.shape_cast %22 : vector<1x128x128xf32> to vector<128x128xf32>
    %24 = vector.shape_cast %21 : vector<128x128xf32> to vector<1x128x128xf32>
    tpu.vector_store %arg7[%c0_16, %c0_17, %c0_18], %24 {strides = array<i32>} : memref<2x128x128xf32, #tpu.memory_space<vmem>>, vector<1x128x128xf32>,
    %cst_19 = arith.constant dense<0.000000e+00> : vector<128x32xf32>
    %25 = tpu.matmul %21, %9, %cst_19 {dimension_numbers = #tpu.dot_dimension_numbers<[1], [0], [0], [1], [0, 0, 1, 1], [], []>} : vector<128x128xf32>, vector<128x32xf32>, vector<128x32xf32> -> vector<128x32xf32>
    %c1 = arith.constant 1 : index
    %c0_20 = arith.constant 0 : index
    %c0_21 = arith.constant 0 : index
    %26 = vector.load %arg2[%c1, %c0_20, %c0_21] : memref<2x256x32xf32, #tpu.memory_space<vmem>>, vector<1x256x32xf32>
    %27 = vector.shape_cast %26 : vector<1x256x32xf32> to vector<256x32xf32>
    %cst_22 = arith.constant dense<0.000000e+00> : vector<128x32xf32>
    %28 = tpu.matmul %0, %27, %cst_22 {dimension_numbers = #tpu.dot_dimension_numbers<[1], [0], [0], [1], [0, 0, 1, 1], [], []>} : vector<128x256xf32>, vector<256x32xf32>, vector<128x32xf32> -> vector<128x32xf32>
    %c1_23 = arith.constant 1 : index
    %c0_24 = arith.constant 0 : index
    %c0_25 = arith.constant 0 : index
    %29 = vector.load %arg3[%c1_23, %c0_24, %c0_25] : memref<2x256x32xf32, #tpu.memory_space<vmem>>, vector<1x256x32xf32>
    %30 = vector.shape_cast %29 : vector<1x256x32xf32> to vector<256x32xf32>
    %cst_26 = arith.constant dense<0.000000e+00> : vector<128x32xf32>
    %31 = tpu.matmul %0, %30, %cst_26 {dimension_numbers = #tpu.dot_dimension_numbers<[1], [0], [0], [1], [0, 0, 1, 1], [], []>} : vector<128x256xf32>, vector<256x32xf32>, vector<128x32xf32> -> vector<128x32xf32>
    %c1_27 = arith.constant 1 : index
    %c0_28 = arith.constant 0 : index
    %c0_29 = arith.constant 0 : index
    %32 = vector.load %arg4[%c1_27, %c0_28, %c0_29] : memref<2x256x32xf32, #tpu.memory_space<vmem>>, vector<1x256x32xf32>
    %33 = vector.shape_cast %32 : vector<1x256x32xf32> to vector<256x32xf32>
    %cst_30 = arith.constant dense<0.000000e+00> : vector<128x32xf32>
    %34 = tpu.matmul %0, %33, %cst_30 {dimension_numbers = #tpu.dot_dimension_numbers<[1], [0], [0], [1], [0, 0, 1, 1], [], []>} : vector<128x256xf32>, vector<256x32xf32>, vector<128x32xf32> -> vector<128x32xf32>
    %cst_31 = arith.constant dense<0.000000e+00> : vector<128x128xf32>
    %35 = tpu.matmul %28, %31, %cst_31 {dimension_numbers = #tpu.dot_dimension_numbers<[1], [1], [0], [0], [0, 0, 1, 0], [], []>} : vector<128x32xf32>, vector<128x32xf32>, vector<128x128xf32> -> vector<128x128xf32>
    %cst_32 = arith.constant dense<0xFF800000> : vector<128xf32>
    %36 = vector.multi_reduction <maximumf>, %35, %cst_32 [1] : vector<128x128xf32> to vector<128xf32>
    %37 = vector.shape_cast %36 : vector<128xf32> to vector<128x1xf32>
    %38 = vector.broadcast %37 : vector<128x1xf32> to vector<128x128xf32>
    %39 = arith.subf %35, %38 : vector<128x128xf32>
    %40 = math.exp %39 : vector<128x128xf32>
    %cst_33 = arith.constant dense<0.000000e+00> : vector<128xf32>
    %41 = vector.multi_reduction <add>, %40, %cst_33 [1] : vector<128x128xf32> to vector<128xf32>
    %42 = vector.shape_cast %41 : vector<128xf32> to vector<128x1xf32>
    %cst_34 = arith.constant 1.000000e+00 : f32
    %43 = vector.broadcast %cst_34 : f32 to vector<128x1xf32>
    %44 = arith.divf %43, %42 : vector<128x1xf32>
    %45 = vector.broadcast %44 : vector<128x1xf32> to vector<128x128xf32>
    %46 = arith.mulf %40, %45 : vector<128x128xf32>
    %c1_35 = arith.constant 1 : index
    %c0_36 = arith.constant 0 : index
    %c0_37 = arith.constant 0 : index
    %47 = vector.load %arg7[%c1_35, %c0_36, %c0_37] : memref<2x128x128xf32, #tpu.memory_space<vmem>>, vector<1x128x128xf32>
    %48 = vector.shape_cast %47 : vector<1x128x128xf32> to vector<128x128xf32>
    %49 = vector.shape_cast %46 : vector<128x128xf32> to vector<1x128x128xf32>
    tpu.vector_store %arg7[%c1_35, %c0_36, %c0_37], %49 {strides = array<i32>} : memref<2x128x128xf32, #tpu.memory_space<vmem>>, vector<1x128x128xf32>,
    %cst_38 = arith.constant dense<0.000000e+00> : vector<128x32xf32>
    %50 = tpu.matmul %46, %34, %cst_38 {dimension_numbers = #tpu.dot_dimension_numbers<[1], [0], [0], [1], [0, 0, 1, 1], [], []>} : vector<128x128xf32>, vector<128x32xf32>, vector<128x32xf32> -> vector<128x32xf32>
    %51 = tpu.concatenate %25, %50 in 1 : vector<128x32xf32>, vector<128x32xf32> -> vector<128x64xf32>
    %c0_39 = arith.constant 0 : index
    %c0_40 = arith.constant 0 : index
    %52 = vector.load %arg5[%c0_39, %c0_40] : memref<64x256xf32, #tpu.memory_space<vmem>>, vector<64x256xf32>
    %cst_41 = arith.constant dense<0.000000e+00> : vector<128x256xf32>
    %53 = tpu.matmul %51, %52, %cst_41 {dimension_numbers = #tpu.dot_dimension_numbers<[1], [0], [0], [1], [0, 0, 1, 1], [], []>} : vector<128x64xf32>, vector<64x256xf32>, vector<128x256xf32> -> vector<128x256xf32>
    %c0_i32 = arith.constant 0 : i32
    %54 = arith.cmpi eq, %arg0, %c0_i32 : i32
    %55 = arith.extui %54 : i1 to i32
    %c0_i32_42 = arith.constant 0 : i32
    %56 = arith.cmpi ne, %55, %c0_i32_42 : i32
    scf.if %56 {
      %cst_48 = arith.constant 0.000000e+00 : f32
      %63 = vector.broadcast %cst_48 : f32 to vector<128x256xf32>
      %c0_49 = arith.constant 0 : index
      %c0_50 = arith.constant 0 : index
      %64 = vector.load %arg8[%c0_49, %c0_50] : memref<128x256xf32, #tpu.memory_space<vmem>>, vector<128x256xf32>
      tpu.vector_store %arg8[%c0_49, %c0_50], %63 {strides = array<i32>} : memref<128x256xf32, #tpu.memory_space<vmem>>, vector<128x256xf32>,
    } else {
    }
    %c0_43 = arith.constant 0 : index
    %c0_44 = arith.constant 0 : index
    %57 = vector.load %arg8[%c0_43, %c0_44] : memref<128x256xf32, #tpu.memory_space<vmem>>, vector<128x256xf32>
    %58 = arith.addf %57, %53 : vector<128x256xf32>
    %c0_45 = arith.constant 0 : index
    %c0_46 = arith.constant 0 : index
    %59 = vector.load %arg8[%c0_45, %c0_46] : memref<128x256xf32, #tpu.memory_space<vmem>>, vector<128x256xf32>
    tpu.vector_store %arg8[%c0_45, %c0_46], %58 {strides = array<i32>} : memref<128x256xf32, #tpu.memory_space<vmem>>, vector<128x256xf32>,
    %c3_i32 = arith.constant 3 : i32
    %60 = arith.cmpi eq, %arg0, %c3_i32 : i32
    %61 = arith.extui %60 : i1 to i32
    %c0_i32_47 = arith.constant 0 : i32
    %62 = arith.cmpi ne, %61, %c0_i32_47 : i32
    scf.if %62 {
      %c0_48 = arith.constant 0 : index
      %c0_49 = arith.constant 0 : index
      %63 = vector.load %arg8[%c0_48, %c0_49] : memref<128x256xf32, #tpu.memory_space<vmem>>, vector<128x256xf32>
      %c0_50 = arith.constant 0 : index
      %c0_51 = arith.constant 0 : index
      %64 = vector.load %arg6[%c0_50, %c0_51] : memref<128x256xf32, #tpu.memory_space<vmem>>, vector<128x256xf32>
      tpu.vector_store %arg6[%c0_50, %c0_51], %63 {strides = array<i32>} : memref<128x256xf32, #tpu.memory_space<vmem>>, vector<128x256xf32>,
    } else {
    }
    return
  }
  func.func @transform_0(%arg0: i32) -> (i32, i32) {
    %c0_i32 = arith.constant 0 : i32
    %c0_i32_0 = arith.constant 0 : i32
    %c0_i32_1 = arith.constant 0 : i32
    return %c0_i32, %c0_i32_0 : i32, i32
  }
  func.func @transform_1(%arg0: i32) -> (i32, i32, i32) {
    %c0_i32 = arith.constant 0 : i32
    %c0_i32_0 = arith.constant 0 : i32
    %c0_i32_1 = arith.constant 0 : i32
    return %arg0, %c0_i32, %c0_i32_0 : i32, i32, i32
  }
  func.func @transform_2(%arg0: i32) -> (i32, i32, i32) {
    %c0_i32 = arith.constant 0 : i32
    %c0_i32_0 = arith.constant 0 : i32
    %c0_i32_1 = arith.constant 0 : i32
    return %arg0, %c0_i32, %c0_i32_0 : i32, i32, i32
  }
  func.func @transform_3(%arg0: i32) -> (i32, i32, i32) {
    %c0_i32 = arith.constant 0 : i32
    %c0_i32_0 = arith.constant 0 : i32
    %c0_i32_1 = arith.constant 0 : i32
    return %arg0, %c0_i32, %c0_i32_0 : i32, i32, i32
  }
  func.func @transform_4(%arg0: i32) -> (i32, i32) {
    %c0_i32 = arith.constant 0 : i32
    %c0_i32_0 = arith.constant 0 : i32
    return %arg0, %c0_i32 : i32, i32
  }
  func.func @transform_5(%arg0: i32) -> (i32, i32) {
    %c0_i32 = arith.constant 0 : i32
    %c0_i32_0 = arith.constant 0 : i32
    %c0_i32_1 = arith.constant 0 : i32
    return %c0_i32, %c0_i32_0 : i32, i32
  }
  func.func @transform_6(%arg0: i32) -> (i32, i32, i32) {
    %c0_i32 = arith.constant 0 : i32
    %c0_i32_0 = arith.constant 0 : i32
    %c0_i32_1 = arith.constant 0 : i32
    return %arg0, %c0_i32, %c0_i32_0 : i32, i32, i32
  }
}

</mosaic_0001>

<llo_original>
// kernel: tpu_custom_call.1
$region0: #{tpu_custom_call.1}
  #allocation0 [shape = 'u32[]', space=smem, size = 0x4, offset = 0x4, fixed_abs, tag = 'smem constant byte address 0x4 - core index']
  #allocation1 [shape = 'u32[144,128]{1,0:T(1,128)}', space=vmem, size = 0x12000, scoped, tag = 'internal scratch']
  #allocation2 [shape = 'f32[128,256]{1,0:T(8,128)}', space=vmem, size = 0x20000, scoped, tag = 'scratch operand']
  %s0 = inlined_call_operand.vmem [shape: f32[128,256], index: 0, kind: input, shape index: {}]
  %s1 = inlined_call_operand.vmem [shape: f32[8,256,32], index: 1, kind: input, shape index: {}]
  %s2 = inlined_call_operand.vmem [shape: f32[8,256,32], index: 2, kind: input, shape index: {}]
  %s3 = inlined_call_operand.vmem [shape: f32[8,256,32], index: 3, kind: input, shape index: {}]
  %s4 = inlined_call_operand.vmem [shape: f32[256,256], index: 4, kind: input, shape index: {}]
  %s5 = inlined_call_operand.hbm [shape: f32[128,256], index: 5, kind: output, shape index: {0}]
  %s6 = inlined_call_operand.hbm [shape: f32[8,128,128], index: 6, kind: output, shape index: {1}]
  %7 = xla_tuple %s5, %s6
  %s8 = sld [smem:[#allocation0]]
  $region69: #{tpu_custom_call.1} parent=0
    _
  %s10 = ssub.s32 1, %s8
  %s11 = scalar_select 0, %s10, %s8
  $region1: #{tpu_custom_call.1} parent=0
    #allocation3 [shape = 'u8[131072]{0}', space=vmem, size = 0x20000, scoped, tag = 'output window, operand 0, single buffered']
    #allocation4 [shape = 's32[2]{0}', space=sflag, size = 0x8, scoped, tag = 'scoped memory for tpu_custom_call.1']
    #allocation5 [shape = 'u8[262144]{0}', space=vmem, size = 0x40000, scoped, tag = 'output window, operand 1']
    #allocation6 [shape = 's32[2]{0}', space=sflag, size = 0x8, scoped, tag = 'scoped memory for tpu_custom_call.1']
    %12 = vsyncpa [#allocation4], 0
    %13 = vsyncpa [#allocation6], 0
    %s14 = scalar_lea.sflag [#allocation6], 1
    %15 = vsyncpa %s14, 0
    loop: start=0, step=1, limit=6
    $region2: #{tpu_custom_call.1} parent=1 // loop_pre_header
      _
    $region3: #{tpu_custom_call.1} parent=1 // loop_header
      %s17 = sphi 0, %s21
      %p18 = scmp.ge.s32.totalorder %s17, 6
      %s25 = sphi 0, %s25
      %s27 = sphi 0, %s25
      %s28 = sphi 0, %s27
      %s42 = sphi 0, %s28
      %s48 = sphi 0, %s50
      %s51 = sphi 0, %s48
      %s52 = sphi 0, %s51
      %s68 = sphi 0, %s52
      %s74 = sphi 0, %s76
      %s77 = sphi 0, %s74
      %s78 = sphi 0, %s77
      %s94 = sphi 0, %s78
      %s100 = sphi 0, %s102
      %s103 = sphi 0, %s100
      %s104 = sphi 0, %s103
      %s120 = sphi 0, %s104
      %s126 = sphi 0, %s128
      %s129 = sphi 0, %s126
      %s130 = sphi 0, %s129
      %s146 = sphi 0, %s130
      %s150 = sphi 0, %s150
      %s152 = sphi 0, %s150
      %s153 = sphi 0, %s152
      %s167 = sphi 0, %s153
      %s173 = sphi 0, %s175
      %s176 = sphi 0, %s173
      %s177 = sphi 0, %s176
      %s193 = sphi 0, %s177
    $region4: #{tpu_custom_call.1} parent=1 // loop_header_branch
      %20 = sbr.rel (%p18) target = $region8
    $region5: #{tpu_custom_call.1} parent=1 // loop_body
      %s22 = ssub.s32 %s17, 1
      %s23 = ssub.s32 %s17, 2
      %s24 = sadd.s32 %s17, 1
      %s26 = sadd.s32 %s25, 1
      %p29 = scmp.eq.s32.totalorder %s17, 3
      %p30 = scmp.ne.s32.totalorder %s25, %s27
      %p31 = scmp.eq.s32.totalorder %s17, 0
      %p32 = por %p30, %p31
      %p33 = scmp.ne.s32.totalorder %s25, %s27
      %p34 = scmp.eq.s32.totalorder %s22, 3
      %p35 = por %p33, %p34
      %p36 = scmp.ne.s32.totalorder %s27, %s28
      %p37 = scmp.eq.s32.totalorder %s22, 0
      %p38 = por %p36, %p37
      %p39 = scmp.ne.s32.totalorder %s27, %s28
      %p40 = scmp.eq.s32.totalorder %s23, 3
      %p41 = por %p39, %p40
      %p43 = scmp.ne.s32.totalorder %s28, %s42
      %p44 = scmp.eq.s32.totalorder %s23, 0
      %p45 = por %p43, %p44
      %s46 = ssub.s32 %s17, %s24
      %p47 = scmp.eq.s32.totalorder %s46, 0
      %s49 = sadd.s32 %s48, 1
      %s50 = scalar_select %p47, %s48, %s49
      %p53 = pneg %p47
      %p54 = scmp.eq.s32.totalorder %s17, 3
      %p55 = por %p53, %p54
      %p56 = scmp.ne.s32.totalorder %s48, %s51
      %p57 = scmp.eq.s32.totalorder %s17, 0
      %p58 = por %p56, %p57
      %p59 = scmp.ne.s32.totalorder %s48, %s51
      %p60 = scmp.eq.s32.totalorder %s22, 3
      %p61 = por %p59, %p60
      %p62 = scmp.ne.s32.totalorder %s51, %s52
      %p63 = scmp.eq.s32.totalorder %s22, 0
      %p64 = por %p62, %p63
      %p65 = scmp.ne.s32.totalorder %s51, %s52
      %p66 = scmp.eq.s32.totalorder %s23, 3
      %p67 = por %p65, %p66
      %p69 = scmp.ne.s32.totalorder %s52, %s68
      %p70 = scmp.eq.s32.totalorder %s23, 0
      %p71 = por %p69, %p70
      %s72 = ssub.s32 %s17, %s24
      %p73 = scmp.eq.s32.totalorder %s72, 0
      %s75 = sadd.s32 %s74, 1
      %s76 = scalar_select %p73, %s74, %s75
      %p79 = pneg %p73
      %p80 = scmp.eq.s32.totalorder %s17, 3
      %p81 = por %p79, %p80
      %p82 = scmp.ne.s32.totalorder %s74, %s77
      %p83 = scmp.eq.s32.totalorder %s17, 0
      %p84 = por %p82, %p83
      %p85 = scmp.ne.s32.totalorder %s74, %s77
      %p86 = scmp.eq.s32.totalorder %s22, 3
      %p87 = por %p85, %p86
      %p88 = scmp.ne.s32.totalorder %s77, %s78
      %p89 = scmp.eq.s32.totalorder %s22, 0
      %p90 = por %p88, %p89
      %p91 = scmp.ne.s32.totalorder %s77, %s78
      %p92 = scmp.eq.s32.totalorder %s23, 3
      %p93 = por %p91, %p92
      %p95 = scmp.ne.s32.totalorder %s78, %s94
      %p96 = scmp.eq.s32.totalorder %s23, 0
      %p97 = por %p95, %p96
      %s98 = ssub.s32 %s17, %s24
      %p99 = scmp.eq.s32.totalorder %s98, 0
      %s101 = sadd.s32 %s100, 1
      %s102 = scalar_select %p99, %s100, %s101
      %p105 = pneg %p99
      %p106 = scmp.eq.s32.totalorder %s17, 3
      %p107 = por %p105, %p106
      %p108 = scmp.ne.s32.totalorder %s100, %s103
      %p109 = scmp.eq.s32.totalorder %s17, 0
      %p110 = por %p108, %p109
      %p111 = scmp.ne.s32.totalorder %s100, %s103
      %p112 = scmp.eq.s32.totalorder %s22, 3
      %p113 = por %p111, %p112
      %p114 = scmp.ne.s32.totalorder %s103, %s104
      %p115 = scmp.eq.s32.totalorder %s22, 0
      %p116 = por %p114, %p115
      %p117 = scmp.ne.s32.totalorder %s103, %s104
      %p118 = scmp.eq.s32.totalorder %s23, 3
      %p119 = por %p117, %p118
      %p121 = scmp.ne.s32.totalorder %s104, %s120
      %p122 = scmp.eq.s32.totalorder %s23, 0
      %p123 = por %p121, %p122
      %s124 = ssub.s32 %s17, %s24
      %p125 = scmp.eq.s32.totalorder %s124, 0
      %s127 = sadd.s32 %s126, 1
      %s128 = scalar_select %p125, %s126, %s127
      %p131 = pneg %p125
      %p132 = scmp.eq.s32.totalorder %s17, 3
      %p133 = por %p131, %p132
      %p134 = scmp.ne.s32.totalorder %s126, %s129
      %p135 = scmp.eq.s32.totalorder %s17, 0
      %p136 = por %p134, %p135
      %p137 = scmp.ne.s32.totalorder %s126, %s129
      %p138 = scmp.eq.s32.totalorder %s22, 3
      %p139 = por %p137, %p138
      %p140 = scmp.ne.s32.totalorder %s129, %s130
      %p141 = scmp.eq.s32.totalorder %s22, 0
      %p142 = por %p140, %p141
      %p143 = scmp.ne.s32.totalorder %s129, %s130
      %p144 = scmp.eq.s32.totalorder %s23, 3
      %p145 = por %p143, %p144
      %p147 = scmp.ne.s32.totalorder %s130, %s146
      %p148 = scmp.eq.s32.totalorder %s23, 0
      %p149 = por %p147, %p148
      %s151 = sadd.s32 %s150, 1
      %p154 = scmp.eq.s32.totalorder %s17, 3
      %p155 = scmp.ne.s32.totalorder %s150, %s152
      %p156 = scmp.eq.s32.totalorder %s17, 0
      %p157 = por %p155, %p156
      %p158 = scmp.ne.s32.totalorder %s150, %s152
      %p159 = scmp.eq.s32.totalorder %s22, 3
      %p160 = por %p158, %p159
      %p161 = scmp.ne.s32.totalorder %s152, %s153
      %p162 = scmp.eq.s32.totalorder %s22, 0
      %p163 = por %p161, %p162
      %p164 = scmp.ne.s32.totalorder %s152, %s153
      %p165 = scmp.eq.s32.totalorder %s23, 3
      %p166 = por %p164, %p165
      %p168 = scmp.ne.s32.totalorder %s153, %s167
      %p169 = scmp.eq.s32.totalorder %s23, 0
      %p170 = por %p168, %p169
      %s171 = ssub.s32 %s17, %s24
      %p172 = scmp.eq.s32.totalorder %s171, 0
      %s174 = sadd.s32 %s173, 1
      %s175 = scalar_select %p172, %s173, %s174
      %p178 = pneg %p172
      %p179 = scmp.eq.s32.totalorder %s17, 3
      %p180 = por %p178, %p179
      %p181 = scmp.ne.s32.totalorder %s173, %s176
      %p182 = scmp.eq.s32.totalorder %s17, 0
      %p183 = por %p181, %p182
      %p184 = scmp.ne.s32.totalorder %s173, %s176
      %p185 = scmp.eq.s32.totalorder %s22, 3
      %p186 = por %p184, %p185
      %p187 = scmp.ne.s32.totalorder %s176, %s177
      %p188 = scmp.eq.s32.totalorder %s22, 0
      %p189 = por %p187, %p188
      %p190 = scmp.ne.s32.totalorder %s176, %s177
      %p191 = scmp.eq.s32.totalorder %s23, 3
      %p192 = por %p190, %p191
      %p194 = scmp.ne.s32.totalorder %s177, %s193
      %p195 = scmp.eq.s32.totalorder %s23, 0
      %p196 = por %p194, %p195
      %p197 = scmp.le.s32.totalorder 1, %s17
      %p198 = scmp.lt.s32.totalorder %s17, 5
      %p199 = pnand %p197, %p198
      %p200 = pneg %p199
      // Predicated region
      $region9: #{tpu_custom_call.1} parent=5 // pred_check
        _
      $region10: #{tpu_custom_call.1} parent=5 // pred_check_branch
        %202 = sbr.rel (%p199) target = $region12
      $region11: #{tpu_custom_call.1} parent=5 // pred_region
        %s203 = ssub.s32 %s17, 1
        // Predicated region
        $region13: #{tpu_custom_call.1} parent=11 // pred_check
          %p204 = pneg %p38
        $region14: #{tpu_custom_call.1} parent=11 // pred_check_branch
          %206 = sbr.rel (%p204) target = $region16
        $region15: #{tpu_custom_call.1} parent=11 // pred_region
          _
        $region16: #{tpu_custom_call.1} parent=11 // pred_fallthru
          _
      $region12: #{tpu_custom_call.1} parent=5 // pred_fallthru
        _
      %p207 = scmp.lt.s32.totalorder %s17, 4
      // Predicated region
      $region17: #{tpu_custom_call.1} parent=5 // pred_check
        %p208 = pneg %p207
      $region18: #{tpu_custom_call.1} parent=5 // pred_check_branch
        %210 = sbr.rel (%p208) target = $region20
      $region19: #{tpu_custom_call.1} parent=5 // pred_region
        // Predicated region
        $region21: #{tpu_custom_call.1} parent=19 // pred_check
          %p211 = pneg %p58
        $region22: #{tpu_custom_call.1} parent=19 // pred_check_branch
          %213 = sbr.rel (%p211) target = $region24
        $region23: #{tpu_custom_call.1} parent=19 // pred_region
          %s214 = smul.u32 2, %s17
          %p215 = scmp.lt.s32.totalorder %s214, 7
          %s216 = scalar_select %p215, %s214, 7
          %s217 = smul.addr %s216, 32
          %s218 = smul.addr %s217, 8
          %s219 = scalar_lea.vmem %s1, %s218
          %s220 = smul.u32 2, %s17
        $region24: #{tpu_custom_call.1} parent=19 // pred_fallthru
          _
        // Predicated region
        $region25: #{tpu_custom_call.1} parent=19 // pred_check
          %p221 = pneg %p84
        $region26: #{tpu_custom_call.1} parent=19 // pred_check_branch
          %223 = sbr.rel (%p221) target = $region28
        $region27: #{tpu_custom_call.1} parent=19 // pred_region
          %s224 = smul.u32 2, %s17
          %p225 = scmp.lt.s32.totalorder %s224, 7
          %s226 = scalar_select %p225, %s224, 7
          %s227 = smul.addr %s226, 32
          %s228 = smul.addr %s227, 8
          %s229 = scalar_lea.vmem %s2, %s228
          %s230 = smul.u32 2, %s17
        $region28: #{tpu_custom_call.1} parent=19 // pred_fallthru
          _
        // Predicated region
        $region29: #{tpu_custom_call.1} parent=19 // pred_check
          %p231 = pneg %p110
        $region30: #{tpu_custom_call.1} parent=19 // pred_check_branch
          %233 = sbr.rel (%p231) target = $region32
        $region31: #{tpu_custom_call.1} parent=19 // pred_region
          %s234 = smul.u32 2, %s17
          %p235 = scmp.lt.s32.totalorder %s234, 7
          %s236 = scalar_select %p235, %s234, 7
          %s237 = smul.addr %s236, 32
          %s238 = smul.addr %s237, 8
          %s239 = scalar_lea.vmem %s3, %s238
          %s240 = smul.u32 2, %s17
        $region32: #{tpu_custom_call.1} parent=19 // pred_fallthru
          _
        // Predicated region
        $region33: #{tpu_custom_call.1} parent=19 // pred_check
          %p241 = pneg %p136
        $region34: #{tpu_custom_call.1} parent=19 // pred_check_branch
          %243 = sbr.rel (%p241) target = $region36
        $region35: #{tpu_custom_call.1} parent=19 // pred_region
          %s244 = smul.u32 8, %s17
          %p245 = scmp.lt.s32.totalorder %s244, 31
          %s246 = scalar_select %p245, %s244, 31
          %s247 = smul.addr %s246, 2
          %s248 = smul.addr %s247, 8
          %s249 = scalar_lea.vmem %s4, %s248
          %s250 = smul.u32 8, %s17
        $region36: #{tpu_custom_call.1} parent=19 // pred_fallthru
          _
      $region20: #{tpu_custom_call.1} parent=5 // pred_fallthru
        _
      %p251 = scmp.le.s32.totalorder 1, %s17
      %p252 = scmp.lt.s32.totalorder %s17, 5
      %p253 = pnand %p251, %p252
      %p254 = pneg %p253
      // Predicated region
      $region37: #{tpu_custom_call.1} parent=5 // pred_check
        _
      $region38: #{tpu_custom_call.1} parent=5 // pred_check_branch
        %256 = sbr.rel (%p253) target = $region40
      $region39: #{tpu_custom_call.1} parent=5 // pred_region
        %s257 = ssub.s32 %s17, 1
        %p258 = pneg %p38
        %p259 = pneg %p35
        %s260 = smul.u32 2, %s22
        %p261 = scmp.lt.s32.totalorder %s260, 7
        %s262 = scalar_select %p261, %s260, 7
        %s263 = smul.addr %s262, 32
        %s264 = smul.addr %s263, 8
        %s265 = scalar_lea.vmem %s1, %s264
        %p266 = pneg %p64
        %p267 = pneg %p61
        %s268 = smul.u32 2, %s22
        %p269 = scmp.lt.s32.totalorder %s268, 7
        %s270 = scalar_select %p269, %s268, 7
        %s271 = smul.addr %s270, 32
        %s272 = smul.addr %s271, 8
        %s273 = scalar_lea.vmem %s2, %s272
        %p274 = pneg %p90
        %p275 = pneg %p87
        %s276 = smul.u32 2, %s22
        %p277 = scmp.lt.s32.totalorder %s276, 7
        %s278 = scalar_select %p277, %s276, 7
        %s279 = smul.addr %s278, 32
        %s280 = smul.addr %s279, 8
        %s281 = scalar_lea.vmem %s3, %s280
        %p282 = pneg %p116
        %p283 = pneg %p113
        %s284 = smul.u32 8, %s22
        %p285 = scmp.lt.s32.totalorder %s284, 31
        %s286 = scalar_select %p285, %s284, 31
        %s287 = smul.addr %s286, 2
        %s288 = smul.addr %s287, 8
        %s289 = scalar_lea.vmem %s4, %s288
        %p290 = pneg %p142
        %p291 = pneg %p139
        %p292 = pneg %p163
        %p293 = pneg %p160
        %p294 = pneg %p189
        %p295 = pneg %p186
        %s296 = sand.u32 %s176, 1
        %s297 = scalar_lea.sflag [#allocation6], %s296
        %s298 = sand.u32 %s176, 1
        %s299 = smul.addr %s298, 256
        %s300 = scalar_lea.vmem [#allocation5], %s299
        %s301 = smul.u32 2, %s22
        %p302 = scmp.lt.s32.totalorder %s301, 7
        %s303 = scalar_select %p302, %s301, 7
        %s304 = smul.addr %s303, 32
        %s305 = smul.addr %s304, 8
        %s306 = scalar_lea.vmem %s1, %s305
        %s307 = smul.u32 2, %s22
        %s308 = smul.u32 2, %s22
        %p309 = scmp.lt.s32.totalorder %s308, 7
        %s310 = scalar_select %p309, %s308, 7
        %s311 = smul.addr %s310, 32
        %s312 = smul.addr %s311, 8
        %s313 = scalar_lea.vmem %s2, %s312
        %s314 = smul.u32 2, %s22
        %s315 = smul.u32 2, %s22
        %p316 = scmp.lt.s32.totalorder %s315, 7
        %s317 = scalar_select %p316, %s315, 7
        %s318 = smul.addr %s317, 32
        %s319 = smul.addr %s318, 8
        %s320 = scalar_lea.vmem %s3, %s319
        %s321 = smul.u32 2, %s22
        %s322 = smul.u32 8, %s22
        %p323 = scmp.lt.s32.totalorder %s322, 31
        %s324 = scalar_select %p323, %s322, 31
        %s325 = smul.addr %s324, 2
        %s326 = smul.addr %s325, 8
        %s327 = scalar_lea.vmem %s4, %s326
        %s328 = smul.u32 8, %s22
        %s329 = smul.u32 2, %s22
        %v330 = vld [vmem:[%s0] sm:$0xff]
        %v331 = vld [vmem:[%s0 + $0x8] sm:$0xff]
        %v332 = vld [vmem:[%s0 + $0x10] sm:$0xff]
        %v333 = vld [vmem:[%s0 + $0x18] sm:$0xff]
        %v334 = vld [vmem:[%s0 + $0x20] sm:$0xff]
        %v335 = vld [vmem:[%s0 + $0x28] sm:$0xff]
        %v336 = vld [vmem:[%s0 + $0x30] sm:$0xff]
        %v337 = vld [vmem:[%s0 + $0x38] sm:$0xff]
        %v338 = vld [vmem:[%s0 + $0x40] sm:$0xff]
        %v339 = vld [vmem:[%s0 + $0x48] sm:$0xff]
        %v340 = vld [vmem:[%s0 + $0x50] sm:$0xff]
        %v341 = vld [vmem:[%s0 + $0x58] sm:$0xff]
        %v342 = vld [vmem:[%s0 + $0x60] sm:$0xff]
        %v343 = vld [vmem:[%s0 + $0x68] sm:$0xff]
        %v344 = vld [vmem:[%s0 + $0x70] sm:$0xff]
        %v345 = vld [vmem:[%s0 + $0x78] sm:$0xff]
        %v346 = vld [vmem:[%s0 + $0x80] sm:$0xff]
        %v347 = vld [vmem:[%s0 + $0x88] sm:$0xff]
        %v348 = vld [vmem:[%s0 + $0x90] sm:$0xff]
        %v349 = vld [vmem:[%s0 + $0x98] sm:$0xff]
        %v350 = vld [vmem:[%s0 + $0xa0] sm:$0xff]
        %v351 = vld [vmem:[%s0 + $0xa8] sm:$0xff]
        %v352 = vld [vmem:[%s0 + $0xb0] sm:$0xff]
        %v353 = vld [vmem:[%s0 + $0xb8] sm:$0xff]
        %v354 = vld [vmem:[%s0 + $0xc0] sm:$0xff]
        %v355 = vld [vmem:[%s0 + $0xc8] sm:$0xff]
        %v356 = vld [vmem:[%s0 + $0xd0] sm:$0xff]
        %v357 = vld [vmem:[%s0 + $0xd8] sm:$0xff]
        %v358 = vld [vmem:[%s0 + $0xe0] sm:$0xff]
        %v359 = vld [vmem:[%s0 + $0xe8] sm:$0xff]
        %v360 = vld [vmem:[%s0 + $0xf0] sm:$0xff]
        %v361 = vld [vmem:[%s0 + $0xf8] sm:$0xff]
        %v362 = vld [vmem:[%s306] sm:$0xff]
        %v363 = vld [vmem:[%s306 + $0x8] sm:$0xff]
        %v364 = vld [vmem:[%s306 + $0x10] sm:$0xff]
        %v365 = vld [vmem:[%s306 + $0x18] sm:$0xff]
        %v366 = vld [vmem:[%s306 + $0x20] sm:$0xff]
        %v367 = vld [vmem:[%s306 + $0x28] sm:$0xff]
        %v368 = vld [vmem:[%s306 + $0x30] sm:$0xff]
        %v369 = vld [vmem:[%s306 + $0x38] sm:$0xff]
        %v370 = vld [vmem:[%s306 + $0x40] sm:$0xff]
        %v371 = vld [vmem:[%s306 + $0x48] sm:$0xff]
        %v372 = vld [vmem:[%s306 + $0x50] sm:$0xff]
        %v373 = vld [vmem:[%s306 + $0x58] sm:$0xff]
        %v374 = vld [vmem:[%s306 + $0x60] sm:$0xff]
        %v375 = vld [vmem:[%s306 + $0x68] sm:$0xff]
        %v376 = vld [vmem:[%s306 + $0x70] sm:$0xff]
        %v377 = vld [vmem:[%s306 + $0x78] sm:$0xff]
        %v378 = vld [vmem:[%s306 + $0x80] sm:$0xff]
        %v379 = vld [vmem:[%s306 + $0x88] sm:$0xff]
        %v380 = vld [vmem:[%s306 + $0x90] sm:$0xff]
        %v381 = vld [vmem:[%s306 + $0x98] sm:$0xff]
        %v382 = vld [vmem:[%s306 + $0xa0] sm:$0xff]
        %v383 = vld [vmem:[%s306 + $0xa8] sm:$0xff]
        %v384 = vld [vmem:[%s306 + $0xb0] sm:$0xff]
        %v385 = vld [vmem:[%s306 + $0xb8] sm:$0xff]
        %v386 = vld [vmem:[%s306 + $0xc0] sm:$0xff]
        %v387 = vld [vmem:[%s306 + $0xc8] sm:$0xff]
        %v388 = vld [vmem:[%s306 + $0xd0] sm:$0xff]
        %v389 = vld [vmem:[%s306 + $0xd8] sm:$0xff]
        %v390 = vld [vmem:[%s306 + $0xe0] sm:$0xff]
        %v391 = vld [vmem:[%s306 + $0xe8] sm:$0xff]
        %v392 = vld [vmem:[%s306 + $0xf0] sm:$0xff]
        %v393 = vld [vmem:[%s306 + $0xf8] sm:$0xff]
        %394 = vmatprep.subr.mxu0 0.0
        %395 = vmatpush1.msra.mxu0 %v362
        %396 = vmatprep.subr.mxu0 0.0
        %397 = vmatpush1.msra.mxu0 %v363
        %398 = vmatprep.subr.mxu0 0.0
        %399 = vmatpush1.msra.mxu0 %v364
        %400 = vmatprep.subr.mxu0 0.0
        %401 = vmatpush1.msra.mxu0 %v365
        %402 = vmatprep.subr.mxu0 0.0
        %403 = vmatpush1.msra.mxu0 %v366
        %404 = vmatprep.subr.mxu0 0.0
        %405 = vmatpush1.msra.mxu0 %v367
        %406 = vmatprep.subr.mxu0 0.0
        %407 = vmatpush1.msra.mxu0 %v368
        %408 = vmatprep.subr.mxu0 0.0
        %409 = vmatpush1.msra.mxu0 %v369
        %410 = vmatprep.subr.mxu0 0.0
        %411 = vmatpush1.msra.mxu0 %v370
        %412 = vmatprep.subr.mxu0 0.0
        %413 = vmatpush1.msra.mxu0 %v371
        %414 = vmatprep.subr.mxu0 0.0
        %415 = vmatpush1.msra.mxu0 %v372
        %416 = vmatprep.subr.mxu0 0.0
        %417 = vmatpush1.msra.mxu0 %v373
        %418 = vmatprep.subr.mxu0 0.0
        %419 = vmatpush1.msra.mxu0 %v374
        %420 = vmatprep.subr.mxu0 0.0
        %421 = vmatpush1.msra.mxu0 %v375
        %422 = vmatprep.subr.mxu0 0.0
        %423 = vmatpush1.msra.mxu0 %v376
        %424 = vmatprep.subr.mxu0 0.0
        %425 = vmatpush1.msra.mxu0 %v377
        %426 = vmatprep.subr.mxu0 0.0
        %427 = vmatpush1.msra.mxu0 %v378
        %428 = vmatprep.subr.mxu0 0.0
        %429 = vmatpush1.msra.mxu0 %v379
        %430 = vmatprep.subr.mxu0 0.0
        %431 = vmatpush1.msra.mxu0 %v380
        %432 = vmatprep.subr.mxu0 0.0
        %433 = vmatpush1.msra.mxu0 %v381
        %434 = vmatprep.subr.mxu0 0.0
        %435 = vmatpush1.msra.mxu0 %v382
        %436 = vmatprep.subr.mxu0 0.0
        %437 = vmatpush1.msra.mxu0 %v383
        %438 = vmatprep.subr.mxu0 0.0
        %439 = vmatpush1.msra.mxu0 %v384
        %440 = vmatprep.subr.mxu0 0.0
        %441 = vmatpush1.msra.mxu0 %v385
        %442 = vmatprep.subr.mxu0 0.0
        %443 = vmatpush1.msra.mxu0 %v386
        %444 = vmatprep.subr.mxu0 0.0
        %445 = vmatpush1.msra.mxu0 %v387
        %446 = vmatprep.subr.mxu0 0.0
        %447 = vmatpush1.msra.mxu0 %v388
        %448 = vmatprep.subr.mxu0 0.0
        %449 = vmatpush1.msra.mxu0 %v389
        %450 = vmatprep.subr.mxu0 0.0
        %451 = vmatpush1.msra.mxu0 %v390
        %452 = vmatprep.subr.mxu0 0.0
        %453 = vmatpush1.msra.mxu0 %v391
        %454 = vmatprep.subr.mxu0 0.0
        %455 = vmatpush1.msra.mxu0 %v392
        %456 = vmatprep.subr.mxu0 0.0
        %457 = vmatpush1.msra.mxu0 %v393
        %458 = vmatprep.mubr.f32.mxu0 %v331
        %459 = vmatmul.mubr.f32.gmra.mrb[0].mxu0 %v330
        %v460 = vpop.f32.mrb[0].mxu0
        %v461 = vadd.f32 0.0, %v460
        %v462 = vpop.f32.mrb[0].mxu0
        %463 = vmatprep.mubr.f32.mxu0 %v333
        %464 = vmatmul.mubr.f32.gmra.mrb[0].mxu0 %v332
        %v465 = vpop.f32.mrb[0].mxu0
        %v466 = vadd.f32 0.0, %v465
        %v467 = vpop.f32.mrb[0].mxu0
        %468 = vmatprep.mubr.f32.mxu0 %v335
        %469 = vmatmul.mubr.f32.gmra.mrb[0].mxu0 %v334
        %v470 = vpop.f32.mrb[0].mxu0
        %v471 = vadd.f32 0.0, %v470
        %v472 = vpop.f32.mrb[0].mxu0
        %473 = vmatprep.mubr.f32.mxu0 %v337
        %474 = vmatmul.mubr.f32.gmra.mrb[0].mxu0 %v336
        %v475 = vpop.f32.mrb[0].mxu0
        %v476 = vadd.f32 0.0, %v475
        %v477 = vpop.f32.mrb[0].mxu0
        %478 = vmatprep.mubr.f32.mxu0 %v339
        %479 = vmatmul.mubr.f32.gmra.mrb[0].mxu0 %v338
        %v480 = vpop.f32.mrb[0].mxu0
        %v481 = vadd.f32 0.0, %v480
        %v482 = vpop.f32.mrb[0].mxu0
        %483 = vmatprep.mubr.f32.mxu0 %v341
        %484 = vmatmul.mubr.f32.gmra.mrb[0].mxu0 %v340
        %v485 = vpop.f32.mrb[0].mxu0
        %v486 = vadd.f32 0.0, %v485
        %v487 = vpop.f32.mrb[0].mxu0
        %488 = vmatprep.mubr.f32.mxu0 %v343
        %489 = vmatmul.mubr.f32.gmra.mrb[0].mxu0 %v342
        %v490 = vpop.f32.mrb[0].mxu0
        %v491 = vadd.f32 0.0, %v490
        %v492 = vpop.f32.mrb[0].mxu0
        %493 = vmatprep.mubr.f32.mxu0 %v345
        %494 = vmatmul.mubr.f32.gmra.mrb[0].mxu0 %v344
        %v495 = vpop.f32.mrb[0].mxu0
        %v496 = vadd.f32 0.0, %v495
        %v497 = vpop.f32.mrb[0].mxu0
        %498 = vmatprep.mubr.f32.mxu0 %v347
        %499 = vmatmul.mubr.f32.gmra.mrb[0].mxu0 %v346
        %v500 = vpop.f32.mrb[0].mxu0
        %v501 = vadd.f32 0.0, %v500
        %v502 = vpop.f32.mrb[0].mxu0
        %503 = vmatprep.mubr.f32.mxu0 %v349
        %504 = vmatmul.mubr.f32.gmra.mrb[0].mxu0 %v348
        %v505 = vpop.f32.mrb[0].mxu0
        %v506 = vadd.f32 0.0, %v505
        %v507 = vpop.f32.mrb[0].mxu0
        %508 = vmatprep.mubr.f32.mxu0 %v351
        %509 = vmatmul.mubr.f32.gmra.mrb[0].mxu0 %v350
        %v510 = vpop.f32.mrb[0].mxu0
        %v511 = vadd.f32 0.0, %v510
        %v512 = vpop.f32.mrb[0].mxu0
        %513 = vmatprep.mubr.f32.mxu0 %v353
        %514 = vmatmul.mubr.f32.gmra.mrb[0].mxu0 %v352
        %v515 = vpop.f32.mrb[0].mxu0
        %v516 = vadd.f32 0.0, %v515
        %v517 = vpop.f32.mrb[0].mxu0
        %518 = vmatprep.mubr.f32.mxu0 %v355
        %519 = vmatmul.mubr.f32.gmra.mrb[0].mxu0 %v354
        %v520 = vpop.f32.mrb[0].mxu0
        %v521 = vadd.f32 0.0, %v520
        %v522 = vpop.f32.mrb[0].mxu0
        %523 = vmatprep.mubr.f32.mxu0 %v357
        %524 = vmatmul.mubr.f32.gmra.mrb[0].mxu0 %v356
        %v525 = vpop.f32.mrb[0].mxu0
        %v526 = vadd.f32 0.0, %v525
        %v527 = vpop.f32.mrb[0].mxu0
        %528 = vmatprep.mubr.f32.mxu0 %v359
        %529 = vmatmul.mubr.f32.gmra.mrb[0].mxu0 %v358
        %v530 = vpop.f32.mrb[0].mxu0
        %v531 = vadd.f32 0.0, %v530
        %v532 = vpop.f32.mrb[0].mxu0
        %533 = vmatprep.mubr.f32.mxu0 %v361
        %534 = vmatmul.mubr.f32.gmra.mrb[0].mxu0 %v360
        %v535 = vpop.f32.mrb[0].mxu0
        %v536 = vadd.f32 0.0, %v535
        %v537 = vpop.f32.mrb[0].mxu0
        %538 = vdwg.mxu0
        %v539 = vld [vmem:[%s313] sm:$0xff]
        %v540 = vld [vmem:[%s313 + $0x8] sm:$0xff]
        %v541 = vld [vmem:[%s313 + $0x10] sm:$0xff]
        %v542 = vld [vmem:[%s313 + $0x18] sm:$0xff]
        %v543 = vld [vmem:[%s313 + $0x20] sm:$0xff]
        %v544 = vld [vmem:[%s313 + $0x28] sm:$0xff]
        %v545 = vld [vmem:[%s313 + $0x30] sm:$0xff]
        %v546 = vld [vmem:[%s313 + $0x38] sm:$0xff]
        %v547 = vld [vmem:[%s313 + $0x40] sm:$0xff]
        %v548 = vld [vmem:[%s313 + $0x48] sm:$0xff]
        %v549 = vld [vmem:[%s313 + $0x50] sm:$0xff]
        %v550 = vld [vmem:[%s313 + $0x58] sm:$0xff]
        %v551 = vld [vmem:[%s313 + $0x60] sm:$0xff]
        %v552 = vld [vmem:[%s313 + $0x68] sm:$0xff]
        %v553 = vld [vmem:[%s313 + $0x70] sm:$0xff]
        %v554 = vld [vmem:[%s313 + $0x78] sm:$0xff]
        %v555 = vld [vmem:[%s313 + $0x80] sm:$0xff]
        %v556 = vld [vmem:[%s313 + $0x88] sm:$0xff]
        %v557 = vld [vmem:[%s313 + $0x90] sm:$0xff]
        %v558 = vld [vmem:[%s313 + $0x98] sm:$0xff]
        %v559 = vld [vmem:[%s313 + $0xa0] sm:$0xff]
        %v560 = vld [vmem:[%s313 + $0xa8] sm:$0xff]
        %v561 = vld [vmem:[%s313 + $0xb0] sm:$0xff]
        %v562 = vld [vmem:[%s313 + $0xb8] sm:$0xff]
        %v563 = vld [vmem:[%s313 + $0xc0] sm:$0xff]
        %v564 = vld [vmem:[%s313 + $0xc8] sm:$0xff]
        %v565 = vld [vmem:[%s313 + $0xd0] sm:$0xff]
        %v566 = vld [vmem:[%s313 + $0xd8] sm:$0xff]
        %v567 = vld [vmem:[%s313 + $0xe0] sm:$0xff]
        %v568 = vld [vmem:[%s313 + $0xe8] sm:$0xff]
        %v569 = vld [vmem:[%s313 + $0xf0] sm:$0xff]
        %v570 = vld [vmem:[%s313 + $0xf8] sm:$0xff]
        %571 = vmatprep.subr.mxu0 0.0
        %572 = vmatpush1.msra.mxu0 %v539
        %573 = vmatprep.subr.mxu0 0.0
        %574 = vmatpush1.msra.mxu0 %v540
        %575 = vmatprep.subr.mxu0 0.0
        %576 = vmatpush1.msra.mxu0 %v541
        %577 = vmatprep.subr.mxu0 0.0
        %578 = vmatpush1.msra.mxu0 %v542
        %579 = vmatprep.subr.mxu0 0.0
        %580 = vmatpush1.msra.mxu0 %v543
        %581 = vmatprep.subr.mxu0 0.0
        %582 = vmatpush1.msra.mxu0 %v544
        %583 = vmatprep.subr.mxu0 0.0
        %584 = vmatpush1.msra.mxu0 %v545
        %585 = vmatprep.subr.mxu0 0.0
        %586 = vmatpush1.msra.mxu0 %v546
        %587 = vmatprep.subr.mxu0 0.0
        %588 = vmatpush1.msra.mxu0 %v547
        %589 = vmatprep.subr.mxu0 0.0
        %590 = vmatpush1.msra.mxu0 %v548
        %591 = vmatprep.subr.mxu0 0.0
        %592 = vmatpush1.msra.mxu0 %v549
        %593 = vmatprep.subr.mxu0 0.0
        %594 = vmatpush1.msra.mxu0 %v550
        %595 = vmatprep.subr.mxu0 0.0
        %596 = vmatpush1.msra.mxu0 %v551
        %597 = vmatprep.subr.mxu0 0.0
        %598 = vmatpush1.msra.mxu0 %v552
        %599 = vmatprep.subr.mxu0 0.0
        %600 = vmatpush1.msra.mxu0 %v553
        %601 = vmatprep.subr.mxu0 0.0
        %602 = vmatpush1.msra.mxu0 %v554
        %603 = vmatprep.subr.mxu0 0.0
        %604 = vmatpush1.msra.mxu0 %v555
        %605 = vmatprep.subr.mxu0 0.0
        %606 = vmatpush1.msra.mxu0 %v556
        %607 = vmatprep.subr.mxu0 0.0
        %608 = vmatpush1.msra.mxu0 %v557
        %609 = vmatprep.subr.mxu0 0.0
        %610 = vmatpush1.msra.mxu0 %v558
        %611 = vmatprep.subr.mxu0 0.0
        %612 = vmatpush1.msra.mxu0 %v559
        %613 = vmatprep.subr.mxu0 0.0
        %614 = vmatpush1.msra.mxu0 %v560
        %615 = vmatprep.subr.mxu0 0.0
        %616 = vmatpush1.msra.mxu0 %v561
        %617 = vmatprep.subr.mxu0 0.0
        %618 = vmatpush1.msra.mxu0 %v562
        %619 = vmatprep.subr.mxu0 0.0
        %620 = vmatpush1.msra.mxu0 %v563
        %621 = vmatprep.subr.mxu0 0.0
        %622 = vmatpush1.msra.mxu0 %v564
        %623 = vmatprep.subr.mxu0 0.0
        %624 = vmatpush1.msra.mxu0 %v565
        %625 = vmatprep.subr.mxu0 0.0
        %626 = vmatpush1.msra.mxu0 %v566
        %627 = vmatprep.subr.mxu0 0.0
        %628 = vmatpush1.msra.mxu0 %v567
        %629 = vmatprep.subr.mxu0 0.0
        %630 = vmatpush1.msra.mxu0 %v568
        %631 = vmatprep.subr.mxu0 0.0
        %632 = vmatpush1.msra.mxu0 %v569
        %633 = vmatprep.subr.mxu0 0.0
        %634 = vmatpush1.msra.mxu0 %v570
        %635 = vmatprep.mubr.f32.mxu0 %v331
        %636 = vmatmul.mubr.f32.gmra.mrb[0].mxu0 %v330
        %v637 = vpop.f32.mrb[0].mxu0
        %v638 = vadd.f32 0.0, %v637
        %v639 = vpop.f32.mrb[0].mxu0
        %640 = vmatprep.mubr.f32.mxu0 %v333
        %641 = vmatmul.mubr.f32.gmra.mrb[0].mxu0 %v332
        %v642 = vpop.f32.mrb[0].mxu0
        %v643 = vadd.f32 0.0, %v642
        %v644 = vpop.f32.mrb[0].mxu0
        %645 = vmatprep.mubr.f32.mxu0 %v335
        %646 = vmatmul.mubr.f32.gmra.mrb[0].mxu0 %v334
        %v647 = vpop.f32.mrb[0].mxu0
        %v648 = vadd.f32 0.0, %v647
        %v649 = vpop.f32.mrb[0].mxu0
        %650 = vmatprep.mubr.f32.mxu0 %v337
        %651 = vmatmul.mubr.f32.gmra.mrb[0].mxu0 %v336
        %v652 = vpop.f32.mrb[0].mxu0
        %v653 = vadd.f32 0.0, %v652
        %v654 = vpop.f32.mrb[0].mxu0
        %655 = vmatprep.mubr.f32.mxu0 %v339
        %656 = vmatmul.mubr.f32.gmra.mrb[0].mxu0 %v338
        %v657 = vpop.f32.mrb[0].mxu0
        %v658 = vadd.f32 0.0, %v657
        %v659 = vpop.f32.mrb[0].mxu0
        %660 = vmatprep.mubr.f32.mxu0 %v341
        %661 = vmatmul.mubr.f32.gmra.mrb[0].mxu0 %v340
        %v662 = vpop.f32.mrb[0].mxu0
        %v663 = vadd.f32 0.0, %v662
        %v664 = vpop.f32.mrb[0].mxu0
        %665 = vmatprep.mubr.f32.mxu0 %v343
        %666 = vmatmul.mubr.f32.gmra.mrb[0].mxu0 %v342
        %v667 = vpop.f32.mrb[0].mxu0
        %v668 = vadd.f32 0.0, %v667
        %v669 = vpop.f32.mrb[0].mxu0
        %670 = vmatprep.mubr.f32.mxu0 %v345
        %671 = vmatmul.mubr.f32.gmra.mrb[0].mxu0 %v344
        %v672 = vpop.f32.mrb[0].mxu0
        %v673 = vadd.f32 0.0, %v672
        %v674 = vpop.f32.mrb[0].mxu0
        %675 = vmatprep.mubr.f32.mxu0 %v347
        %676 = vmatmul.mubr.f32.gmra.mrb[0].mxu0 %v346
        %v677 = vpop.f32.mrb[0].mxu0
        %v678 = vadd.f32 0.0, %v677
        %v679 = vpop.f32.mrb[0].mxu0
        %680 = vmatprep.mubr.f32.mxu0 %v349
        %681 = vmatmul.mubr.f32.gmra.mrb[0].mxu0 %v348
        %v682 = vpop.f32.mrb[0].mxu0
        %v683 = vadd.f32 0.0, %v682
        %v684 = vpop.f32.mrb[0].mxu0
        %685 = vmatprep.mubr.f32.mxu0 %v351
        %686 = vmatmul.mubr.f32.gmra.mrb[0].mxu0 %v350
        %v687 = vpop.f32.mrb[0].mxu0
        %v688 = vadd.f32 0.0, %v687
        %v689 = vpop.f32.mrb[0].mxu0
        %690 = vmatprep.mubr.f32.mxu0 %v353
        %691 = vmatmul.mubr.f32.gmra.mrb[0].mxu0 %v352
        %v692 = vpop.f32.mrb[0].mxu0
        %v693 = vadd.f32 0.0, %v692
        %v694 = vpop.f32.mrb[0].mxu0
        %695 = vmatprep.mubr.f32.mxu0 %v355
        %696 = vmatmul.mubr.f32.gmra.mrb[0].mxu0 %v354
        %v697 = vpop.f32.mrb[0].mxu0
        %v698 = vadd.f32 0.0, %v697
        %v699 = vpop.f32.mrb[0].mxu0
        %700 = vmatprep.mubr.f32.mxu0 %v357
        %701 = vmatmul.mubr.f32.gmra.mrb[0].mxu0 %v356
        %v702 = vpop.f32.mrb[0].mxu0
        %v703 = vadd.f32 0.0, %v702
        %v704 = vpop.f32.mrb[0].mxu0
        %705 = vmatprep.mubr.f32.mxu0 %v359
        %706 = vmatmul.mubr.f32.gmra.mrb[0].mxu0 %v358
        %v707 = vpop.f32.mrb[0].mxu0
        %v708 = vadd.f32 0.0, %v707
        %v709 = vpop.f32.mrb[0].mxu0
        %710 = vmatprep.mubr.f32.mxu0 %v361
        %711 = vmatmul.mubr.f32.gmra.mrb[0].mxu0 %v360
        %v712 = vpop.f32.mrb[0].mxu0
        %v713 = vadd.f32 0.0, %v712
        %v714 = vpop.f32.mrb[0].mxu0
        %715 = vdwg.mxu0
        %v716 = vld [vmem:[%s320] sm:$0xff]
        %v717 = vld [vmem:[%s320 + $0x8] sm:$0xff]
        %v718 = vld [vmem:[%s320 + $0x10] sm:$0xff]
        %v719 = vld [vmem:[%s320 + $0x18] sm:$0xff]
        %v720 = vld [vmem:[%s320 + $0x20] sm:$0xff]
        %v721 = vld [vmem:[%s320 + $0x28] sm:$0xff]
        %v722 = vld [vmem:[%s320 + $0x30] sm:$0xff]
        %v723 = vld [vmem:[%s320 + $0x38] sm:$0xff]
        %v724 = vld [vmem:[%s320 + $0x40] sm:$0xff]
        %v725 = vld [vmem:[%s320 + $0x48] sm:$0xff]
        %v726 = vld [vmem:[%s320 + $0x50] sm:$0xff]
        %v727 = vld [vmem:[%s320 + $0x58] sm:$0xff]
        %v728 = vld [vmem:[%s320 + $0x60] sm:$0xff]
        %v729 = vld [vmem:[%s320 + $0x68] sm:$0xff]
        %v730 = vld [vmem:[%s320 + $0x70] sm:$0xff]
        %v731 = vld [vmem:[%s320 + $0x78] sm:$0xff]
        %v732 = vld [vmem:[%s320 + $0x80] sm:$0xff]
        %v733 = vld [vmem:[%s320 + $0x88] sm:$0xff]
        %v734 = vld [vmem:[%s320 + $0x90] sm:$0xff]
        %v735 = vld [vmem:[%s320 + $0x98] sm:$0xff]
        %v736 = vld [vmem:[%s320 + $0xa0] sm:$0xff]
        %v737 = vld [vmem:[%s320 + $0xa8] sm:$0xff]
        %v738 = vld [vmem:[%s320 + $0xb0] sm:$0xff]
        %v739 = vld [vmem:[%s320 + $0xb8] sm:$0xff]
        %v740 = vld [vmem:[%s320 + $0xc0] sm:$0xff]
        %v741 = vld [vmem:[%s320 + $0xc8] sm:$0xff]
        %v742 = vld [vmem:[%s320 + $0xd0] sm:$0xff]
        %v743 = vld [vmem:[%s320 + $0xd8] sm:$0xff]
        %v744 = vld [vmem:[%s320 + $0xe0] sm:$0xff]
        %v745 = vld [vmem:[%s320 + $0xe8] sm:$0xff]
        %v746 = vld [vmem:[%s320 + $0xf0] sm:$0xff]
        %v747 = vld [vmem:[%s320 + $0xf8] sm:$0xff]
        %748 = vmatprep.subr.mxu0 0.0
        %749 = vmatpush1.msra.mxu0 %v716
        %750 = vmatprep.subr.mxu0 0.0
        %751 = vmatpush1.msra.mxu0 %v717
        %752 = vmatprep.subr.mxu0 0.0
        %753 = vmatpush1.msra.mxu0 %v718
        %754 = vmatprep.subr.mxu0 0.0
        %755 = vmatpush1.msra.mxu0 %v719
        %756 = vmatprep.subr.mxu0 0.0
        %757 = vmatpush1.msra.mxu0 %v720
        %758 = vmatprep.subr.mxu0 0.0
        %759 = vmatpush1.msra.mxu0 %v721
        %760 = vmatprep.subr.mxu0 0.0
        %761 = vmatpush1.msra.mxu0 %v722
        %762 = vmatprep.subr.mxu0 0.0
        %763 = vmatpush1.msra.mxu0 %v723
        %764 = vmatprep.subr.mxu0 0.0
        %765 = vmatpush1.msra.mxu0 %v724
        %766 = vmatprep.subr.mxu0 0.0
        %767 = vmatpush1.msra.mxu0 %v725
        %768 = vmatprep.subr.mxu0 0.0
        %769 = vmatpush1.msra.mxu0 %v726
        %770 = vmatprep.subr.mxu0 0.0
        %771 = vmatpush1.msra.mxu0 %v727
        %772 = vmatprep.subr.mxu0 0.0
        %773 = vmatpush1.msra.mxu0 %v728
        %774 = vmatprep.subr.mxu0 0.0
        %775 = vmatpush1.msra.mxu0 %v729
        %776 = vmatprep.subr.mxu0 0.0
        %777 = vmatpush1.msra.mxu0 %v730
        %778 = vmatprep.subr.mxu0 0.0
        %779 = vmatpush1.msra.mxu0 %v731
        %780 = vmatprep.subr.mxu0 0.0
        %781 = vmatpush1.msra.mxu0 %v732
        %782 = vmatprep.subr.mxu0 0.0
        %783 = vmatpush1.msra.mxu0 %v733
        %784 = vmatprep.subr.mxu0 0.0
        %785 = vmatpush1.msra.mxu0 %v734
        %786 = vmatprep.subr.mxu0 0.0
        %787 = vmatpush1.msra.mxu0 %v735
        %788 = vmatprep.subr.mxu0 0.0
        %789 = vmatpush1.msra.mxu0 %v736
        %790 = vmatprep.subr.mxu0 0.0
        %791 = vmatpush1.msra.mxu0 %v737
        %792 = vmatprep.subr.mxu0 0.0
        %793 = vmatpush1.msra.mxu0 %v738
        %794 = vmatprep.subr.mxu0 0.0
        %795 = vmatpush1.msra.mxu0 %v739
        %796 = vmatprep.subr.mxu0 0.0
        %797 = vmatpush1.msra.mxu0 %v740
        %798 = vmatprep.subr.mxu0 0.0
        %799 = vmatpush1.msra.mxu0 %v741
        %800 = vmatprep.subr.mxu0 0.0
        %801 = vmatpush1.msra.mxu0 %v742
        %802 = vmatprep.subr.mxu0 0.0
        %803 = vmatpush1.msra.mxu0 %v743
        %804 = vmatprep.subr.mxu0 0.0
        %805 = vmatpush1.msra.mxu0 %v744
        %806 = vmatprep.subr.mxu0 0.0
        %807 = vmatpush1.msra.mxu0 %v745
        %808 = vmatprep.subr.mxu0 0.0
        %809 = vmatpush1.msra.mxu0 %v746
        %810 = vmatprep.subr.mxu0 0.0
        %811 = vmatpush1.msra.mxu0 %v747
        %812 = vmatprep.mubr.f32.mxu0 %v331
        %813 = vmatmul.mubr.f32.gmra.mrb[0].mxu0 %v330
        %v814 = vpop.f32.mrb[0].mxu0
        %v815 = vadd.f32 0.0, %v814
        %v816 = vpop.f32.mrb[0].mxu0
        %817 = vmatprep.mubr.f32.mxu0 %v333
        %818 = vmatmul.mubr.f32.gmra.mrb[0].mxu0 %v332
        %v819 = vpop.f32.mrb[0].mxu0
        %v820 = vadd.f32 0.0, %v819
        %v821 = vpop.f32.mrb[0].mxu0
        %822 = vmatprep.mubr.f32.mxu0 %v335
        %823 = vmatmul.mubr.f32.gmra.mrb[0].mxu0 %v334
        %v824 = vpop.f32.mrb[0].mxu0
        %v825 = vadd.f32 0.0, %v824
        %v826 = vpop.f32.mrb[0].mxu0
        %827 = vmatprep.mubr.f32.mxu0 %v337
        %828 = vmatmul.mubr.f32.gmra.mrb[0].mxu0 %v336
        %v829 = vpop.f32.mrb[0].mxu0
        %v830 = vadd.f32 0.0, %v829
        %v831 = vpop.f32.mrb[0].mxu0
        %832 = vmatprep.mubr.f32.mxu0 %v339
        %833 = vmatmul.mubr.f32.gmra.mrb[0].mxu0 %v338
        %v834 = vpop.f32.mrb[0].mxu0
        %v835 = vadd.f32 0.0, %v834
        %v836 = vpop.f32.mrb[0].mxu0
        %837 = vmatprep.mubr.f32.mxu0 %v341
        %838 = vmatmul.mubr.f32.gmra.mrb[0].mxu0 %v340
        %v839 = vpop.f32.mrb[0].mxu0
        %v840 = vadd.f32 0.0, %v839
        %v841 = vpop.f32.mrb[0].mxu0
        %842 = vmatprep.mubr.f32.mxu0 %v343
        %843 = vmatmul.mubr.f32.gmra.mrb[0].mxu0 %v342
        %v844 = vpop.f32.mrb[0].mxu0
        %v845 = vadd.f32 0.0, %v844
        %v846 = vpop.f32.mrb[0].mxu0
        %847 = vmatprep.mubr.f32.mxu0 %v345
        %848 = vmatmul.mubr.f32.gmra.mrb[0].mxu0 %v344
        %v849 = vpop.f32.mrb[0].mxu0
        %v850 = vadd.f32 0.0, %v849
        %v851 = vpop.f32.mrb[0].mxu0
        %852 = vmatprep.mubr.f32.mxu0 %v347
        %853 = vmatmul.mubr.f32.gmra.mrb[0].mxu0 %v346
        %v854 = vpop.f32.mrb[0].mxu0
        %v855 = vadd.f32 0.0, %v854
        %v856 = vpop.f32.mrb[0].mxu0
        %857 = vmatprep.mubr.f32.mxu0 %v349
        %858 = vmatmul.mubr.f32.gmra.mrb[0].mxu0 %v348
        %v859 = vpop.f32.mrb[0].mxu0
        %v860 = vadd.f32 0.0, %v859
        %v861 = vpop.f32.mrb[0].mxu0
        %862 = vmatprep.mubr.f32.mxu0 %v351
        %863 = vmatmul.mubr.f32.gmra.mrb[0].mxu0 %v350
        %v864 = vpop.f32.mrb[0].mxu0
        %v865 = vadd.f32 0.0, %v864
        %v866 = vpop.f32.mrb[0].mxu0
        %867 = vmatprep.mubr.f32.mxu0 %v353
        %868 = vmatmul.mubr.f32.gmra.mrb[0].mxu0 %v352
        %v869 = vpop.f32.mrb[0].mxu0
        %v870 = vadd.f32 0.0, %v869
        %v871 = vpop.f32.mrb[0].mxu0
        %872 = vmatprep.mubr.f32.mxu0 %v355
        %873 = vmatmul.mubr.f32.gmra.mrb[0].mxu0 %v354
        %v874 = vpop.f32.mrb[0].mxu0
        %v875 = vadd.f32 0.0, %v874
        %v876 = vpop.f32.mrb[0].mxu0
        %877 = vmatprep.mubr.f32.mxu0 %v357
        %878 = vmatmul.mubr.f32.gmra.mrb[0].mxu0 %v356
        %v879 = vpop.f32.mrb[0].mxu0
        %v880 = vadd.f32 0.0, %v879
        %v881 = vpop.f32.mrb[0].mxu0
        %882 = vmatprep.mubr.f32.mxu0 %v359
        %883 = vmatmul.mubr.f32.gmra.mrb[0].mxu0 %v358
        %v884 = vpop.f32.mrb[0].mxu0
        %v885 = vadd.f32 0.0, %v884
        %v886 = vpop.f32.mrb[0].mxu0
        %887 = vmatprep.mubr.f32.mxu0 %v361
        %888 = vmatmul.mubr.f32.gmra.mrb[0].mxu0 %v360
        %v889 = vpop.f32.mrb[0].mxu0
        %v890 = vadd.f32 0.0, %v889
        %v891 = vpop.f32.mrb[0].mxu0
        %892 = vdwg.mxu0
        %vm893 = vcmask 261120
        %v895 = vsel %vm893, %v461, 0
        %v898 = vsel %vm893, %v466, 0
        %v901 = vsel %vm893, %v471, 0
        %v904 = vsel %vm893, %v476, 0
        %v907 = vsel %vm893, %v481, 0
        %v910 = vsel %vm893, %v486, 0
        %v913 = vsel %vm893, %v491, 0
        %v916 = vsel %vm893, %v496, 0
        %v919 = vsel %vm893, %v501, 0
        %v922 = vsel %vm893, %v506, 0
        %v925 = vsel %vm893, %v511, 0
        %v928 = vsel %vm893, %v516, 0
        %v931 = vsel %vm893, %v521, 0
        %v934 = vsel %vm893, %v526, 0
        %v937 = vsel %vm893, %v531, 0
        %v940 = vsel %vm893, %v536, 0
        %v943 = vsel %vm893, %v638, 0
        %v946 = vsel %vm893, %v643, 0
        %v949 = vsel %vm893, %v648, 0
        %v952 = vsel %vm893, %v653, 0
        %v955 = vsel %vm893, %v658, 0
        %v958 = vsel %vm893, %v663, 0
        %v961 = vsel %vm893, %v668, 0
        %v964 = vsel %vm893, %v673, 0
        %v967 = vsel %vm893, %v678, 0
        %v970 = vsel %vm893, %v683, 0
        %v973 = vsel %vm893, %v688, 0
        %v976 = vsel %vm893, %v693, 0
        %v979 = vsel %vm893, %v698, 0
        %v982 = vsel %vm893, %v703, 0
        %v985 = vsel %vm893, %v708, 0
        %v988 = vsel %vm893, %v713, 0
        %990 = vmatprep.subr.mxu0 0.0
        %991 = vmatpush1.xpose.msra.mxu0 %v943
        %992 = vmatprep.subr.mxu0 0.0
        %993 = vmatpush1.xpose.msra.mxu0 %v946
        %994 = vmatprep.subr.mxu0 0.0
        %995 = vmatpush1.xpose.msra.mxu0 %v949
        %996 = vmatprep.subr.mxu0 0.0
        %997 = vmatpush1.xpose.msra.mxu0 %v952
        %998 = vmatprep.subr.mxu0 0.0
        %999 = vmatpush1.xpose.msra.mxu0 %v955
        %1000 = vmatprep.subr.mxu0 0.0
        %1001 = vmatpush1.xpose.msra.mxu0 %v958
        %1002 = vmatprep.subr.mxu0 0.0
        %1003 = vmatpush1.xpose.msra.mxu0 %v961
        %1004 = vmatprep.subr.mxu0 0.0
        %1005 = vmatpush1.xpose.msra.mxu0 %v964
        %1006 = vmatprep.subr.mxu0 0.0
        %1007 = vmatpush1.xpose.msra.mxu0 %v967
        %1008 = vmatprep.subr.mxu0 0.0
        %1009 = vmatpush1.xpose.msra.mxu0 %v970
        %1010 = vmatprep.subr.mxu0 0.0
        %1011 = vmatpush1.xpose.msra.mxu0 %v973
        %1012 = vmatprep.subr.mxu0 0.0
        %1013 = vmatpush1.xpose.msra.mxu0 %v976
        %1014 = vmatprep.subr.mxu0 0.0
        %1015 = vmatpush1.xpose.msra.mxu0 %v979
        %1016 = vmatprep.subr.mxu0 0.0
        %1017 = vmatpush1.xpose.msra.mxu0 %v982
        %1018 = vmatprep.subr.mxu0 0.0
        %1019 = vmatpush1.xpose.msra.mxu0 %v985
        %1020 = vmatprep.subr.mxu0 0.0
        %1021 = vmatpush1.xpose.msra.mxu0 %v988
        %1022 = vmatprep.subr.mxu0 0.0
        %1023 = vmatpush1.xpose.msra.mxu0 0.0
        %1024 = vmatprep.subr.mxu0 0.0
        %1025 = vmatpush1.xpose.msra.mxu0 0.0
        %1026 = vmatprep.subr.mxu0 0.0
        %1027 = vmatpush1.xpose.msra.mxu0 0.0
        %1028 = vmatprep.subr.mxu0 0.0
        %1029 = vmatpush1.xpose.msra.mxu0 0.0
        %1030 = vmatprep.subr.mxu0 0.0
        %1031 = vmatpush1.xpose.msra.mxu0 0.0
        %1032 = vmatprep.subr.mxu0 0.0
        %1033 = vmatpush1.xpose.msra.mxu0 0.0
        %1034 = vmatprep.subr.mxu0 0.0
        %1035 = vmatpush1.xpose.msra.mxu0 0.0
        %1036 = vmatprep.subr.mxu0 0.0
        %1037 = vmatpush1.xpose.msra.mxu0 0.0
        %1038 = vmatprep.subr.mxu0 0.0
        %1039 = vmatpush1.xpose.msra.mxu0 0.0
        %1040 = vmatprep.subr.mxu0 0.0
        %1041 = vmatpush1.xpose.msra.mxu0 0.0
        %1042 = vmatprep.subr.mxu0 0.0
        %1043 = vmatpush1.xpose.msra.mxu0 0.0
        %1044 = vmatprep.subr.mxu0 0.0
        %1045 = vmatpush1.xpose.msra.mxu0 0.0
        %1046 = vmatprep.subr.mxu0 0.0
        %1047 = vmatpush1.xpose.msra.mxu0 0.0
        %1048 = vmatprep.subr.mxu0 0.0
        %1049 = vmatpush1.xpose.msra.mxu0 0.0
        %1050 = vmatprep.subr.mxu0 0.0
        %1051 = vmatpush1.xpose.msra.mxu0 0.0
        %1052 = vmatprep.subr.mxu0 0.0
        %1053 = vmatpush1.xpose.msra.mxu0 0.0
        %1054 = vmatprep.mubr.f32.mxu0 0.0
        %1055 = vmatmul.mubr.f32.gmra.mrb[0].mxu0 %v895
        %v1056 = vpop.f32.mrb[0].mxu0
        %v1057 = vadd.f32 0.0, %v1056
        %v1058 = vpop.f32.mrb[0].mxu0
        %1059 = vmatprep.mubr.f32.mxu0 0.0
        %1060 = vmatmul.mubr.f32.gmra.mrb[0].mxu0 %v898
        %v1061 = vpop.f32.mrb[0].mxu0
        %v1062 = vadd.f32 0.0, %v1061
        %v1063 = vpop.f32.mrb[0].mxu0
        %1064 = vmatprep.mubr.f32.mxu0 0.0
        %1065 = vmatmul.mubr.f32.gmra.mrb[0].mxu0 %v901
        %v1066 = vpop.f32.mrb[0].mxu0
        %v1067 = vadd.f32 0.0, %v1066
        %v1068 = vpop.f32.mrb[0].mxu0
        %1069 = vmatprep.mubr.f32.mxu0 0.0
        %1070 = vmatmul.mubr.f32.gmra.mrb[0].mxu0 %v904
        %v1071 = vpop.f32.mrb[0].mxu0
        %v1072 = vadd.f32 0.0, %v1071
        %v1073 = vpop.f32.mrb[0].mxu0
        %1074 = vmatprep.mubr.f32.mxu0 0.0
        %1075 = vmatmul.mubr.f32.gmra.mrb[0].mxu0 %v907
        %v1076 = vpop.f32.mrb[0].mxu0
        %v1077 = vadd.f32 0.0, %v1076
        %v1078 = vpop.f32.mrb[0].mxu0
        %1079 = vmatprep.mubr.f32.mxu0 0.0
        %1080 = vmatmul.mubr.f32.gmra.mrb[0].mxu0 %v910
        %v1081 = vpop.f32.mrb[0].mxu0
        %v1082 = vadd.f32 0.0, %v1081
        %v1083 = vpop.f32.mrb[0].mxu0
        %1084 = vmatprep.mubr.f32.mxu0 0.0
        %1085 = vmatmul.mubr.f32.gmra.mrb[0].mxu0 %v913
        %v1086 = vpop.f32.mrb[0].mxu0
        %v1087 = vadd.f32 0.0, %v1086
        %v1088 = vpop.f32.mrb[0].mxu0
        %1089 = vmatprep.mubr.f32.mxu0 0.0
        %1090 = vmatmul.mubr.f32.gmra.mrb[0].mxu0 %v916
        %v1091 = vpop.f32.mrb[0].mxu0
        %v1092 = vadd.f32 0.0, %v1091
        %v1093 = vpop.f32.mrb[0].mxu0
        %1094 = vmatprep.mubr.f32.mxu0 0.0
        %1095 = vmatmul.mubr.f32.gmra.mrb[0].mxu0 %v919
        %v1096 = vpop.f32.mrb[0].mxu0
        %v1097 = vadd.f32 0.0, %v1096
        %v1098 = vpop.f32.mrb[0].mxu0
        %1099 = vmatprep.mubr.f32.mxu0 0.0
        %1100 = vmatmul.mubr.f32.gmra.mrb[0].mxu0 %v922
        %v1101 = vpop.f32.mrb[0].mxu0
        %v1102 = vadd.f32 0.0, %v1101
        %v1103 = vpop.f32.mrb[0].mxu0
        %1104 = vmatprep.mubr.f32.mxu0 0.0
        %1105 = vmatmul.mubr.f32.gmra.mrb[0].mxu0 %v925
        %v1106 = vpop.f32.mrb[0].mxu0
        %v1107 = vadd.f32 0.0, %v1106
        %v1108 = vpop.f32.mrb[0].mxu0
        %1109 = vmatprep.mubr.f32.mxu0 0.0
        %1110 = vmatmul.mubr.f32.gmra.mrb[0].mxu0 %v928
        %v1111 = vpop.f32.mrb[0].mxu0
        %v1112 = vadd.f32 0.0, %v1111
        %v1113 = vpop.f32.mrb[0].mxu0
        %1114 = vmatprep.mubr.f32.mxu0 0.0
        %1115 = vmatmul.mubr.f32.gmra.mrb[0].mxu0 %v931
        %v1116 = vpop.f32.mrb[0].mxu0
        %v1117 = vadd.f32 0.0, %v1116
        %v1118 = vpop.f32.mrb[0].mxu0
        %1119 = vmatprep.mubr.f32.mxu0 0.0
        %1120 = vmatmul.mubr.f32.gmra.mrb[0].mxu0 %v934
        %v1121 = vpop.f32.mrb[0].mxu0
        %v1122 = vadd.f32 0.0, %v1121
        %v1123 = vpop.f32.mrb[0].mxu0
        %1124 = vmatprep.mubr.f32.mxu0 0.0
        %1125 = vmatmul.mubr.f32.gmra.mrb[0].mxu0 %v937
        %v1126 = vpop.f32.mrb[0].mxu0
        %v1127 = vadd.f32 0.0, %v1126
        %v1128 = vpop.f32.mrb[0].mxu0
        %1129 = vmatprep.mubr.f32.mxu0 0.0
        %1130 = vmatmul.mubr.f32.gmra.mrb[0].mxu0 %v940
        %v1131 = vpop.f32.mrb[0].mxu0
        %v1132 = vadd.f32 0.0, %v1131
        %v1133 = vpop.f32.mrb[0].mxu0
        %1134 = vdwg.mxu0
        %1135 = vmax.xlane.f32.xlu0 %v1057
        %v1136 = vpop.xlane.xlu0 %1135
        %1137 = vmax.xlane.f32.xlu0 %v1062
        %v1138 = vpop.xlane.xlu0 %1137
        %1139 = vmax.xlane.f32.xlu0 %v1067
        %v1140 = vpop.xlane.xlu0 %1139
        %1141 = vmax.xlane.f32.xlu0 %v1072
        %v1142 = vpop.xlane.xlu0 %1141
        %1143 = vmax.xlane.f32.xlu0 %v1077
        %v1144 = vpop.xlane.xlu0 %1143
        %1145 = vmax.xlane.f32.xlu0 %v1082
        %v1146 = vpop.xlane.xlu0 %1145
        %1147 = vmax.xlane.f32.xlu0 %v1087
        %v1148 = vpop.xlane.xlu0 %1147
        %1149 = vmax.xlane.f32.xlu0 %v1092
        %v1150 = vpop.xlane.xlu0 %1149
        %1151 = vmax.xlane.f32.xlu0 %v1097
        %v1152 = vpop.xlane.xlu0 %1151
        %1153 = vmax.xlane.f32.xlu0 %v1102
        %v1154 = vpop.xlane.xlu0 %1153
        %1155 = vmax.xlane.f32.xlu0 %v1107
        %v1156 = vpop.xlane.xlu0 %1155
        %1157 = vmax.xlane.f32.xlu0 %v1112
        %v1158 = vpop.xlane.xlu0 %1157
        %1159 = vmax.xlane.f32.xlu0 %v1117
        %v1160 = vpop.xlane.xlu0 %1159
        %1161 = vmax.xlane.f32.xlu0 %v1122
        %v1162 = vpop.xlane.xlu0 %1161
        %1163 = vmax.xlane.f32.xlu0 %v1127
        %v1164 = vpop.xlane.xlu0 %1163
        %1165 = vmax.xlane.f32.xlu0 %v1132
        %v1166 = vpop.xlane.xlu0 %1165
        %v1167 = vsub.f32 %v1057, %v1136
        %v1168 = vsub.f32 %v1062, %v1138
        %v1169 = vsub.f32 %v1067, %v1140
        %v1170 = vsub.f32 %v1072, %v1142
        %v1171 = vsub.f32 %v1077, %v1144
        %v1172 = vsub.f32 %v1082, %v1146
        %v1173 = vsub.f32 %v1087, %v1148
        %v1174 = vsub.f32 %v1092, %v1150
        %v1175 = vsub.f32 %v1097, %v1152
        %v1176 = vsub.f32 %v1102, %v1154
        %v1177 = vsub.f32 %v1107, %v1156
        %v1178 = vsub.f32 %v1112, %v1158
        %v1179 = vsub.f32 %v1117, %v1160
        %v1180 = vsub.f32 %v1122, %v1162
        %v1181 = vsub.f32 %v1127, %v1164
        %v1182 = vsub.f32 %v1132, %v1166
        %v1183 = vmul.f32 %v1167, 1.442695
        %v1184 = vpow.pop %v1183
        %v1185 = vmul.f32 %v1168, 1.442695
        %v1186 = vpow.pop %v1185
        %v1187 = vmul.f32 %v1169, 1.442695
        %v1188 = vpow.pop %v1187
        %v1189 = vmul.f32 %v1170, 1.442695
        %v1190 = vpow.pop %v1189
        %v1191 = vmul.f32 %v1171, 1.442695
        %v1192 = vpow.pop %v1191
        %v1193 = vmul.f32 %v1172, 1.442695
        %v1194 = vpow.pop %v1193
        %v1195 = vmul.f32 %v1173, 1.442695
        %v1196 = vpow.pop %v1195
        %v1197 = vmul.f32 %v1174, 1.442695
        %v1198 = vpow.pop %v1197
        %v1199 = vmul.f32 %v1175, 1.442695
        %v1200 = vpow.pop %v1199
        %v1201 = vmul.f32 %v1176, 1.442695
        %v1202 = vpow.pop %v1201
        %v1203 = vmul.f32 %v1177, 1.442695
        %v1204 = vpow.pop %v1203
        %v1205 = vmul.f32 %v1178, 1.442695
        %v1206 = vpow.pop %v1205
        %v1207 = vmul.f32 %v1179, 1.442695
        %v1208 = vpow.pop %v1207
        %v1209 = vmul.f32 %v1180, 1.442695
        %v1210 = vpow.pop %v1209
        %v1211 = vmul.f32 %v1181, 1.442695
        %v1212 = vpow.pop %v1211
        %v1213 = vmul.f32 %v1182, 1.442695
        %v1214 = vpow.pop %v1213
        %1215 = vadd.xlane.f32.xlu0 %v1184
        %v1216 = vpop.xlane.xlu0 %1215
        %1217 = vadd.xlane.f32.xlu0 %v1186
        %v1218 = vpop.xlane.xlu0 %1217
        %1219 = vadd.xlane.f32.xlu0 %v1188
        %v1220 = vpop.xlane.xlu0 %1219
        %1221 = vadd.xlane.f32.xlu0 %v1190
        %v1222 = vpop.xlane.xlu0 %1221
        %1223 = vadd.xlane.f32.xlu0 %v1192
        %v1224 = vpop.xlane.xlu0 %1223
        %1225 = vadd.xlane.f32.xlu0 %v1194
        %v1226 = vpop.xlane.xlu0 %1225
        %1227 = vadd.xlane.f32.xlu0 %v1196
        %v1228 = vpop.xlane.xlu0 %1227
        %1229 = vadd.xlane.f32.xlu0 %v1198
        %v1230 = vpop.xlane.xlu0 %1229
        %1231 = vadd.xlane.f32.xlu0 %v1200
        %v1232 = vpop.xlane.xlu0 %1231
        %1233 = vadd.xlane.f32.xlu0 %v1202
        %v1234 = vpop.xlane.xlu0 %1233
        %1235 = vadd.xlane.f32.xlu0 %v1204
        %v1236 = vpop.xlane.xlu0 %1235
        %1237 = vadd.xlane.f32.xlu0 %v1206
        %v1238 = vpop.xlane.xlu0 %1237
        %1239 = vadd.xlane.f32.xlu0 %v1208
        %v1240 = vpop.xlane.xlu0 %1239
        %1241 = vadd.xlane.f32.xlu0 %v1210
        %v1242 = vpop.xlane.xlu0 %1241
        %1243 = vadd.xlane.f32.xlu0 %v1212
        %v1244 = vpop.xlane.xlu0 %1243
        %1245 = vadd.xlane.f32.xlu0 %v1214
        %v1246 = vpop.xlane.xlu0 %1245
        %v1247 = vrcp.pop %v1216
        %v1248 = vmul.f32 1.0, %v1247
        %v1249 = vrcp.pop %v1218
        %v1250 = vmul.f32 1.0, %v1249
        %v1251 = vrcp.pop %v1220
        %v1252 = vmul.f32 1.0, %v1251
        %v1253 = vrcp.pop %v1222
        %v1254 = vmul.f32 1.0, %v1253
        %v1255 = vrcp.pop %v1224
        %v1256 = vmul.f32 1.0, %v1255
        %v1257 = vrcp.pop %v1226
        %v1258 = vmul.f32 1.0, %v1257
        %v1259 = vrcp.pop %v1228
        %v1260 = vmul.f32 1.0, %v1259
        %v1261 = vrcp.pop %v1230
        %v1262 = vmul.f32 1.0, %v1261
        %v1263 = vrcp.pop %v1232
        %v1264 = vmul.f32 1.0, %v1263
        %v1265 = vrcp.pop %v1234
        %v1266 = vmul.f32 1.0, %v1265
        %v1267 = vrcp.pop %v1236
        %v1268 = vmul.f32 1.0, %v1267
        %v1269 = vrcp.pop %v1238
        %v1270 = vmul.f32 1.0, %v1269
        %v1271 = vrcp.pop %v1240
        %v1272 = vmul.f32 1.0, %v1271
        %v1273 = vrcp.pop %v1242
        %v1274 = vmul.f32 1.0, %v1273
        %v1275 = vrcp.pop %v1244
        %v1276 = vmul.f32 1.0, %v1275
        %v1277 = vrcp.pop %v1246
        %v1278 = vmul.f32 1.0, %v1277
        %v1279 = vmul.f32 %v1184, %v1248
        %v1280 = vmul.f32 %v1186, %v1250
        %v1281 = vmul.f32 %v1188, %v1252
        %v1282 = vmul.f32 %v1190, %v1254
        %v1283 = vmul.f32 %v1192, %v1256
        %v1284 = vmul.f32 %v1194, %v1258
        %v1285 = vmul.f32 %v1196, %v1260
        %v1286 = vmul.f32 %v1198, %v1262
        %v1287 = vmul.f32 %v1200, %v1264
        %v1288 = vmul.f32 %v1202, %v1266
        %v1289 = vmul.f32 %v1204, %v1268
        %v1290 = vmul.f32 %v1206, %v1270
        %v1291 = vmul.f32 %v1208, %v1272
        %v1292 = vmul.f32 %v1210, %v1274
        %v1293 = vmul.f32 %v1212, %v1276
        %v1294 = vmul.f32 %v1214, %v1278
        %1295 = vst [vmem:[%s300] sm:$0xff] %v1279
        %1296 = vst [vmem:[%s300 + $0x8] sm:$0xff] %v1280
        %1297 = vst [vmem:[%s300 + $0x10] sm:$0xff] %v1281
        %1298 = vst [vmem:[%s300 + $0x18] sm:$0xff] %v1282
        %1299 = vst [vmem:[%s300 + $0x20] sm:$0xff] %v1283
        %1300 = vst [vmem:[%s300 + $0x28] sm:$0xff] %v1284
        %1301 = vst [vmem:[%s300 + $0x30] sm:$0xff] %v1285
        %1302 = vst [vmem:[%s300 + $0x38] sm:$0xff] %v1286
        %1303 = vst [vmem:[%s300 + $0x40] sm:$0xff] %v1287
        %1304 = vst [vmem:[%s300 + $0x48] sm:$0xff] %v1288
        %1305 = vst [vmem:[%s300 + $0x50] sm:$0xff] %v1289
        %1306 = vst [vmem:[%s300 + $0x58] sm:$0xff] %v1290
        %1307 = vst [vmem:[%s300 + $0x60] sm:$0xff] %v1291
        %1308 = vst [vmem:[%s300 + $0x68] sm:$0xff] %v1292
        %1309 = vst [vmem:[%s300 + $0x70] sm:$0xff] %v1293
        %1310 = vst [vmem:[%s300 + $0x78] sm:$0xff] %v1294
        %1311 = vmatprep.subr.mxu0 0.0
        %1312 = vmatpush1.msra.mxu0 %v815
        %1313 = vmatprep.subr.mxu0 0.0
        %1314 = vmatpush1.msra.mxu0 %v820
        %1315 = vmatprep.subr.mxu0 0.0
        %1316 = vmatpush1.msra.mxu0 %v825
        %1317 = vmatprep.subr.mxu0 0.0
        %1318 = vmatpush1.msra.mxu0 %v830
        %1319 = vmatprep.subr.mxu0 0.0
        %1320 = vmatpush1.msra.mxu0 %v835
        %1321 = vmatprep.subr.mxu0 0.0
        %1322 = vmatpush1.msra.mxu0 %v840
        %1323 = vmatprep.subr.mxu0 0.0
        %1324 = vmatpush1.msra.mxu0 %v845
        %1325 = vmatprep.subr.mxu0 0.0
        %1326 = vmatpush1.msra.mxu0 %v850
        %1327 = vmatprep.subr.mxu0 0.0
        %1328 = vmatpush1.msra.mxu0 %v855
        %1329 = vmatprep.subr.mxu0 0.0
        %1330 = vmatpush1.msra.mxu0 %v860
        %1331 = vmatprep.subr.mxu0 0.0
        %1332 = vmatpush1.msra.mxu0 %v865
        %1333 = vmatprep.subr.mxu0 0.0
        %1334 = vmatpush1.msra.mxu0 %v870
        %1335 = vmatprep.subr.mxu0 0.0
        %1336 = vmatpush1.msra.mxu0 %v875
        %1337 = vmatprep.subr.mxu0 0.0
        %1338 = vmatpush1.msra.mxu0 %v880
        %1339 = vmatprep.subr.mxu0 0.0
        %1340 = vmatpush1.msra.mxu0 %v885
        %1341 = vmatprep.subr.mxu0 0.0
        %1342 = vmatpush1.msra.mxu0 %v890
        %1343 = vmatprep.subr.mxu0 0.0
        %1344 = vmatpush1.msra.mxu0 0.0
        %1345 = vmatprep.subr.mxu0 0.0
        %1346 = vmatpush1.msra.mxu0 0.0
        %1347 = vmatprep.subr.mxu0 0.0
        %1348 = vmatpush1.msra.mxu0 0.0
        %1349 = vmatprep.subr.mxu0 0.0
        %1350 = vmatpush1.msra.mxu0 0.0
        %1351 = vmatprep.subr.mxu0 0.0
        %1352 = vmatpush1.msra.mxu0 0.0
        %1353 = vmatprep.subr.mxu0 0.0
        %1354 = vmatpush1.msra.mxu0 0.0
        %1355 = vmatprep.subr.mxu0 0.0
        %1356 = vmatpush1.msra.mxu0 0.0
        %1357 = vmatprep.subr.mxu0 0.0
        %1358 = vmatpush1.msra.mxu0 0.0
        %1359 = vmatprep.subr.mxu0 0.0
        %1360 = vmatpush1.msra.mxu0 0.0
        %1361 = vmatprep.subr.mxu0 0.0
        %1362 = vmatpush1.msra.mxu0 0.0
        %1363 = vmatprep.subr.mxu0 0.0
        %1364 = vmatpush1.msra.mxu0 0.0
        %1365 = vmatprep.subr.mxu0 0.0
        %1366 = vmatpush1.msra.mxu0 0.0
        %1367 = vmatprep.subr.mxu0 0.0
        %1368 = vmatpush1.msra.mxu0 0.0
        %1369 = vmatprep.subr.mxu0 0.0
        %1370 = vmatpush1.msra.mxu0 0.0
        %1371 = vmatprep.subr.mxu0 0.0
        %1372 = vmatpush1.msra.mxu0 0.0
        %1373 = vmatprep.subr.mxu0 0.0
        %1374 = vmatpush1.msra.mxu0 0.0
        %1375 = vmatprep.mubr.f32.mxu0 0.0
        %1376 = vmatmul.mubr.f32.gmra.mrb[0].mxu0 %v1279
        %v1377 = vpop.f32.mrb[0].mxu0
        %v1378 = vadd.f32 0.0, %v1377
        %v1379 = vpop.f32.mrb[0].mxu0
        %1380 = vmatprep.mubr.f32.mxu0 0.0
        %1381 = vmatmul.mubr.f32.gmra.mrb[0].mxu0 %v1280
        %v1382 = vpop.f32.mrb[0].mxu0
        %v1383 = vadd.f32 0.0, %v1382
        %v1384 = vpop.f32.mrb[0].mxu0
        %1385 = vmatprep.mubr.f32.mxu0 0.0
        %1386 = vmatmul.mubr.f32.gmra.mrb[0].mxu0 %v1281
        %v1387 = vpop.f32.mrb[0].mxu0
        %v1388 = vadd.f32 0.0, %v1387
        %v1389 = vpop.f32.mrb[0].mxu0
        %1390 = vmatprep.mubr.f32.mxu0 0.0
        %1391 = vmatmul.mubr.f32.gmra.mrb[0].mxu0 %v1282
        %v1392 = vpop.f32.mrb[0].mxu0
        %v1393 = vadd.f32 0.0, %v1392
        %v1394 = vpop.f32.mrb[0].mxu0
        %1395 = vmatprep.mubr.f32.mxu0 0.0
        %1396 = vmatmul.mubr.f32.gmra.mrb[0].mxu0 %v1283
        %v1397 = vpop.f32.mrb[0].mxu0
        %v1398 = vadd.f32 0.0, %v1397
        %v1399 = vpop.f32.mrb[0].mxu0
        %1400 = vmatprep.mubr.f32.mxu0 0.0
        %1401 = vmatmul.mubr.f32.gmra.mrb[0].mxu0 %v1284
        %v1402 = vpop.f32.mrb[0].mxu0
        %v1403 = vadd.f32 0.0, %v1402
        %v1404 = vpop.f32.mrb[0].mxu0
        %1405 = vmatprep.mubr.f32.mxu0 0.0
        %1406 = vmatmul.mubr.f32.gmra.mrb[0].mxu0 %v1285
        %v1407 = vpop.f32.mrb[0].mxu0
        %v1408 = vadd.f32 0.0, %v1407
        %v1409 = vpop.f32.mrb[0].mxu0
        %1410 = vmatprep.mubr.f32.mxu0 0.0
        %1411 = vmatmul.mubr.f32.gmra.mrb[0].mxu0 %v1286
        %v1412 = vpop.f32.mrb[0].mxu0
        %v1413 = vadd.f32 0.0, %v1412
        %v1414 = vpop.f32.mrb[0].mxu0
        %1415 = vmatprep.mubr.f32.mxu0 0.0
        %1416 = vmatmul.mubr.f32.gmra.mrb[0].mxu0 %v1287
        %v1417 = vpop.f32.mrb[0].mxu0
        %v1418 = vadd.f32 0.0, %v1417
        %v1419 = vpop.f32.mrb[0].mxu0
        %1420 = vmatprep.mubr.f32.mxu0 0.0
        %1421 = vmatmul.mubr.f32.gmra.mrb[0].mxu0 %v1288
        %v1422 = vpop.f32.mrb[0].mxu0
        %v1423 = vadd.f32 0.0, %v1422
        %v1424 = vpop.f32.mrb[0].mxu0
        %1425 = vmatprep.mubr.f32.mxu0 0.0
        %1426 = vmatmul.mubr.f32.gmra.mrb[0].mxu0 %v1289
        %v1427 = vpop.f32.mrb[0].mxu0
        %v1428 = vadd.f32 0.0, %v1427
        %v1429 = vpop.f32.mrb[0].mxu0
        %1430 = vmatprep.mubr.f32.mxu0 0.0
        %1431 = vmatmul.mubr.f32.gmra.mrb[0].mxu0 %v1290
        %v1432 = vpop.f32.mrb[0].mxu0
        %v1433 = vadd.f32 0.0, %v1432
        %v1434 = vpop.f32.mrb[0].mxu0
        %1435 = vmatprep.mubr.f32.mxu0 0.0
        %1436 = vmatmul.mubr.f32.gmra.mrb[0].mxu0 %v1291
        %v1437 = vpop.f32.mrb[0].mxu0
        %v1438 = vadd.f32 0.0, %v1437
        %v1439 = vpop.f32.mrb[0].mxu0
        %1440 = vmatprep.mubr.f32.mxu0 0.0
        %1441 = vmatmul.mubr.f32.gmra.mrb[0].mxu0 %v1292
        %v1442 = vpop.f32.mrb[0].mxu0
        %v1443 = vadd.f32 0.0, %v1442
        %v1444 = vpop.f32.mrb[0].mxu0
        %1445 = vmatprep.mubr.f32.mxu0 0.0
        %1446 = vmatmul.mubr.f32.gmra.mrb[0].mxu0 %v1293
        %v1447 = vpop.f32.mrb[0].mxu0
        %v1448 = vadd.f32 0.0, %v1447
        %v1449 = vpop.f32.mrb[0].mxu0
        %1450 = vmatprep.mubr.f32.mxu0 0.0
        %1451 = vmatmul.mubr.f32.gmra.mrb[0].mxu0 %v1294
        %v1452 = vpop.f32.mrb[0].mxu0
        %v1453 = vadd.f32 0.0, %v1452
        %v1454 = vpop.f32.mrb[0].mxu0
        %1455 = vdwg.mxu0
        %s1456 = scalar_lea.vmem %s306, 256
        %v1457 = vld [vmem:[%s1456] sm:$0xff]
        %v1458 = vld [vmem:[%s1456 + $0x8] sm:$0xff]
        %v1459 = vld [vmem:[%s1456 + $0x10] sm:$0xff]
        %v1460 = vld [vmem:[%s1456 + $0x18] sm:$0xff]
        %v1461 = vld [vmem:[%s1456 + $0x20] sm:$0xff]
        %v1462 = vld [vmem:[%s1456 + $0x28] sm:$0xff]
        %v1463 = vld [vmem:[%s1456 + $0x30] sm:$0xff]
        %v1464 = vld [vmem:[%s1456 + $0x38] sm:$0xff]
        %v1465 = vld [vmem:[%s1456 + $0x40] sm:$0xff]
        %v1466 = vld [vmem:[%s1456 + $0x48] sm:$0xff]
        %v1467 = vld [vmem:[%s1456 + $0x50] sm:$0xff]
        %v1468 = vld [vmem:[%s1456 + $0x58] sm:$0xff]
        %v1469 = vld [vmem:[%s1456 + $0x60] sm:$0xff]
        %v1470 = vld [vmem:[%s1456 + $0x68] sm:$0xff]
        %v1471 = vld [vmem:[%s1456 + $0x70] sm:$0xff]
        %v1472 = vld [vmem:[%s1456 + $0x78] sm:$0xff]
        %v1473 = vld [vmem:[%s1456 + $0x80] sm:$0xff]
        %v1474 = vld [vmem:[%s1456 + $0x88] sm:$0xff]
        %v1475 = vld [vmem:[%s1456 + $0x90] sm:$0xff]
        %v1476 = vld [vmem:[%s1456 + $0x98] sm:$0xff]
        %v1477 = vld [vmem:[%s1456 + $0xa0] sm:$0xff]
        %v1478 = vld [vmem:[%s1456 + $0xa8] sm:$0xff]
        %v1479 = vld [vmem:[%s1456 + $0xb0] sm:$0xff]
        %v1480 = vld [vmem:[%s1456 + $0xb8] sm:$0xff]
        %v1481 = vld [vmem:[%s1456 + $0xc0] sm:$0xff]
        %v1482 = vld [vmem:[%s1456 + $0xc8] sm:$0xff]
        %v1483 = vld [vmem:[%s1456 + $0xd0] sm:$0xff]
        %v1484 = vld [vmem:[%s1456 + $0xd8] sm:$0xff]
        %v1485 = vld [vmem:[%s1456 + $0xe0] sm:$0xff]
        %v1486 = vld [vmem:[%s1456 + $0xe8] sm:$0xff]
        %v1487 = vld [vmem:[%s1456 + $0xf0] sm:$0xff]
        %v1488 = vld [vmem:[%s1456 + $0xf8] sm:$0xff]
        %1489 = vmatprep.subr.mxu0 0.0
        %1490 = vmatpush1.msra.mxu0 %v1457
        %1491 = vmatprep.subr.mxu0 0.0
        %1492 = vmatpush1.msra.mxu0 %v1458
        %1493 = vmatprep.subr.mxu0 0.0
        %1494 = vmatpush1.msra.mxu0 %v1459
        %1495 = vmatprep.subr.mxu0 0.0
        %1496 = vmatpush1.msra.mxu0 %v1460
        %1497 = vmatprep.subr.mxu0 0.0
        %1498 = vmatpush1.msra.mxu0 %v1461
        %1499 = vmatprep.subr.mxu0 0.0
        %1500 = vmatpush1.msra.mxu0 %v1462
        %1501 = vmatprep.subr.mxu0 0.0
        %1502 = vmatpush1.msra.mxu0 %v1463
        %1503 = vmatprep.subr.mxu0 0.0
        %1504 = vmatpush1.msra.mxu0 %v1464
        %1505 = vmatprep.subr.mxu0 0.0
        %1506 = vmatpush1.msra.mxu0 %v1465
        %1507 = vmatprep.subr.mxu0 0.0
        %1508 = vmatpush1.msra.mxu0 %v1466
        %1509 = vmatprep.subr.mxu0 0.0
        %1510 = vmatpush1.msra.mxu0 %v1467
        %1511 = vmatprep.subr.mxu0 0.0
        %1512 = vmatpush1.msra.mxu0 %v1468
        %1513 = vmatprep.subr.mxu0 0.0
        %1514 = vmatpush1.msra.mxu0 %v1469
        %1515 = vmatprep.subr.mxu0 0.0
        %1516 = vmatpush1.msra.mxu0 %v1470
        %1517 = vmatprep.subr.mxu0 0.0
        %1518 = vmatpush1.msra.mxu0 %v1471
        %1519 = vmatprep.subr.mxu0 0.0
        %1520 = vmatpush1.msra.mxu0 %v1472
        %1521 = vmatprep.subr.mxu0 0.0
        %1522 = vmatpush1.msra.mxu0 %v1473
        %1523 = vmatprep.subr.mxu0 0.0
        %1524 = vmatpush1.msra.mxu0 %v1474
        %1525 = vmatprep.subr.mxu0 0.0
        %1526 = vmatpush1.msra.mxu0 %v1475
        %1527 = vmatprep.subr.mxu0 0.0
        %1528 = vmatpush1.msra.mxu0 %v1476
        %1529 = vmatprep.subr.mxu0 0.0
        %1530 = vmatpush1.msra.mxu0 %v1477
        %1531 = vmatprep.subr.mxu0 0.0
        %1532 = vmatpush1.msra.mxu0 %v1478
        %1533 = vmatprep.subr.mxu0 0.0
        %1534 = vmatpush1.msra.mxu0 %v1479
        %1535 = vmatprep.subr.mxu0 0.0
        %1536 = vmatpush1.msra.mxu0 %v1480
        %1537 = vmatprep.subr.mxu0 0.0
        %1538 = vmatpush1.msra.mxu0 %v1481
        %1539 = vmatprep.subr.mxu0 0.0
        %1540 = vmatpush1.msra.mxu0 %v1482
        %1541 = vmatprep.subr.mxu0 0.0
        %1542 = vmatpush1.msra.mxu0 %v1483
        %1543 = vmatprep.subr.mxu0 0.0
        %1544 = vmatpush1.msra.mxu0 %v1484
        %1545 = vmatprep.subr.mxu0 0.0
        %1546 = vmatpush1.msra.mxu0 %v1485
        %1547 = vmatprep.subr.mxu0 0.0
        %1548 = vmatpush1.msra.mxu0 %v1486
        %1549 = vmatprep.subr.mxu0 0.0
        %1550 = vmatpush1.msra.mxu0 %v1487
        %1551 = vmatprep.subr.mxu0 0.0
        %1552 = vmatpush1.msra.mxu0 %v1488
        %1553 = vmatprep.mubr.f32.mxu0 %v331
        %1554 = vmatmul.mubr.f32.gmra.mrb[0].mxu0 %v330
        %v1555 = vpop.f32.mrb[0].mxu0
        %v1556 = vadd.f32 0.0, %v1555
        %v1557 = vpop.f32.mrb[0].mxu0
        %1558 = vmatprep.mubr.f32.mxu0 %v333
        %1559 = vmatmul.mubr.f32.gmra.mrb[0].mxu0 %v332
        %v1560 = vpop.f32.mrb[0].mxu0
        %v1561 = vadd.f32 0.0, %v1560
        %v1562 = vpop.f32.mrb[0].mxu0
        %1563 = vmatprep.mubr.f32.mxu0 %v335
        %1564 = vmatmul.mubr.f32.gmra.mrb[0].mxu0 %v334
        %v1565 = vpop.f32.mrb[0].mxu0
        %v1566 = vadd.f32 0.0, %v1565
        %v1567 = vpop.f32.mrb[0].mxu0
        %1568 = vmatprep.mubr.f32.mxu0 %v337
        %1569 = vmatmul.mubr.f32.gmra.mrb[0].mxu0 %v336
        %v1570 = vpop.f32.mrb[0].mxu0
        %v1571 = vadd.f32 0.0, %v1570
        %v1572 = vpop.f32.mrb[0].mxu0
        %1573 = vmatprep.mubr.f32.mxu0 %v339
        %1574 = vmatmul.mubr.f32.gmra.mrb[0].mxu0 %v338
        %v1575 = vpop.f32.mrb[0].mxu0
        %v1576 = vadd.f32 0.0, %v1575
        %v1577 = vpop.f32.mrb[0].mxu0
        %1578 = vmatprep.mubr.f32.mxu0 %v341
        %1579 = vmatmul.mubr.f32.gmra.mrb[0].mxu0 %v340
        %v1580 = vpop.f32.mrb[0].mxu0
        %v1581 = vadd.f32 0.0, %v1580
        %v1582 = vpop.f32.mrb[0].mxu0
        %1583 = vmatprep.mubr.f32.mxu0 %v343
        %1584 = vmatmul.mubr.f32.gmra.mrb[0].mxu0 %v342
        %v1585 = vpop.f32.mrb[0].mxu0
        %v1586 = vadd.f32 0.0, %v1585
        %v1587 = vpop.f32.mrb[0].mxu0
        %1588 = vmatprep.mubr.f32.mxu0 %v345
        %1589 = vmatmul.mubr.f32.gmra.mrb[0].mxu0 %v344
        %v1590 = vpop.f32.mrb[0].mxu0
        %v1591 = vadd.f32 0.0, %v1590
        %v1592 = vpop.f32.mrb[0].mxu0
        %1593 = vmatprep.mubr.f32.mxu0 %v347
        %1594 = vmatmul.mubr.f32.gmra.mrb[0].mxu0 %v346
        %v1595 = vpop.f32.mrb[0].mxu0
        %v1596 = vadd.f32 0.0, %v1595
        %v1597 = vpop.f32.mrb[0].mxu0
        %1598 = vmatprep.mubr.f32.mxu0 %v349
        %1599 = vmatmul.mubr.f32.gmra.mrb[0].mxu0 %v348
        %v1600 = vpop.f32.mrb[0].mxu0
        %v1601 = vadd.f32 0.0, %v1600
        %v1602 = vpop.f32.mrb[0].mxu0
        %1603 = vmatprep.mubr.f32.mxu0 %v351
        %1604 = vmatmul.mubr.f32.gmra.mrb[0].mxu0 %v350
        %v1605 = vpop.f32.mrb[0].mxu0
        %v1606 = vadd.f32 0.0, %v1605
        %v1607 = vpop.f32.mrb[0].mxu0
        %1608 = vmatprep.mubr.f32.mxu0 %v353
        %1609 = vmatmul.mubr.f32.gmra.mrb[0].mxu0 %v352
        %v1610 = vpop.f32.mrb[0].mxu0
        %v1611 = vadd.f32 0.0, %v1610
        %v1612 = vpop.f32.mrb[0].mxu0
        %1613 = vmatprep.mubr.f32.mxu0 %v355
        %1614 = vmatmul.mubr.f32.gmra.mrb[0].mxu0 %v354
        %v1615 = vpop.f32.mrb[0].mxu0
        %v1616 = vadd.f32 0.0, %v1615
        %v1617 = vpop.f32.mrb[0].mxu0
        %1618 = vmatprep.mubr.f32.mxu0 %v357
        %1619 = vmatmul.mubr.f32.gmra.mrb[0].mxu0 %v356
        %v1620 = vpop.f32.mrb[0].mxu0
        %v1621 = vadd.f32 0.0, %v1620
        %v1622 = vpop.f32.mrb[0].mxu0
        %1623 = vmatprep.mubr.f32.mxu0 %v359
        %1624 = vmatmul.mubr.f32.gmra.mrb[0].mxu0 %v358
        %v1625 = vpop.f32.mrb[0].mxu0
        %v1626 = vadd.f32 0.0, %v1625
        %v1627 = vpop.f32.mrb[0].mxu0
        %1628 = vmatprep.mubr.f32.mxu0 %v361
        %1629 = vmatmul.mubr.f32.gmra.mrb[0].mxu0 %v360
        %v1630 = vpop.f32.mrb[0].mxu0
        %v1631 = vadd.f32 0.0, %v1630
        %v1632 = vpop.f32.mrb[0].mxu0
        %1633 = vdwg.mxu0
        %s1634 = scalar_lea.vmem %s313, 256
        %v1635 = vld [vmem:[%s1634] sm:$0xff]
        %v1636 = vld [vmem:[%s1634 + $0x8] sm:$0xff]
        %v1637 = vld [vmem:[%s1634 + $0x10] sm:$0xff]
        %v1638 = vld [vmem:[%s1634 + $0x18] sm:$0xff]
        %v1639 = vld [vmem:[%s1634 + $0x20] sm:$0xff]
        %v1640 = vld [vmem:[%s1634 + $0x28] sm:$0xff]
        %v1641 = vld [vmem:[%s1634 + $0x30] sm:$0xff]
        %v1642 = vld [vmem:[%s1634 + $0x38] sm:$0xff]
        %v1643 = vld [vmem:[%s1634 + $0x40] sm:$0xff]
        %v1644 = vld [vmem:[%s1634 + $0x48] sm:$0xff]
        %v1645 = vld [vmem:[%s1634 + $0x50] sm:$0xff]
        %v1646 = vld [vmem:[%s1634 + $0x58] sm:$0xff]
        %v1647 = vld [vmem:[%s1634 + $0x60] sm:$0xff]
        %v1648 = vld [vmem:[%s1634 + $0x68] sm:$0xff]
        %v1649 = vld [vmem:[%s1634 + $0x70] sm:$0xff]
        %v1650 = vld [vmem:[%s1634 + $0x78] sm:$0xff]
        %v1651 = vld [vmem:[%s1634 + $0x80] sm:$0xff]
        %v1652 = vld [vmem:[%s1634 + $0x88] sm:$0xff]
        %v1653 = vld [vmem:[%s1634 + $0x90] sm:$0xff]
        %v1654 = vld [vmem:[%s1634 + $0x98] sm:$0xff]
        %v1655 = vld [vmem:[%s1634 + $0xa0] sm:$0xff]
        %v1656 = vld [vmem:[%s1634 + $0xa8] sm:$0xff]
        %v1657 = vld [vmem:[%s1634 + $0xb0] sm:$0xff]
        %v1658 = vld [vmem:[%s1634 + $0xb8] sm:$0xff]
        %v1659 = vld [vmem:[%s1634 + $0xc0] sm:$0xff]
        %v1660 = vld [vmem:[%s1634 + $0xc8] sm:$0xff]
        %v1661 = vld [vmem:[%s1634 + $0xd0] sm:$0xff]
        %v1662 = vld [vmem:[%s1634 + $0xd8] sm:$0xff]
        %v1663 = vld [vmem:[%s1634 + $0xe0] sm:$0xff]
        %v1664 = vld [vmem:[%s1634 + $0xe8] sm:$0xff]
        %v1665 = vld [vmem:[%s1634 + $0xf0] sm:$0xff]
        %v1666 = vld [vmem:[%s1634 + $0xf8] sm:$0xff]
        %1667 = vmatprep.subr.mxu0 0.0
        %1668 = vmatpush1.msra.mxu0 %v1635
        %1669 = vmatprep.subr.mxu0 0.0
        %1670 = vmatpush1.msra.mxu0 %v1636
        %1671 = vmatprep.subr.mxu0 0.0
        %1672 = vmatpush1.msra.mxu0 %v1637
        %1673 = vmatprep.subr.mxu0 0.0
        %1674 = vmatpush1.msra.mxu0 %v1638
        %1675 = vmatprep.subr.mxu0 0.0
        %1676 = vmatpush1.msra.mxu0 %v1639
        %1677 = vmatprep.subr.mxu0 0.0
        %1678 = vmatpush1.msra.mxu0 %v1640
        %1679 = vmatprep.subr.mxu0 0.0
        %1680 = vmatpush1.msra.mxu0 %v1641
        %1681 = vmatprep.subr.mxu0 0.0
        %1682 = vmatpush1.msra.mxu0 %v1642
        %1683 = vmatprep.subr.mxu0 0.0
        %1684 = vmatpush1.msra.mxu0 %v1643
        %1685 = vmatprep.subr.mxu0 0.0
        %1686 = vmatpush1.msra.mxu0 %v1644
        %1687 = vmatprep.subr.mxu0 0.0
        %1688 = vmatpush1.msra.mxu0 %v1645
        %1689 = vmatprep.subr.mxu0 0.0
        %1690 = vmatpush1.msra.mxu0 %v1646
        %1691 = vmatprep.subr.mxu0 0.0
        %1692 = vmatpush1.msra.mxu0 %v1647
        %1693 = vmatprep.subr.mxu0 0.0
        %1694 = vmatpush1.msra.mxu0 %v1648
        %1695 = vmatprep.subr.mxu0 0.0
        %1696 = vmatpush1.msra.mxu0 %v1649
        %1697 = vmatprep.subr.mxu0 0.0
        %1698 = vmatpush1.msra.mxu0 %v1650
        %1699 = vmatprep.subr.mxu0 0.0
        %1700 = vmatpush1.msra.mxu0 %v1651
        %1701 = vmatprep.subr.mxu0 0.0
        %1702 = vmatpush1.msra.mxu0 %v1652
        %1703 = vmatprep.subr.mxu0 0.0
        %1704 = vmatpush1.msra.mxu0 %v1653
        %1705 = vmatprep.subr.mxu0 0.0
        %1706 = vmatpush1.msra.mxu0 %v1654
        %1707 = vmatprep.subr.mxu0 0.0
        %1708 = vmatpush1.msra.mxu0 %v1655
        %1709 = vmatprep.subr.mxu0 0.0
        %1710 = vmatpush1.msra.mxu0 %v1656
        %1711 = vmatprep.subr.mxu0 0.0
        %1712 = vmatpush1.msra.mxu0 %v1657
        %1713 = vmatprep.subr.mxu0 0.0
        %1714 = vmatpush1.msra.mxu0 %v1658
        %1715 = vmatprep.subr.mxu0 0.0
        %1716 = vmatpush1.msra.mxu0 %v1659
        %1717 = vmatprep.subr.mxu0 0.0
        %1718 = vmatpush1.msra.mxu0 %v1660
        %1719 = vmatprep.subr.mxu0 0.0
        %1720 = vmatpush1.msra.mxu0 %v1661
        %1721 = vmatprep.subr.mxu0 0.0
        %1722 = vmatpush1.msra.mxu0 %v1662
        %1723 = vmatprep.subr.mxu0 0.0
        %1724 = vmatpush1.msra.mxu0 %v1663
        %1725 = vmatprep.subr.mxu0 0.0
        %1726 = vmatpush1.msra.mxu0 %v1664
        %1727 = vmatprep.subr.mxu0 0.0
        %1728 = vmatpush1.msra.mxu0 %v1665
        %1729 = vmatprep.subr.mxu0 0.0
        %1730 = vmatpush1.msra.mxu0 %v1666
        %1731 = vmatprep.mubr.f32.mxu0 %v331
        %1732 = vmatmul.mubr.f32.gmra.mrb[0].mxu0 %v330
        %v1733 = vpop.f32.mrb[0].mxu0
        %v1734 = vadd.f32 0.0, %v1733
        %v1735 = vpop.f32.mrb[0].mxu0
        %1736 = vmatprep.mubr.f32.mxu0 %v333
        %1737 = vmatmul.mubr.f32.gmra.mrb[0].mxu0 %v332
        %v1738 = vpop.f32.mrb[0].mxu0
        %v1739 = vadd.f32 0.0, %v1738
        %v1740 = vpop.f32.mrb[0].mxu0
        %1741 = vmatprep.mubr.f32.mxu0 %v335
        %1742 = vmatmul.mubr.f32.gmra.mrb[0].mxu0 %v334
        %v1743 = vpop.f32.mrb[0].mxu0
        %v1744 = vadd.f32 0.0, %v1743
        %v1745 = vpop.f32.mrb[0].mxu0
        %1746 = vmatprep.mubr.f32.mxu0 %v337
        %1747 = vmatmul.mubr.f32.gmra.mrb[0].mxu0 %v336
        %v1748 = vpop.f32.mrb[0].mxu0
        %v1749 = vadd.f32 0.0, %v1748
        %v1750 = vpop.f32.mrb[0].mxu0
        %1751 = vmatprep.mubr.f32.mxu0 %v339
        %1752 = vmatmul.mubr.f32.gmra.mrb[0].mxu0 %v338
        %v1753 = vpop.f32.mrb[0].mxu0
        %v1754 = vadd.f32 0.0, %v1753
        %v1755 = vpop.f32.mrb[0].mxu0
        %1756 = vmatprep.mubr.f32.mxu0 %v341
        %1757 = vmatmul.mubr.f32.gmra.mrb[0].mxu0 %v340
        %v1758 = vpop.f32.mrb[0].mxu0
        %v1759 = vadd.f32 0.0, %v1758
        %v1760 = vpop.f32.mrb[0].mxu0
        %1761 = vmatprep.mubr.f32.mxu0 %v343
        %1762 = vmatmul.mubr.f32.gmra.mrb[0].mxu0 %v342
        %v1763 = vpop.f32.mrb[0].mxu0
        %v1764 = vadd.f32 0.0, %v1763
        %v1765 = vpop.f32.mrb[0].mxu0
        %1766 = vmatprep.mubr.f32.mxu0 %v345
        %1767 = vmatmul.mubr.f32.gmra.mrb[0].mxu0 %v344
        %v1768 = vpop.f32.mrb[0].mxu0
        %v1769 = vadd.f32 0.0, %v1768
        %v1770 = vpop.f32.mrb[0].mxu0
        %1771 = vmatprep.mubr.f32.mxu0 %v347
        %1772 = vmatmul.mubr.f32.gmra.mrb[0].mxu0 %v346
        %v1773 = vpop.f32.mrb[0].mxu0
        %v1774 = vadd.f32 0.0, %v1773
        %v1775 = vpop.f32.mrb[0].mxu0
        %1776 = vmatprep.mubr.f32.mxu0 %v349
        %1777 = vmatmul.mubr.f32.gmra.mrb[0].mxu0 %v348
        %v1778 = vpop.f32.mrb[0].mxu0
        %v1779 = vadd.f32 0.0, %v1778
        %v1780 = vpop.f32.mrb[0].mxu0
        %1781 = vmatprep.mubr.f32.mxu0 %v351
        %1782 = vmatmul.mubr.f32.gmra.mrb[0].mxu0 %v350
        %v1783 = vpop.f32.mrb[0].mxu0
        %v1784 = vadd.f32 0.0, %v1783
        %v1785 = vpop.f32.mrb[0].mxu0
        %1786 = vmatprep.mubr.f32.mxu0 %v353
        %1787 = vmatmul.mubr.f32.gmra.mrb[0].mxu0 %v352
        %v1788 = vpop.f32.mrb[0].mxu0
        %v1789 = vadd.f32 0.0, %v1788
        %v1790 = vpop.f32.mrb[0].mxu0
        %1791 = vmatprep.mubr.f32.mxu0 %v355
        %1792 = vmatmul.mubr.f32.gmra.mrb[0].mxu0 %v354
        %v1793 = vpop.f32.mrb[0].mxu0
        %v1794 = vadd.f32 0.0, %v1793
        %v1795 = vpop.f32.mrb[0].mxu0
        %1796 = vmatprep.mubr.f32.mxu0 %v357
        %1797 = vmatmul.mubr.f32.gmra.mrb[0].mxu0 %v356
        %v1798 = vpop.f32.mrb[0].mxu0
        %v1799 = vadd.f32 0.0, %v1798
        %v1800 = vpop.f32.mrb[0].mxu0
        %1801 = vmatprep.mubr.f32.mxu0 %v359
        %1802 = vmatmul.mubr.f32.gmra.mrb[0].mxu0 %v358
        %v1803 = vpop.f32.mrb[0].mxu0
        %v1804 = vadd.f32 0.0, %v1803
        %v1805 = vpop.f32.mrb[0].mxu0
        %1806 = vmatprep.mubr.f32.mxu0 %v361
        %1807 = vmatmul.mubr.f32.gmra.mrb[0].mxu0 %v360
        %v1808 = vpop.f32.mrb[0].mxu0
        %v1809 = vadd.f32 0.0, %v1808
        %v1810 = vpop.f32.mrb[0].mxu0
        %1811 = vdwg.mxu0
        %s1812 = scalar_lea.vmem %s320, 256
        %v1813 = vld [vmem:[%s1812] sm:$0xff]
        %v1814 = vld [vmem:[%s1812 + $0x8] sm:$0xff]
        %v1815 = vld [vmem:[%s1812 + $0x10] sm:$0xff]
        %v1816 = vld [vmem:[%s1812 + $0x18] sm:$0xff]
        %v1817 = vld [vmem:[%s1812 + $0x20] sm:$0xff]
        %v1818 = vld [vmem:[%s1812 + $0x28] sm:$0xff]
        %v1819 = vld [vmem:[%s1812 + $0x30] sm:$0xff]
        %v1820 = vld [vmem:[%s1812 + $0x38] sm:$0xff]
        %v1821 = vld [vmem:[%s1812 + $0x40] sm:$0xff]
        %v1822 = vld [vmem:[%s1812 + $0x48] sm:$0xff]
        %v1823 = vld [vmem:[%s1812 + $0x50] sm:$0xff]
        %v1824 = vld [vmem:[%s1812 + $0x58] sm:$0xff]
        %v1825 = vld [vmem:[%s1812 + $0x60] sm:$0xff]
        %v1826 = vld [vmem:[%s1812 + $0x68] sm:$0xff]
        %v1827 = vld [vmem:[%s1812 + $0x70] sm:$0xff]
        %v1828 = vld [vmem:[%s1812 + $0x78] sm:$0xff]
        %v1829 = vld [vmem:[%s1812 + $0x80] sm:$0xff]
        %v1830 = vld [vmem:[%s1812 + $0x88] sm:$0xff]
        %v1831 = vld [vmem:[%s1812 + $0x90] sm:$0xff]
        %v1832 = vld [vmem:[%s1812 + $0x98] sm:$0xff]
        %v1833 = vld [vmem:[%s1812 + $0xa0] sm:$0xff]
        %v1834 = vld [vmem:[%s1812 + $0xa8] sm:$0xff]
        %v1835 = vld [vmem:[%s1812 + $0xb0] sm:$0xff]
        %v1836 = vld [vmem:[%s1812 + $0xb8] sm:$0xff]
        %v1837 = vld [vmem:[%s1812 + $0xc0] sm:$0xff]
        %v1838 = vld [vmem:[%s1812 + $0xc8] sm:$0xff]
        %v1839 = vld [vmem:[%s1812 + $0xd0] sm:$0xff]
        %v1840 = vld [vmem:[%s1812 + $0xd8] sm:$0xff]
        %v1841 = vld [vmem:[%s1812 + $0xe0] sm:$0xff]
        %v1842 = vld [vmem:[%s1812 + $0xe8] sm:$0xff]
        %v1843 = vld [vmem:[%s1812 + $0xf0] sm:$0xff]
        %v1844 = vld [vmem:[%s1812 + $0xf8] sm:$0xff]
        %1845 = vmatprep.subr.mxu0 0.0
        %1846 = vmatpush1.msra.mxu0 %v1813
        %1847 = vmatprep.subr.mxu0 0.0
        %1848 = vmatpush1.msra.mxu0 %v1814
        %1849 = vmatprep.subr.mxu0 0.0
        %1850 = vmatpush1.msra.mxu0 %v1815
        %1851 = vmatprep.subr.mxu0 0.0
        %1852 = vmatpush1.msra.mxu0 %v1816
        %1853 = vmatprep.subr.mxu0 0.0
        %1854 = vmatpush1.msra.mxu0 %v1817
        %1855 = vmatprep.subr.mxu0 0.0
        %1856 = vmatpush1.msra.mxu0 %v1818
        %1857 = vmatprep.subr.mxu0 0.0
        %1858 = vmatpush1.msra.mxu0 %v1819
        %1859 = vmatprep.subr.mxu0 0.0
        %1860 = vmatpush1.msra.mxu0 %v1820
        %1861 = vmatprep.subr.mxu0 0.0
        %1862 = vmatpush1.msra.mxu0 %v1821
        %1863 = vmatprep.subr.mxu0 0.0
        %1864 = vmatpush1.msra.mxu0 %v1822
        %1865 = vmatprep.subr.mxu0 0.0
        %1866 = vmatpush1.msra.mxu0 %v1823
        %1867 = vmatprep.subr.mxu0 0.0
        %1868 = vmatpush1.msra.mxu0 %v1824
        %1869 = vmatprep.subr.mxu0 0.0
        %1870 = vmatpush1.msra.mxu0 %v1825
        %1871 = vmatprep.subr.mxu0 0.0
        %1872 = vmatpush1.msra.mxu0 %v1826
        %1873 = vmatprep.subr.mxu0 0.0
        %1874 = vmatpush1.msra.mxu0 %v1827
        %1875 = vmatprep.subr.mxu0 0.0
        %1876 = vmatpush1.msra.mxu0 %v1828
        %1877 = vmatprep.subr.mxu0 0.0
        %1878 = vmatpush1.msra.mxu0 %v1829
        %1879 = vmatprep.subr.mxu0 0.0
        %1880 = vmatpush1.msra.mxu0 %v1830
        %1881 = vmatprep.subr.mxu0 0.0
        %1882 = vmatpush1.msra.mxu0 %v1831
        %1883 = vmatprep.subr.mxu0 0.0
        %1884 = vmatpush1.msra.mxu0 %v1832
        %1885 = vmatprep.subr.mxu0 0.0
        %1886 = vmatpush1.msra.mxu0 %v1833
        %1887 = vmatprep.subr.mxu0 0.0
        %1888 = vmatpush1.msra.mxu0 %v1834
        %1889 = vmatprep.subr.mxu0 0.0
        %1890 = vmatpush1.msra.mxu0 %v1835
        %1891 = vmatprep.subr.mxu0 0.0
        %1892 = vmatpush1.msra.mxu0 %v1836
        %1893 = vmatprep.subr.mxu0 0.0
        %1894 = vmatpush1.msra.mxu0 %v1837
        %1895 = vmatprep.subr.mxu0 0.0
        %1896 = vmatpush1.msra.mxu0 %v1838
        %1897 = vmatprep.subr.mxu0 0.0
        %1898 = vmatpush1.msra.mxu0 %v1839
        %1899 = vmatprep.subr.mxu0 0.0
        %1900 = vmatpush1.msra.mxu0 %v1840
        %1901 = vmatprep.subr.mxu0 0.0
        %1902 = vmatpush1.msra.mxu0 %v1841
        %1903 = vmatprep.subr.mxu0 0.0
        %1904 = vmatpush1.msra.mxu0 %v1842
        %1905 = vmatprep.subr.mxu0 0.0
        %1906 = vmatpush1.msra.mxu0 %v1843
        %1907 = vmatprep.subr.mxu0 0.0
        %1908 = vmatpush1.msra.mxu0 %v1844
        %1909 = vmatprep.mubr.f32.mxu0 %v331
        %1910 = vmatmul.mubr.f32.gmra.mrb[0].mxu0 %v330
        %v1911 = vpop.f32.mrb[0].mxu0
        %v1912 = vadd.f32 0.0, %v1911
        %v1913 = vpop.f32.mrb[0].mxu0
        %1914 = vmatprep.mubr.f32.mxu0 %v333
        %1915 = vmatmul.mubr.f32.gmra.mrb[0].mxu0 %v332
        %v1916 = vpop.f32.mrb[0].mxu0
        %v1917 = vadd.f32 0.0, %v1916
        %v1918 = vpop.f32.mrb[0].mxu0
        %1919 = vmatprep.mubr.f32.mxu0 %v335
        %1920 = vmatmul.mubr.f32.gmra.mrb[0].mxu0 %v334
        %v1921 = vpop.f32.mrb[0].mxu0
        %v1922 = vadd.f32 0.0, %v1921
        %v1923 = vpop.f32.mrb[0].mxu0
        %1924 = vmatprep.mubr.f32.mxu0 %v337
        %1925 = vmatmul.mubr.f32.gmra.mrb[0].mxu0 %v336
        %v1926 = vpop.f32.mrb[0].mxu0
        %v1927 = vadd.f32 0.0, %v1926
        %v1928 = vpop.f32.mrb[0].mxu0
        %1929 = vmatprep.mubr.f32.mxu0 %v339
        %1930 = vmatmul.mubr.f32.gmra.mrb[0].mxu0 %v338
        %v1931 = vpop.f32.mrb[0].mxu0
        %v1932 = vadd.f32 0.0, %v1931
        %v1933 = vpop.f32.mrb[0].mxu0
        %1934 = vmatprep.mubr.f32.mxu0 %v341
        %1935 = vmatmul.mubr.f32.gmra.mrb[0].mxu0 %v340
        %v1936 = vpop.f32.mrb[0].mxu0
        %v1937 = vadd.f32 0.0, %v1936
        %v1938 = vpop.f32.mrb[0].mxu0
        %1939 = vmatprep.mubr.f32.mxu0 %v343
        %1940 = vmatmul.mubr.f32.gmra.mrb[0].mxu0 %v342
        %v1941 = vpop.f32.mrb[0].mxu0
        %v1942 = vadd.f32 0.0, %v1941
        %v1943 = vpop.f32.mrb[0].mxu0
        %1944 = vmatprep.mubr.f32.mxu0 %v345
        %1945 = vmatmul.mubr.f32.gmra.mrb[0].mxu0 %v344
        %v1946 = vpop.f32.mrb[0].mxu0
        %v1947 = vadd.f32 0.0, %v1946
        %v1948 = vpop.f32.mrb[0].mxu0
        %1949 = vmatprep.mubr.f32.mxu0 %v347
        %1950 = vmatmul.mubr.f32.gmra.mrb[0].mxu0 %v346
        %v1951 = vpop.f32.mrb[0].mxu0
        %v1952 = vadd.f32 0.0, %v1951
        %v1953 = vpop.f32.mrb[0].mxu0
        %1954 = vmatprep.mubr.f32.mxu0 %v349
        %1955 = vmatmul.mubr.f32.gmra.mrb[0].mxu0 %v348
        %v1956 = vpop.f32.mrb[0].mxu0
        %v1957 = vadd.f32 0.0, %v1956
        %v1958 = vpop.f32.mrb[0].mxu0
        %1959 = vmatprep.mubr.f32.mxu0 %v351
        %1960 = vmatmul.mubr.f32.gmra.mrb[0].mxu0 %v350
        %v1961 = vpop.f32.mrb[0].mxu0
        %v1962 = vadd.f32 0.0, %v1961
        %v1963 = vpop.f32.mrb[0].mxu0
        %1964 = vmatprep.mubr.f32.mxu0 %v353
        %1965 = vmatmul.mubr.f32.gmra.mrb[0].mxu0 %v352
        %v1966 = vpop.f32.mrb[0].mxu0
        %v1967 = vadd.f32 0.0, %v1966
        %v1968 = vpop.f32.mrb[0].mxu0
        %1969 = vmatprep.mubr.f32.mxu0 %v355
        %1970 = vmatmul.mubr.f32.gmra.mrb[0].mxu0 %v354
        %v1971 = vpop.f32.mrb[0].mxu0
        %v1972 = vadd.f32 0.0, %v1971
        %v1973 = vpop.f32.mrb[0].mxu0
        %1974 = vmatprep.mubr.f32.mxu0 %v357
        %1975 = vmatmul.mubr.f32.gmra.mrb[0].mxu0 %v356
        %v1976 = vpop.f32.mrb[0].mxu0
        %v1977 = vadd.f32 0.0, %v1976
        %v1978 = vpop.f32.mrb[0].mxu0
        %1979 = vmatprep.mubr.f32.mxu0 %v359
        %1980 = vmatmul.mubr.f32.gmra.mrb[0].mxu0 %v358
        %v1981 = vpop.f32.mrb[0].mxu0
        %v1982 = vadd.f32 0.0, %v1981
        %v1983 = vpop.f32.mrb[0].mxu0
        %1984 = vmatprep.mubr.f32.mxu0 %v361
        %1985 = vmatmul.mubr.f32.gmra.mrb[0].mxu0 %v360
        %v1986 = vpop.f32.mrb[0].mxu0
        %v1987 = vadd.f32 0.0, %v1986
        %v1988 = vpop.f32.mrb[0].mxu0
        %1989 = vdwg.mxu0
        %v1991 = vsel %vm893, %v1556, 0
        %v1994 = vsel %vm893, %v1561, 0
        %v1997 = vsel %vm893, %v1566, 0
        %v2000 = vsel %vm893, %v1571, 0
        %v2003 = vsel %vm893, %v1576, 0
        %v2006 = vsel %vm893, %v1581, 0
        %v2009 = vsel %vm893, %v1586, 0
        %v2012 = vsel %vm893, %v1591, 0
        %v2015 = vsel %vm893, %v1596, 0
        %v2018 = vsel %vm893, %v1601, 0
        %v2021 = vsel %vm893, %v1606, 0
        %v2024 = vsel %vm893, %v1611, 0
        %v2027 = vsel %vm893, %v1616, 0
        %v2030 = vsel %vm893, %v1621, 0
        %v2033 = vsel %vm893, %v1626, 0
        %v2036 = vsel %vm893, %v1631, 0
        %v2039 = vsel %vm893, %v1734, 0
        %v2042 = vsel %vm893, %v1739, 0
        %v2045 = vsel %vm893, %v1744, 0
        %v2048 = vsel %vm893, %v1749, 0
        %v2051 = vsel %vm893, %v1754, 0
        %v2054 = vsel %vm893, %v1759, 0
        %v2057 = vsel %vm893, %v1764, 0
        %v2060 = vsel %vm893, %v1769, 0
        %v2063 = vsel %vm893, %v1774, 0
        %v2066 = vsel %vm893, %v1779, 0
        %v2069 = vsel %vm893, %v1784, 0
        %v2072 = vsel %vm893, %v1789, 0
        %v2075 = vsel %vm893, %v1794, 0
        %v2078 = vsel %vm893, %v1799, 0
        %v2081 = vsel %vm893, %v1804, 0
        %v2084 = vsel %vm893, %v1809, 0
        %2086 = vmatprep.subr.mxu0 0.0
        %2087 = vmatpush1.xpose.msra.mxu0 %v2039
        %2088 = vmatprep.subr.mxu0 0.0
        %2089 = vmatpush1.xpose.msra.mxu0 %v2042
        %2090 = vmatprep.subr.mxu0 0.0
        %2091 = vmatpush1.xpose.msra.mxu0 %v2045
        %2092 = vmatprep.subr.mxu0 0.0
        %2093 = vmatpush1.xpose.msra.mxu0 %v2048
        %2094 = vmatprep.subr.mxu0 0.0
        %2095 = vmatpush1.xpose.msra.mxu0 %v2051
        %2096 = vmatprep.subr.mxu0 0.0
        %2097 = vmatpush1.xpose.msra.mxu0 %v2054
        %2098 = vmatprep.subr.mxu0 0.0
        %2099 = vmatpush1.xpose.msra.mxu0 %v2057
        %2100 = vmatprep.subr.mxu0 0.0
        %2101 = vmatpush1.xpose.msra.mxu0 %v2060
        %2102 = vmatprep.subr.mxu0 0.0
        %2103 = vmatpush1.xpose.msra.mxu0 %v2063
        %2104 = vmatprep.subr.mxu0 0.0
        %2105 = vmatpush1.xpose.msra.mxu0 %v2066
        %2106 = vmatprep.subr.mxu0 0.0
        %2107 = vmatpush1.xpose.msra.mxu0 %v2069
        %2108 = vmatprep.subr.mxu0 0.0
        %2109 = vmatpush1.xpose.msra.mxu0 %v2072
        %2110 = vmatprep.subr.mxu0 0.0
        %2111 = vmatpush1.xpose.msra.mxu0 %v2075
        %2112 = vmatprep.subr.mxu0 0.0
        %2113 = vmatpush1.xpose.msra.mxu0 %v2078
        %2114 = vmatprep.subr.mxu0 0.0
        %2115 = vmatpush1.xpose.msra.mxu0 %v2081
        %2116 = vmatprep.subr.mxu0 0.0
        %2117 = vmatpush1.xpose.msra.mxu0 %v2084
        %2118 = vmatprep.subr.mxu0 0.0
        %2119 = vmatpush1.xpose.msra.mxu0 0.0
        %2120 = vmatprep.subr.mxu0 0.0
        %2121 = vmatpush1.xpose.msra.mxu0 0.0
        %2122 = vmatprep.subr.mxu0 0.0
        %2123 = vmatpush1.xpose.msra.mxu0 0.0
        %2124 = vmatprep.subr.mxu0 0.0
        %2125 = vmatpush1.xpose.msra.mxu0 0.0
        %2126 = vmatprep.subr.mxu0 0.0
        %2127 = vmatpush1.xpose.msra.mxu0 0.0
        %2128 = vmatprep.subr.mxu0 0.0
        %2129 = vmatpush1.xpose.msra.mxu0 0.0
        %2130 = vmatprep.subr.mxu0 0.0
        %2131 = vmatpush1.xpose.msra.mxu0 0.0
        %2132 = vmatprep.subr.mxu0 0.0
        %2133 = vmatpush1.xpose.msra.mxu0 0.0
        %2134 = vmatprep.subr.mxu0 0.0
        %2135 = vmatpush1.xpose.msra.mxu0 0.0
        %2136 = vmatprep.subr.mxu0 0.0
        %2137 = vmatpush1.xpose.msra.mxu0 0.0
        %2138 = vmatprep.subr.mxu0 0.0
        %2139 = vmatpush1.xpose.msra.mxu0 0.0
        %2140 = vmatprep.subr.mxu0 0.0
        %2141 = vmatpush1.xpose.msra.mxu0 0.0
        %2142 = vmatprep.subr.mxu0 0.0
        %2143 = vmatpush1.xpose.msra.mxu0 0.0
        %2144 = vmatprep.subr.mxu0 0.0
        %2145 = vmatpush1.xpose.msra.mxu0 0.0
        %2146 = vmatprep.subr.mxu0 0.0
        %2147 = vmatpush1.xpose.msra.mxu0 0.0
        %2148 = vmatprep.subr.mxu0 0.0
        %2149 = vmatpush1.xpose.msra.mxu0 0.0
        %2150 = vmatprep.mubr.f32.mxu0 0.0
        %2151 = vmatmul.mubr.f32.gmra.mrb[0].mxu0 %v1991
        %v2152 = vpop.f32.mrb[0].mxu0
        %v2153 = vadd.f32 0.0, %v2152
        %v2154 = vpop.f32.mrb[0].mxu0
        %2155 = vmatprep.mubr.f32.mxu0 0.0
        %2156 = vmatmul.mubr.f32.gmra.mrb[0].mxu0 %v1994
        %v2157 = vpop.f32.mrb[0].mxu0
        %v2158 = vadd.f32 0.0, %v2157
        %v2159 = vpop.f32.mrb[0].mxu0
        %2160 = vmatprep.mubr.f32.mxu0 0.0
        %2161 = vmatmul.mubr.f32.gmra.mrb[0].mxu0 %v1997
        %v2162 = vpop.f32.mrb[0].mxu0
        %v2163 = vadd.f32 0.0, %v2162
        %v2164 = vpop.f32.mrb[0].mxu0
        %2165 = vmatprep.mubr.f32.mxu0 0.0
        %2166 = vmatmul.mubr.f32.gmra.mrb[0].mxu0 %v2000
        %v2167 = vpop.f32.mrb[0].mxu0
        %v2168 = vadd.f32 0.0, %v2167
        %v2169 = vpop.f32.mrb[0].mxu0
        %2170 = vmatprep.mubr.f32.mxu0 0.0
        %2171 = vmatmul.mubr.f32.gmra.mrb[0].mxu0 %v2003
        %v2172 = vpop.f32.mrb[0].mxu0
        %v2173 = vadd.f32 0.0, %v2172
        %v2174 = vpop.f32.mrb[0].mxu0
        %2175 = vmatprep.mubr.f32.mxu0 0.0
        %2176 = vmatmul.mubr.f32.gmra.mrb[0].mxu0 %v2006
        %v2177 = vpop.f32.mrb[0].mxu0
        %v2178 = vadd.f32 0.0, %v2177
        %v2179 = vpop.f32.mrb[0].mxu0
        %2180 = vmatprep.mubr.f32.mxu0 0.0
        %2181 = vmatmul.mubr.f32.gmra.mrb[0].mxu0 %v2009
        %v2182 = vpop.f32.mrb[0].mxu0
        %v2183 = vadd.f32 0.0, %v2182
        %v2184 = vpop.f32.mrb[0].mxu0
        %2185 = vmatprep.mubr.f32.mxu0 0.0
        %2186 = vmatmul.mubr.f32.gmra.mrb[0].mxu0 %v2012
        %v2187 = vpop.f32.mrb[0].mxu0
        %v2188 = vadd.f32 0.0, %v2187
        %v2189 = vpop.f32.mrb[0].mxu0
        %2190 = vmatprep.mubr.f32.mxu0 0.0
        %2191 = vmatmul.mubr.f32.gmra.mrb[0].mxu0 %v2015
        %v2192 = vpop.f32.mrb[0].mxu0
        %v2193 = vadd.f32 0.0, %v2192
        %v2194 = vpop.f32.mrb[0].mxu0
        %2195 = vmatprep.mubr.f32.mxu0 0.0
        %2196 = vmatmul.mubr.f32.gmra.mrb[0].mxu0 %v2018
        %v2197 = vpop.f32.mrb[0].mxu0
        %v2198 = vadd.f32 0.0, %v2197
        %v2199 = vpop.f32.mrb[0].mxu0
        %2200 = vmatprep.mubr.f32.mxu0 0.0
        %2201 = vmatmul.mubr.f32.gmra.mrb[0].mxu0 %v2021
        %v2202 = vpop.f32.mrb[0].mxu0
        %v2203 = vadd.f32 0.0, %v2202
        %v2204 = vpop.f32.mrb[0].mxu0
        %2205 = vmatprep.mubr.f32.mxu0 0.0
        %2206 = vmatmul.mubr.f32.gmra.mrb[0].mxu0 %v2024
        %v2207 = vpop.f32.mrb[0].mxu0
        %v2208 = vadd.f32 0.0, %v2207
        %v2209 = vpop.f32.mrb[0].mxu0
        %2210 = vmatprep.mubr.f32.mxu0 0.0
        %2211 = vmatmul.mubr.f32.gmra.mrb[0].mxu0 %v2027
        %v2212 = vpop.f32.mrb[0].mxu0
        %v2213 = vadd.f32 0.0, %v2212
        %v2214 = vpop.f32.mrb[0].mxu0
        %2215 = vmatprep.mubr.f32.mxu0 0.0
        %2216 = vmatmul.mubr.f32.gmra.mrb[0].mxu0 %v2030
        %v2217 = vpop.f32.mrb[0].mxu0
        %v2218 = vadd.f32 0.0, %v2217
        %v2219 = vpop.f32.mrb[0].mxu0
        %2220 = vmatprep.mubr.f32.mxu0 0.0
        %2221 = vmatmul.mubr.f32.gmra.mrb[0].mxu0 %v2033
        %v2222 = vpop.f32.mrb[0].mxu0
        %v2223 = vadd.f32 0.0, %v2222
        %v2224 = vpop.f32.mrb[0].mxu0
        %2225 = vmatprep.mubr.f32.mxu0 0.0
        %2226 = vmatmul.mubr.f32.gmra.mrb[0].mxu0 %v2036
        %v2227 = vpop.f32.mrb[0].mxu0
        %v2228 = vadd.f32 0.0, %v2227
        %v2229 = vpop.f32.mrb[0].mxu0
        %2230 = vdwg.mxu0
        %2231 = vmax.xlane.f32.xlu0 %v2153
        %v2232 = vpop.xlane.xlu0 %2231
        %2233 = vmax.xlane.f32.xlu0 %v2158
        %v2234 = vpop.xlane.xlu0 %2233
        %2235 = vmax.xlane.f32.xlu0 %v2163
        %v2236 = vpop.xlane.xlu0 %2235
        %2237 = vmax.xlane.f32.xlu0 %v2168
        %v2238 = vpop.xlane.xlu0 %2237
        %2239 = vmax.xlane.f32.xlu0 %v2173
        %v2240 = vpop.xlane.xlu0 %2239
        %2241 = vmax.xlane.f32.xlu0 %v2178
        %v2242 = vpop.xlane.xlu0 %2241
        %2243 = vmax.xlane.f32.xlu0 %v2183
        %v2244 = vpop.xlane.xlu0 %2243
        %2245 = vmax.xlane.f32.xlu0 %v2188
        %v2246 = vpop.xlane.xlu0 %2245
        %2247 = vmax.xlane.f32.xlu0 %v2193
        %v2248 = vpop.xlane.xlu0 %2247
        %2249 = vmax.xlane.f32.xlu0 %v2198
        %v2250 = vpop.xlane.xlu0 %2249
        %2251 = vmax.xlane.f32.xlu0 %v2203
        %v2252 = vpop.xlane.xlu0 %2251
        %2253 = vmax.xlane.f32.xlu0 %v2208
        %v2254 = vpop.xlane.xlu0 %2253
        %2255 = vmax.xlane.f32.xlu0 %v2213
        %v2256 = vpop.xlane.xlu0 %2255
        %2257 = vmax.xlane.f32.xlu0 %v2218
        %v2258 = vpop.xlane.xlu0 %2257
        %2259 = vmax.xlane.f32.xlu0 %v2223
        %v2260 = vpop.xlane.xlu0 %2259
        %2261 = vmax.xlane.f32.xlu0 %v2228
        %v2262 = vpop.xlane.xlu0 %2261
        %v2263 = vsub.f32 %v2153, %v2232
        %v2264 = vsub.f32 %v2158, %v2234
        %v2265 = vsub.f32 %v2163, %v2236
        %v2266 = vsub.f32 %v2168, %v2238
        %v2267 = vsub.f32 %v2173, %v2240
        %v2268 = vsub.f32 %v2178, %v2242
        %v2269 = vsub.f32 %v2183, %v2244
        %v2270 = vsub.f32 %v2188, %v2246
        %v2271 = vsub.f32 %v2193, %v2248
        %v2272 = vsub.f32 %v2198, %v2250
        %v2273 = vsub.f32 %v2203, %v2252
        %v2274 = vsub.f32 %v2208, %v2254
        %v2275 = vsub.f32 %v2213, %v2256
        %v2276 = vsub.f32 %v2218, %v2258
        %v2277 = vsub.f32 %v2223, %v2260
        %v2278 = vsub.f32 %v2228, %v2262
        %v2279 = vmul.f32 %v2263, 1.442695
        %v2280 = vpow.pop %v2279
        %v2281 = vmul.f32 %v2264, 1.442695
        %v2282 = vpow.pop %v2281
        %v2283 = vmul.f32 %v2265, 1.442695
        %v2284 = vpow.pop %v2283
        %v2285 = vmul.f32 %v2266, 1.442695
        %v2286 = vpow.pop %v2285
        %v2287 = vmul.f32 %v2267, 1.442695
        %v2288 = vpow.pop %v2287
        %v2289 = vmul.f32 %v2268, 1.442695
        %v2290 = vpow.pop %v2289
        %v2291 = vmul.f32 %v2269, 1.442695
        %v2292 = vpow.pop %v2291
        %v2293 = vmul.f32 %v2270, 1.442695
        %v2294 = vpow.pop %v2293
        %v2295 = vmul.f32 %v2271, 1.442695
        %v2296 = vpow.pop %v2295
        %v2297 = vmul.f32 %v2272, 1.442695
        %v2298 = vpow.pop %v2297
        %v2299 = vmul.f32 %v2273, 1.442695
        %v2300 = vpow.pop %v2299
        %v2301 = vmul.f32 %v2274, 1.442695
        %v2302 = vpow.pop %v2301
        %v2303 = vmul.f32 %v2275, 1.442695
        %v2304 = vpow.pop %v2303
        %v2305 = vmul.f32 %v2276, 1.442695
        %v2306 = vpow.pop %v2305
        %v2307 = vmul.f32 %v2277, 1.442695
        %v2308 = vpow.pop %v2307
        %v2309 = vmul.f32 %v2278, 1.442695
        %v2310 = vpow.pop %v2309
        %2311 = vadd.xlane.f32.xlu0 %v2280
        %v2312 = vpop.xlane.xlu0 %2311
        %2313 = vadd.xlane.f32.xlu0 %v2282
        %v2314 = vpop.xlane.xlu0 %2313
        %2315 = vadd.xlane.f32.xlu0 %v2284
        %v2316 = vpop.xlane.xlu0 %2315
        %2317 = vadd.xlane.f32.xlu0 %v2286
        %v2318 = vpop.xlane.xlu0 %2317
        %2319 = vadd.xlane.f32.xlu0 %v2288
        %v2320 = vpop.xlane.xlu0 %2319
        %2321 = vadd.xlane.f32.xlu0 %v2290
        %v2322 = vpop.xlane.xlu0 %2321
        %2323 = vadd.xlane.f32.xlu0 %v2292
        %v2324 = vpop.xlane.xlu0 %2323
        %2325 = vadd.xlane.f32.xlu0 %v2294
        %v2326 = vpop.xlane.xlu0 %2325
        %2327 = vadd.xlane.f32.xlu0 %v2296
        %v2328 = vpop.xlane.xlu0 %2327
        %2329 = vadd.xlane.f32.xlu0 %v2298
        %v2330 = vpop.xlane.xlu0 %2329
        %2331 = vadd.xlane.f32.xlu0 %v2300
        %v2332 = vpop.xlane.xlu0 %2331
        %2333 = vadd.xlane.f32.xlu0 %v2302
        %v2334 = vpop.xlane.xlu0 %2333
        %2335 = vadd.xlane.f32.xlu0 %v2304
        %v2336 = vpop.xlane.xlu0 %2335
        %2337 = vadd.xlane.f32.xlu0 %v2306
        %v2338 = vpop.xlane.xlu0 %2337
        %2339 = vadd.xlane.f32.xlu0 %v2308
        %v2340 = vpop.xlane.xlu0 %2339
        %2341 = vadd.xlane.f32.xlu0 %v2310
        %v2342 = vpop.xlane.xlu0 %2341
        %v2343 = vrcp.pop %v2312
        %v2344 = vmul.f32 1.0, %v2343
        %v2345 = vrcp.pop %v2314
        %v2346 = vmul.f32 1.0, %v2345
        %v2347 = vrcp.pop %v2316
        %v2348 = vmul.f32 1.0, %v2347
        %v2349 = vrcp.pop %v2318
        %v2350 = vmul.f32 1.0, %v2349
        %v2351 = vrcp.pop %v2320
        %v2352 = vmul.f32 1.0, %v2351
        %v2353 = vrcp.pop %v2322
        %v2354 = vmul.f32 1.0, %v2353
        %v2355 = vrcp.pop %v2324
        %v2356 = vmul.f32 1.0, %v2355
        %v2357 = vrcp.pop %v2326
        %v2358 = vmul.f32 1.0, %v2357
        %v2359 = vrcp.pop %v2328
        %v2360 = vmul.f32 1.0, %v2359
        %v2361 = vrcp.pop %v2330
        %v2362 = vmul.f32 1.0, %v2361
        %v2363 = vrcp.pop %v2332
        %v2364 = vmul.f32 1.0, %v2363
        %v2365 = vrcp.pop %v2334
        %v2366 = vmul.f32 1.0, %v2365
        %v2367 = vrcp.pop %v2336
        %v2368 = vmul.f32 1.0, %v2367
        %v2369 = vrcp.pop %v2338
        %v2370 = vmul.f32 1.0, %v2369
        %v2371 = vrcp.pop %v2340
        %v2372 = vmul.f32 1.0, %v2371
        %v2373 = vrcp.pop %v2342
        %v2374 = vmul.f32 1.0, %v2373
        %v2375 = vmul.f32 %v2280, %v2344
        %v2376 = vmul.f32 %v2282, %v2346
        %v2377 = vmul.f32 %v2284, %v2348
        %v2378 = vmul.f32 %v2286, %v2350
        %v2379 = vmul.f32 %v2288, %v2352
        %v2380 = vmul.f32 %v2290, %v2354
        %v2381 = vmul.f32 %v2292, %v2356
        %v2382 = vmul.f32 %v2294, %v2358
        %v2383 = vmul.f32 %v2296, %v2360
        %v2384 = vmul.f32 %v2298, %v2362
        %v2385 = vmul.f32 %v2300, %v2364
        %v2386 = vmul.f32 %v2302, %v2366
        %v2387 = vmul.f32 %v2304, %v2368
        %v2388 = vmul.f32 %v2306, %v2370
        %v2389 = vmul.f32 %v2308, %v2372
        %v2390 = vmul.f32 %v2310, %v2374
        %s2391 = scalar_lea.vmem %s300, 128 [#allocation5]
        %2392 = vst [vmem:[%s2391] sm:$0xff] %v2375
        %2393 = vst [vmem:[%s2391 + $0x8] sm:$0xff] %v2376
        %2394 = vst [vmem:[%s2391 + $0x10] sm:$0xff] %v2377
        %2395 = vst [vmem:[%s2391 + $0x18] sm:$0xff] %v2378
        %2396 = vst [vmem:[%s2391 + $0x20] sm:$0xff] %v2379
        %2397 = vst [vmem:[%s2391 + $0x28] sm:$0xff] %v2380
        %2398 = vst [vmem:[%s2391 + $0x30] sm:$0xff] %v2381
        %2399 = vst [vmem:[%s2391 + $0x38] sm:$0xff] %v2382
        %2400 = vst [vmem:[%s2391 + $0x40] sm:$0xff] %v2383
        %2401 = vst [vmem:[%s2391 + $0x48] sm:$0xff] %v2384
        %2402 = vst [vmem:[%s2391 + $0x50] sm:$0xff] %v2385
        %2403 = vst [vmem:[%s2391 + $0x58] sm:$0xff] %v2386
        %2404 = vst [vmem:[%s2391 + $0x60] sm:$0xff] %v2387
        %2405 = vst [vmem:[%s2391 + $0x68] sm:$0xff] %v2388
        %2406 = vst [vmem:[%s2391 + $0x70] sm:$0xff] %v2389
        %2407 = vst [vmem:[%s2391 + $0x78] sm:$0xff] %v2390
        %2408 = vmatprep.subr.mxu0 0.0
        %2409 = vmatpush1.msra.mxu0 %v1912
        %2410 = vmatprep.subr.mxu0 0.0
        %2411 = vmatpush1.msra.mxu0 %v1917
        %2412 = vmatprep.subr.mxu0 0.0
        %2413 = vmatpush1.msra.mxu0 %v1922
        %2414 = vmatprep.subr.mxu0 0.0
        %2415 = vmatpush1.msra.mxu0 %v1927
        %2416 = vmatprep.subr.mxu0 0.0
        %2417 = vmatpush1.msra.mxu0 %v1932
        %2418 = vmatprep.subr.mxu0 0.0
        %2419 = vmatpush1.msra.mxu0 %v1937
        %2420 = vmatprep.subr.mxu0 0.0
        %2421 = vmatpush1.msra.mxu0 %v1942
        %2422 = vmatprep.subr.mxu0 0.0
        %2423 = vmatpush1.msra.mxu0 %v1947
        %2424 = vmatprep.subr.mxu0 0.0
        %2425 = vmatpush1.msra.mxu0 %v1952
        %2426 = vmatprep.subr.mxu0 0.0
        %2427 = vmatpush1.msra.mxu0 %v1957
        %2428 = vmatprep.subr.mxu0 0.0
        %2429 = vmatpush1.msra.mxu0 %v1962
        %2430 = vmatprep.subr.mxu0 0.0
        %2431 = vmatpush1.msra.mxu0 %v1967
        %2432 = vmatprep.subr.mxu0 0.0
        %2433 = vmatpush1.msra.mxu0 %v1972
        %2434 = vmatprep.subr.mxu0 0.0
        %2435 = vmatpush1.msra.mxu0 %v1977
        %2436 = vmatprep.subr.mxu0 0.0
        %2437 = vmatpush1.msra.mxu0 %v1982
        %2438 = vmatprep.subr.mxu0 0.0
        %2439 = vmatpush1.msra.mxu0 %v1987
        %2440 = vmatprep.subr.mxu0 0.0
        %2441 = vmatpush1.msra.mxu0 0.0
        %2442 = vmatprep.subr.mxu0 0.0
        %2443 = vmatpush1.msra.mxu0 0.0
        %2444 = vmatprep.subr.mxu0 0.0
        %2445 = vmatpush1.msra.mxu0 0.0
        %2446 = vmatprep.subr.mxu0 0.0
        %2447 = vmatpush1.msra.mxu0 0.0
        %2448 = vmatprep.subr.mxu0 0.0
        %2449 = vmatpush1.msra.mxu0 0.0
        %2450 = vmatprep.subr.mxu0 0.0
        %2451 = vmatpush1.msra.mxu0 0.0
        %2452 = vmatprep.subr.mxu0 0.0
        %2453 = vmatpush1.msra.mxu0 0.0
        %2454 = vmatprep.subr.mxu0 0.0
        %2455 = vmatpush1.msra.mxu0 0.0
        %2456 = vmatprep.subr.mxu0 0.0
        %2457 = vmatpush1.msra.mxu0 0.0
        %2458 = vmatprep.subr.mxu0 0.0
        %2459 = vmatpush1.msra.mxu0 0.0
        %2460 = vmatprep.subr.mxu0 0.0
        %2461 = vmatpush1.msra.mxu0 0.0
        %2462 = vmatprep.subr.mxu0 0.0
        %2463 = vmatpush1.msra.mxu0 0.0
        %2464 = vmatprep.subr.mxu0 0.0
        %2465 = vmatpush1.msra.mxu0 0.0
        %2466 = vmatprep.subr.mxu0 0.0
        %2467 = vmatpush1.msra.mxu0 0.0
        %2468 = vmatprep.subr.mxu0 0.0
        %2469 = vmatpush1.msra.mxu0 0.0
        %2470 = vmatprep.subr.mxu0 0.0
        %2471 = vmatpush1.msra.mxu0 0.0
        %2472 = vmatprep.mubr.f32.mxu0 0.0
        %2473 = vmatmul.mubr.f32.gmra.mrb[0].mxu0 %v2375
        %v2474 = vpop.f32.mrb[0].mxu0
        %v2475 = vadd.f32 0.0, %v2474
        %v2476 = vpop.f32.mrb[0].mxu0
        %2477 = vmatprep.mubr.f32.mxu0 0.0
        %2478 = vmatmul.mubr.f32.gmra.mrb[0].mxu0 %v2376
        %v2479 = vpop.f32.mrb[0].mxu0
        %v2480 = vadd.f32 0.0, %v2479
        %v2481 = vpop.f32.mrb[0].mxu0
        %2482 = vmatprep.mubr.f32.mxu0 0.0
        %2483 = vmatmul.mubr.f32.gmra.mrb[0].mxu0 %v2377
        %v2484 = vpop.f32.mrb[0].mxu0
        %v2485 = vadd.f32 0.0, %v2484
        %v2486 = vpop.f32.mrb[0].mxu0
        %2487 = vmatprep.mubr.f32.mxu0 0.0
        %2488 = vmatmul.mubr.f32.gmra.mrb[0].mxu0 %v2378
        %v2489 = vpop.f32.mrb[0].mxu0
        %v2490 = vadd.f32 0.0, %v2489
        %v2491 = vpop.f32.mrb[0].mxu0
        %2492 = vmatprep.mubr.f32.mxu0 0.0
        %2493 = vmatmul.mubr.f32.gmra.mrb[0].mxu0 %v2379
        %v2494 = vpop.f32.mrb[0].mxu0
        %v2495 = vadd.f32 0.0, %v2494
        %v2496 = vpop.f32.mrb[0].mxu0
        %2497 = vmatprep.mubr.f32.mxu0 0.0
        %2498 = vmatmul.mubr.f32.gmra.mrb[0].mxu0 %v2380
        %v2499 = vpop.f32.mrb[0].mxu0
        %v2500 = vadd.f32 0.0, %v2499
        %v2501 = vpop.f32.mrb[0].mxu0
        %2502 = vmatprep.mubr.f32.mxu0 0.0
        %2503 = vmatmul.mubr.f32.gmra.mrb[0].mxu0 %v2381
        %v2504 = vpop.f32.mrb[0].mxu0
        %v2505 = vadd.f32 0.0, %v2504
        %v2506 = vpop.f32.mrb[0].mxu0
        %2507 = vmatprep.mubr.f32.mxu0 0.0
        %2508 = vmatmul.mubr.f32.gmra.mrb[0].mxu0 %v2382
        %v2509 = vpop.f32.mrb[0].mxu0
        %v2510 = vadd.f32 0.0, %v2509
        %v2511 = vpop.f32.mrb[0].mxu0
        %2512 = vmatprep.mubr.f32.mxu0 0.0
        %2513 = vmatmul.mubr.f32.gmra.mrb[0].mxu0 %v2383
        %v2514 = vpop.f32.mrb[0].mxu0
        %v2515 = vadd.f32 0.0, %v2514
        %v2516 = vpop.f32.mrb[0].mxu0
        %2517 = vmatprep.mubr.f32.mxu0 0.0
        %2518 = vmatmul.mubr.f32.gmra.mrb[0].mxu0 %v2384
        %v2519 = vpop.f32.mrb[0].mxu0
        %v2520 = vadd.f32 0.0, %v2519
        %v2521 = vpop.f32.mrb[0].mxu0
        %2522 = vmatprep.mubr.f32.mxu0 0.0
        %2523 = vmatmul.mubr.f32.gmra.mrb[0].mxu0 %v2385
        %v2524 = vpop.f32.mrb[0].mxu0
        %v2525 = vadd.f32 0.0, %v2524
        %v2526 = vpop.f32.mrb[0].mxu0
        %2527 = vmatprep.mubr.f32.mxu0 0.0
        %2528 = vmatmul.mubr.f32.gmra.mrb[0].mxu0 %v2386
        %v2529 = vpop.f32.mrb[0].mxu0
        %v2530 = vadd.f32 0.0, %v2529
        %v2531 = vpop.f32.mrb[0].mxu0
        %2532 = vmatprep.mubr.f32.mxu0 0.0
        %2533 = vmatmul.mubr.f32.gmra.mrb[0].mxu0 %v2387
        %v2534 = vpop.f32.mrb[0].mxu0
        %v2535 = vadd.f32 0.0, %v2534
        %v2536 = vpop.f32.mrb[0].mxu0
        %2537 = vmatprep.mubr.f32.mxu0 0.0
        %2538 = vmatmul.mubr.f32.gmra.mrb[0].mxu0 %v2388
        %v2539 = vpop.f32.mrb[0].mxu0
        %v2540 = vadd.f32 0.0, %v2539
        %v2541 = vpop.f32.mrb[0].mxu0
        %2542 = vmatprep.mubr.f32.mxu0 0.0
        %2543 = vmatmul.mubr.f32.gmra.mrb[0].mxu0 %v2389
        %v2544 = vpop.f32.mrb[0].mxu0
        %v2545 = vadd.f32 0.0, %v2544
        %v2546 = vpop.f32.mrb[0].mxu0
        %2547 = vmatprep.mubr.f32.mxu0 0.0
        %2548 = vmatmul.mubr.f32.gmra.mrb[0].mxu0 %v2390
        %v2549 = vpop.f32.mrb[0].mxu0
        %v2550 = vadd.f32 0.0, %v2549
        %v2551 = vpop.f32.mrb[0].mxu0
        %2552 = vdwg.mxu0
        %2569 = vrot.lane.b32.xlu0 %v2475, 32
        %v2570 = vpop.permute.xlu0 %2569
        %2571 = vrot.lane.b32.xlu0 %v2480, 32
        %v2572 = vpop.permute.xlu0 %2571
        %2573 = vrot.lane.b32.xlu0 %v2485, 32
        %v2574 = vpop.permute.xlu0 %2573
        %2575 = vrot.lane.b32.xlu0 %v2490, 32
        %v2576 = vpop.permute.xlu0 %2575
        %2577 = vrot.lane.b32.xlu0 %v2495, 32
        %v2578 = vpop.permute.xlu0 %2577
        %2579 = vrot.lane.b32.xlu0 %v2500, 32
        %v2580 = vpop.permute.xlu0 %2579
        %2581 = vrot.lane.b32.xlu0 %v2505, 32
        %v2582 = vpop.permute.xlu0 %2581
        %2583 = vrot.lane.b32.xlu0 %v2510, 32
        %v2584 = vpop.permute.xlu0 %2583
        %2585 = vrot.lane.b32.xlu0 %v2515, 32
        %v2586 = vpop.permute.xlu0 %2585
        %2587 = vrot.lane.b32.xlu0 %v2520, 32
        %v2588 = vpop.permute.xlu0 %2587
        %2589 = vrot.lane.b32.xlu0 %v2525, 32
        %v2590 = vpop.permute.xlu0 %2589
        %2591 = vrot.lane.b32.xlu0 %v2530, 32
        %v2592 = vpop.permute.xlu0 %2591
        %2593 = vrot.lane.b32.xlu0 %v2535, 32
        %v2594 = vpop.permute.xlu0 %2593
        %2595 = vrot.lane.b32.xlu0 %v2540, 32
        %v2596 = vpop.permute.xlu0 %2595
        %2597 = vrot.lane.b32.xlu0 %v2545, 32
        %v2598 = vpop.permute.xlu0 %2597
        %2599 = vrot.lane.b32.xlu0 %v2550, 32
        %v2600 = vpop.permute.xlu0 %2599
        %v2617 = vsel %vm893, %v1378, %v2570
        %v2618 = vsel %vm893, %v1383, %v2572
        %v2619 = vsel %vm893, %v1388, %v2574
        %v2620 = vsel %vm893, %v1393, %v2576
        %v2621 = vsel %vm893, %v1398, %v2578
        %v2622 = vsel %vm893, %v1403, %v2580
        %v2623 = vsel %vm893, %v1408, %v2582
        %v2624 = vsel %vm893, %v1413, %v2584
        %v2625 = vsel %vm893, %v1418, %v2586
        %v2626 = vsel %vm893, %v1423, %v2588
        %v2627 = vsel %vm893, %v1428, %v2590
        %v2628 = vsel %vm893, %v1433, %v2592
        %v2629 = vsel %vm893, %v1438, %v2594
        %v2630 = vsel %vm893, %v1443, %v2596
        %v2631 = vsel %vm893, %v1448, %v2598
        %v2632 = vsel %vm893, %v1453, %v2600
        %v2633 = vld [vmem:[%s327] sm:$0xff]
        %v2634 = vld [vmem:[%s327 + $0x8] sm:$0xff]
        %v2635 = vld [vmem:[%s327 + $0x10] sm:$0xff]
        %v2636 = vld [vmem:[%s327 + $0x18] sm:$0xff]
        %v2637 = vld [vmem:[%s327 + $0x20] sm:$0xff]
        %v2638 = vld [vmem:[%s327 + $0x28] sm:$0xff]
        %v2639 = vld [vmem:[%s327 + $0x30] sm:$0xff]
        %v2640 = vld [vmem:[%s327 + $0x38] sm:$0xff]
        %v2641 = vld [vmem:[%s327 + $0x40] sm:$0xff]
        %v2642 = vld [vmem:[%s327 + $0x48] sm:$0xff]
        %v2643 = vld [vmem:[%s327 + $0x50] sm:$0xff]
        %v2644 = vld [vmem:[%s327 + $0x58] sm:$0xff]
        %v2645 = vld [vmem:[%s327 + $0x60] sm:$0xff]
        %v2646 = vld [vmem:[%s327 + $0x68] sm:$0xff]
        %v2647 = vld [vmem:[%s327 + $0x70] sm:$0xff]
        %v2648 = vld [vmem:[%s327 + $0x78] sm:$0xff]
        %vm2649 = vcmask 523264
        %v2651 = vsel %vm2649, %v2617, 0
        %v2654 = vsel %vm2649, %v2618, 0
        %v2657 = vsel %vm2649, %v2619, 0
        %v2660 = vsel %vm2649, %v2620, 0
        %v2663 = vsel %vm2649, %v2621, 0
        %v2666 = vsel %vm2649, %v2622, 0
        %v2669 = vsel %vm2649, %v2623, 0
        %v2672 = vsel %vm2649, %v2624, 0
        %v2675 = vsel %vm2649, %v2625, 0
        %v2678 = vsel %vm2649, %v2626, 0
        %v2681 = vsel %vm2649, %v2627, 0
        %v2684 = vsel %vm2649, %v2628, 0
        %v2687 = vsel %vm2649, %v2629, 0
        %v2690 = vsel %vm2649, %v2630, 0
        %v2693 = vsel %vm2649, %v2631, 0
        %v2696 = vsel %vm2649, %v2632, 0
        %2698 = vmatprep.subr.mxu0 %v2634
        %2699 = vmatpush1.msra.mxu0 %v2633
        %2700 = vmatprep.subr.mxu0 %v2636
        %2701 = vmatpush1.msra.mxu0 %v2635
        %2702 = vmatprep.subr.mxu0 %v2638
        %2703 = vmatpush1.msra.mxu0 %v2637
        %2704 = vmatprep.subr.mxu0 %v2640
        %2705 = vmatpush1.msra.mxu0 %v2639
        %2706 = vmatprep.subr.mxu0 %v2642
        %2707 = vmatpush1.msra.mxu0 %v2641
        %2708 = vmatprep.subr.mxu0 %v2644
        %2709 = vmatpush1.msra.mxu0 %v2643
        %2710 = vmatprep.subr.mxu0 %v2646
        %2711 = vmatpush1.msra.mxu0 %v2645
        %2712 = vmatprep.subr.mxu0 %v2648
        %2713 = vmatpush1.msra.mxu0 %v2647
        %2714 = vmatprep.subr.mxu0 0.0
        %2715 = vmatpush1.msra.mxu0 0.0
        %2716 = vmatprep.subr.mxu0 0.0
        %2717 = vmatpush1.msra.mxu0 0.0
        %2718 = vmatprep.subr.mxu0 0.0
        %2719 = vmatpush1.msra.mxu0 0.0
        %2720 = vmatprep.subr.mxu0 0.0
        %2721 = vmatpush1.msra.mxu0 0.0
        %2722 = vmatprep.subr.mxu0 0.0
        %2723 = vmatpush1.msra.mxu0 0.0
        %2724 = vmatprep.subr.mxu0 0.0
        %2725 = vmatpush1.msra.mxu0 0.0
        %2726 = vmatprep.subr.mxu0 0.0
        %2727 = vmatpush1.msra.mxu0 0.0
        %2728 = vmatprep.subr.mxu0 0.0
        %2729 = vmatpush1.msra.mxu0 0.0
        %2730 = vmatprep.subr.mxu0 0.0
        %2731 = vmatpush1.msra.mxu0 0.0
        %2732 = vmatprep.subr.mxu0 0.0
        %2733 = vmatpush1.msra.mxu0 0.0
        %2734 = vmatprep.subr.mxu0 0.0
        %2735 = vmatpush1.msra.mxu0 0.0
        %2736 = vmatprep.subr.mxu0 0.0
        %2737 = vmatpush1.msra.mxu0 0.0
        %2738 = vmatprep.subr.mxu0 0.0
        %2739 = vmatpush1.msra.mxu0 0.0
        %2740 = vmatprep.subr.mxu0 0.0
        %2741 = vmatpush1.msra.mxu0 0.0
        %2742 = vmatprep.subr.mxu0 0.0
        %2743 = vmatpush1.msra.mxu0 0.0
        %2744 = vmatprep.subr.mxu0 0.0
        %2745 = vmatpush1.msra.mxu0 0.0
        %2746 = vmatprep.subr.mxu0 0.0
        %2747 = vmatpush1.msra.mxu0 0.0
        %2748 = vmatprep.subr.mxu0 0.0
        %2749 = vmatpush1.msra.mxu0 0.0
        %2750 = vmatprep.subr.mxu0 0.0
        %2751 = vmatpush1.msra.mxu0 0.0
        %2752 = vmatprep.subr.mxu0 0.0
        %2753 = vmatpush1.msra.mxu0 0.0
        %2754 = vmatprep.subr.mxu0 0.0
        %2755 = vmatpush1.msra.mxu0 0.0
        %2756 = vmatprep.subr.mxu0 0.0
        %2757 = vmatpush1.msra.mxu0 0.0
        %2758 = vmatprep.subr.mxu0 0.0
        %2759 = vmatpush1.msra.mxu0 0.0
        %2760 = vmatprep.subr.mxu0 0.0
        %2761 = vmatpush1.msra.mxu0 0.0
        %2762 = vmatprep.mubr.f32.mxu0 0.0
        %2763 = vmatmul.mubr.f32.gmra.mrb[0].mxu0 %v2651
        %v2764 = vpop.f32.mrb[0].mxu0
        %v2765 = vadd.f32 0.0, %v2764
        %v2766 = vpop.f32.mrb[0].mxu0
        %v2767 = vadd.f32 0.0, %v2766
        %2768 = vmatprep.mubr.f32.mxu0 0.0
        %2769 = vmatmul.mubr.f32.gmra.mrb[0].mxu0 %v2654
        %v2770 = vpop.f32.mrb[0].mxu0
        %v2771 = vadd.f32 0.0, %v2770
        %v2772 = vpop.f32.mrb[0].mxu0
        %v2773 = vadd.f32 0.0, %v2772
        %2774 = vmatprep.mubr.f32.mxu0 0.0
        %2775 = vmatmul.mubr.f32.gmra.mrb[0].mxu0 %v2657
        %v2776 = vpop.f32.mrb[0].mxu0
        %v2777 = vadd.f32 0.0, %v2776
        %v2778 = vpop.f32.mrb[0].mxu0
        %v2779 = vadd.f32 0.0, %v2778
        %2780 = vmatprep.mubr.f32.mxu0 0.0
        %2781 = vmatmul.mubr.f32.gmra.mrb[0].mxu0 %v2660
        %v2782 = vpop.f32.mrb[0].mxu0
        %v2783 = vadd.f32 0.0, %v2782
        %v2784 = vpop.f32.mrb[0].mxu0
        %v2785 = vadd.f32 0.0, %v2784
        %2786 = vmatprep.mubr.f32.mxu0 0.0
        %2787 = vmatmul.mubr.f32.gmra.mrb[0].mxu0 %v2663
        %v2788 = vpop.f32.mrb[0].mxu0
        %v2789 = vadd.f32 0.0, %v2788
        %v2790 = vpop.f32.mrb[0].mxu0
        %v2791 = vadd.f32 0.0, %v2790
        %2792 = vmatprep.mubr.f32.mxu0 0.0
        %2793 = vmatmul.mubr.f32.gmra.mrb[0].mxu0 %v2666
        %v2794 = vpop.f32.mrb[0].mxu0
        %v2795 = vadd.f32 0.0, %v2794
        %v2796 = vpop.f32.mrb[0].mxu0
        %v2797 = vadd.f32 0.0, %v2796
        %2798 = vmatprep.mubr.f32.mxu0 0.0
        %2799 = vmatmul.mubr.f32.gmra.mrb[0].mxu0 %v2669
        %v2800 = vpop.f32.mrb[0].mxu0
        %v2801 = vadd.f32 0.0, %v2800
        %v2802 = vpop.f32.mrb[0].mxu0
        %v2803 = vadd.f32 0.0, %v2802
        %2804 = vmatprep.mubr.f32.mxu0 0.0
        %2805 = vmatmul.mubr.f32.gmra.mrb[0].mxu0 %v2672
        %v2806 = vpop.f32.mrb[0].mxu0
        %v2807 = vadd.f32 0.0, %v2806
        %v2808 = vpop.f32.mrb[0].mxu0
        %v2809 = vadd.f32 0.0, %v2808
        %2810 = vmatprep.mubr.f32.mxu0 0.0
        %2811 = vmatmul.mubr.f32.gmra.mrb[0].mxu0 %v2675
        %v2812 = vpop.f32.mrb[0].mxu0
        %v2813 = vadd.f32 0.0, %v2812
        %v2814 = vpop.f32.mrb[0].mxu0
        %v2815 = vadd.f32 0.0, %v2814
        %2816 = vmatprep.mubr.f32.mxu0 0.0
        %2817 = vmatmul.mubr.f32.gmra.mrb[0].mxu0 %v2678
        %v2818 = vpop.f32.mrb[0].mxu0
        %v2819 = vadd.f32 0.0, %v2818
        %v2820 = vpop.f32.mrb[0].mxu0
        %v2821 = vadd.f32 0.0, %v2820
        %2822 = vmatprep.mubr.f32.mxu0 0.0
        %2823 = vmatmul.mubr.f32.gmra.mrb[0].mxu0 %v2681
        %v2824 = vpop.f32.mrb[0].mxu0
        %v2825 = vadd.f32 0.0, %v2824
        %v2826 = vpop.f32.mrb[0].mxu0
        %v2827 = vadd.f32 0.0, %v2826
        %2828 = vmatprep.mubr.f32.mxu0 0.0
        %2829 = vmatmul.mubr.f32.gmra.mrb[0].mxu0 %v2684
        %v2830 = vpop.f32.mrb[0].mxu0
        %v2831 = vadd.f32 0.0, %v2830
        %v2832 = vpop.f32.mrb[0].mxu0
        %v2833 = vadd.f32 0.0, %v2832
        %2834 = vmatprep.mubr.f32.mxu0 0.0
        %2835 = vmatmul.mubr.f32.gmra.mrb[0].mxu0 %v2687
        %v2836 = vpop.f32.mrb[0].mxu0
        %v2837 = vadd.f32 0.0, %v2836
        %v2838 = vpop.f32.mrb[0].mxu0
        %v2839 = vadd.f32 0.0, %v2838
        %2840 = vmatprep.mubr.f32.mxu0 0.0
        %2841 = vmatmul.mubr.f32.gmra.mrb[0].mxu0 %v2690
        %v2842 = vpop.f32.mrb[0].mxu0
        %v2843 = vadd.f32 0.0, %v2842
        %v2844 = vpop.f32.mrb[0].mxu0
        %v2845 = vadd.f32 0.0, %v2844
        %2846 = vmatprep.mubr.f32.mxu0 0.0
        %2847 = vmatmul.mubr.f32.gmra.mrb[0].mxu0 %v2693
        %v2848 = vpop.f32.mrb[0].mxu0
        %v2849 = vadd.f32 0.0, %v2848
        %v2850 = vpop.f32.mrb[0].mxu0
        %v2851 = vadd.f32 0.0, %v2850
        %2852 = vmatprep.mubr.f32.mxu0 0.0
        %2853 = vmatmul.mubr.f32.gmra.mrb[0].mxu0 %v2696
        %v2854 = vpop.f32.mrb[0].mxu0
        %v2855 = vadd.f32 0.0, %v2854
        %v2856 = vpop.f32.mrb[0].mxu0
        %v2857 = vadd.f32 0.0, %v2856
        %2858 = vdwg.mxu0
        %p2859 = scmp.eq.s32.totalorder %s22, 0
        // Predicated region
        $region41: #{tpu_custom_call.1} parent=39 // pred_check
          %p2860 = pneg %p2859
        $region42: #{tpu_custom_call.1} parent=39 // pred_check_branch
          %2862 = sbr.rel (%p2860) target = $region44
        $region43: #{tpu_custom_call.1} parent=39 // pred_region
          %2863 = vst [vmem:[#allocation2] sm:$0xff] 0.0
          %2864 = vst [vmem:[#allocation2 + $0x8] sm:$0xff] 0.0
          %2865 = vst [vmem:[#allocation2 + $0x10] sm:$0xff] 0.0
          %2866 = vst [vmem:[#allocation2 + $0x18] sm:$0xff] 0.0
          %2867 = vst [vmem:[#allocation2 + $0x20] sm:$0xff] 0.0
          %2868 = vst [vmem:[#allocation2 + $0x28] sm:$0xff] 0.0
          %2869 = vst [vmem:[#allocation2 + $0x30] sm:$0xff] 0.0
          %2870 = vst [vmem:[#allocation2 + $0x38] sm:$0xff] 0.0
          %2871 = vst [vmem:[#allocation2 + $0x40] sm:$0xff] 0.0
          %2872 = vst [vmem:[#allocation2 + $0x48] sm:$0xff] 0.0
          %2873 = vst [vmem:[#allocation2 + $0x50] sm:$0xff] 0.0
          %2874 = vst [vmem:[#allocation2 + $0x58] sm:$0xff] 0.0
          %2875 = vst [vmem:[#allocation2 + $0x60] sm:$0xff] 0.0
          %2876 = vst [vmem:[#allocation2 + $0x68] sm:$0xff] 0.0
          %2877 = vst [vmem:[#allocation2 + $0x70] sm:$0xff] 0.0
          %2878 = vst [vmem:[#allocation2 + $0x78] sm:$0xff] 0.0
          %2879 = vst [vmem:[#allocation2 + $0x80] sm:$0xff] 0.0
          %2880 = vst [vmem:[#allocation2 + $0x88] sm:$0xff] 0.0
          %2881 = vst [vmem:[#allocation2 + $0x90] sm:$0xff] 0.0
          %2882 = vst [vmem:[#allocation2 + $0x98] sm:$0xff] 0.0
          %2883 = vst [vmem:[#allocation2 + $0xa0] sm:$0xff] 0.0
          %2884 = vst [vmem:[#allocation2 + $0xa8] sm:$0xff] 0.0
          %2885 = vst [vmem:[#allocation2 + $0xb0] sm:$0xff] 0.0
          %2886 = vst [vmem:[#allocation2 + $0xb8] sm:$0xff] 0.0
          %2887 = vst [vmem:[#allocation2 + $0xc0] sm:$0xff] 0.0
          %2888 = vst [vmem:[#allocation2 + $0xc8] sm:$0xff] 0.0
          %2889 = vst [vmem:[#allocation2 + $0xd0] sm:$0xff] 0.0
          %2890 = vst [vmem:[#allocation2 + $0xd8] sm:$0xff] 0.0
          %2891 = vst [vmem:[#allocation2 + $0xe0] sm:$0xff] 0.0
          %2892 = vst [vmem:[#allocation2 + $0xe8] sm:$0xff] 0.0
          %2893 = vst [vmem:[#allocation2 + $0xf0] sm:$0xff] 0.0
          %2894 = vst [vmem:[#allocation2 + $0xf8] sm:$0xff] 0.0
        $region44: #{tpu_custom_call.1} parent=39 // pred_fallthru
          _
        %v2895 = vld [vmem:[#allocation2] sm:$0xff]
        %v2896 = vld [vmem:[#allocation2 + $0x8] sm:$0xff]
        %v2897 = vld [vmem:[#allocation2 + $0x10] sm:$0xff]
        %v2898 = vld [vmem:[#allocation2 + $0x18] sm:$0xff]
        %v2899 = vld [vmem:[#allocation2 + $0x20] sm:$0xff]
        %v2900 = vld [vmem:[#allocation2 + $0x28] sm:$0xff]
        %v2901 = vld [vmem:[#allocation2 + $0x30] sm:$0xff]
        %v2902 = vld [vmem:[#allocation2 + $0x38] sm:$0xff]
        %v2903 = vld [vmem:[#allocation2 + $0x40] sm:$0xff]
        %v2904 = vld [vmem:[#allocation2 + $0x48] sm:$0xff]
        %v2905 = vld [vmem:[#allocation2 + $0x50] sm:$0xff]
        %v2906 = vld [vmem:[#allocation2 + $0x58] sm:$0xff]
        %v2907 = vld [vmem:[#allocation2 + $0x60] sm:$0xff]
        %v2908 = vld [vmem:[#allocation2 + $0x68] sm:$0xff]
        %v2909 = vld [vmem:[#allocation2 + $0x70] sm:$0xff]
        %v2910 = vld [vmem:[#allocation2 + $0x78] sm:$0xff]
        %v2911 = vld [vmem:[#allocation2 + $0x80] sm:$0xff]
        %v2912 = vld [vmem:[#allocation2 + $0x88] sm:$0xff]
        %v2913 = vld [vmem:[#allocation2 + $0x90] sm:$0xff]
        %v2914 = vld [vmem:[#allocation2 + $0x98] sm:$0xff]
        %v2915 = vld [vmem:[#allocation2 + $0xa0] sm:$0xff]
        %v2916 = vld [vmem:[#allocation2 + $0xa8] sm:$0xff]
        %v2917 = vld [vmem:[#allocation2 + $0xb0] sm:$0xff]
        %v2918 = vld [vmem:[#allocation2 + $0xb8] sm:$0xff]
        %v2919 = vld [vmem:[#allocation2 + $0xc0] sm:$0xff]
        %v2920 = vld [vmem:[#allocation2 + $0xc8] sm:$0xff]
        %v2921 = vld [vmem:[#allocation2 + $0xd0] sm:$0xff]
        %v2922 = vld [vmem:[#allocation2 + $0xd8] sm:$0xff]
        %v2923 = vld [vmem:[#allocation2 + $0xe0] sm:$0xff]
        %v2924 = vld [vmem:[#allocation2 + $0xe8] sm:$0xff]
        %v2925 = vld [vmem:[#allocation2 + $0xf0] sm:$0xff]
        %v2926 = vld [vmem:[#allocation2 + $0xf8] sm:$0xff]
        %v2927 = vadd.f32 %v2895, %v2765
        %v2928 = vadd.f32 %v2896, %v2767
        %v2929 = vadd.f32 %v2897, %v2771
        %v2930 = vadd.f32 %v2898, %v2773
        %v2931 = vadd.f32 %v2899, %v2777
        %v2932 = vadd.f32 %v2900, %v2779
        %v2933 = vadd.f32 %v2901, %v2783
        %v2934 = vadd.f32 %v2902, %v2785
        %v2935 = vadd.f32 %v2903, %v2789
        %v2936 = vadd.f32 %v2904, %v2791
        %v2937 = vadd.f32 %v2905, %v2795
        %v2938 = vadd.f32 %v2906, %v2797
        %v2939 = vadd.f32 %v2907, %v2801
        %v2940 = vadd.f32 %v2908, %v2803
        %v2941 = vadd.f32 %v2909, %v2807
        %v2942 = vadd.f32 %v2910, %v2809
        %v2943 = vadd.f32 %v2911, %v2813
        %v2944 = vadd.f32 %v2912, %v2815
        %v2945 = vadd.f32 %v2913, %v2819
        %v2946 = vadd.f32 %v2914, %v2821
        %v2947 = vadd.f32 %v2915, %v2825
        %v2948 = vadd.f32 %v2916, %v2827
        %v2949 = vadd.f32 %v2917, %v2831
        %v2950 = vadd.f32 %v2918, %v2833
        %v2951 = vadd.f32 %v2919, %v2837
        %v2952 = vadd.f32 %v2920, %v2839
        %v2953 = vadd.f32 %v2921, %v2843
        %v2954 = vadd.f32 %v2922, %v2845
        %v2955 = vadd.f32 %v2923, %v2849
        %v2956 = vadd.f32 %v2924, %v2851
        %v2957 = vadd.f32 %v2925, %v2855
        %v2958 = vadd.f32 %v2926, %v2857
        %2959 = vst [vmem:[#allocation2] sm:$0xff] %v2927
        %2960 = vst [vmem:[#allocation2 + $0x8] sm:$0xff] %v2928
        %2961 = vst [vmem:[#allocation2 + $0x10] sm:$0xff] %v2929
        %2962 = vst [vmem:[#allocation2 + $0x18] sm:$0xff] %v2930
        %2963 = vst [vmem:[#allocation2 + $0x20] sm:$0xff] %v2931
        %2964 = vst [vmem:[#allocation2 + $0x28] sm:$0xff] %v2932
        %2965 = vst [vmem:[#allocation2 + $0x30] sm:$0xff] %v2933
        %2966 = vst [vmem:[#allocation2 + $0x38] sm:$0xff] %v2934
        %2967 = vst [vmem:[#allocation2 + $0x40] sm:$0xff] %v2935
        %2968 = vst [vmem:[#allocation2 + $0x48] sm:$0xff] %v2936
        %2969 = vst [vmem:[#allocation2 + $0x50] sm:$0xff] %v2937
        %2970 = vst [vmem:[#allocation2 + $0x58] sm:$0xff] %v2938
        %2971 = vst [vmem:[#allocation2 + $0x60] sm:$0xff] %v2939
        %2972 = vst [vmem:[#allocation2 + $0x68] sm:$0xff] %v2940
        %2973 = vst [vmem:[#allocation2 + $0x70] sm:$0xff] %v2941
        %2974 = vst [vmem:[#allocation2 + $0x78] sm:$0xff] %v2942
        %2975 = vst [vmem:[#allocation2 + $0x80] sm:$0xff] %v2943
        %2976 = vst [vmem:[#allocation2 + $0x88] sm:$0xff] %v2944
        %2977 = vst [vmem:[#allocation2 + $0x90] sm:$0xff] %v2945
        %2978 = vst [vmem:[#allocation2 + $0x98] sm:$0xff] %v2946
        %2979 = vst [vmem:[#allocation2 + $0xa0] sm:$0xff] %v2947
        %2980 = vst [vmem:[#allocation2 + $0xa8] sm:$0xff] %v2948
        %2981 = vst [vmem:[#allocation2 + $0xb0] sm:$0xff] %v2949
        %2982 = vst [vmem:[#allocation2 + $0xb8] sm:$0xff] %v2950
        %2983 = vst [vmem:[#allocation2 + $0xc0] sm:$0xff] %v2951
        %2984 = vst [vmem:[#allocation2 + $0xc8] sm:$0xff] %v2952
        %2985 = vst [vmem:[#allocation2 + $0xd0] sm:$0xff] %v2953
        %2986 = vst [vmem:[#allocation2 + $0xd8] sm:$0xff] %v2954
        %2987 = vst [vmem:[#allocation2 + $0xe0] sm:$0xff] %v2955
        %2988 = vst [vmem:[#allocation2 + $0xe8] sm:$0xff] %v2956
        %2989 = vst [vmem:[#allocation2 + $0xf0] sm:$0xff] %v2957
        %2990 = vst [vmem:[#allocation2 + $0xf8] sm:$0xff] %v2958
        %p2991 = scmp.eq.s32.totalorder %s22, 3
        // Predicated region
        $region45: #{tpu_custom_call.1} parent=39 // pred_check
          %p2992 = pneg %p2991
        $region46: #{tpu_custom_call.1} parent=39 // pred_check_branch
          %2994 = sbr.rel (%p2992) target = $region48
        $region47: #{tpu_custom_call.1} parent=39 // pred_region
          %v2995 = vld [vmem:[#allocation2] sm:$0xff]
          %v2996 = vld [vmem:[#allocation2 + $0x8] sm:$0xff]
          %v2997 = vld [vmem:[#allocation2 + $0x10] sm:$0xff]
          %v2998 = vld [vmem:[#allocation2 + $0x18] sm:$0xff]
          %v2999 = vld [vmem:[#allocation2 + $0x20] sm:$0xff]
          %v3000 = vld [vmem:[#allocation2 + $0x28] sm:$0xff]
          %v3001 = vld [vmem:[#allocation2 + $0x30] sm:$0xff]
          %v3002 = vld [vmem:[#allocation2 + $0x38] sm:$0xff]
          %v3003 = vld [vmem:[#allocation2 + $0x40] sm:$0xff]
          %v3004 = vld [vmem:[#allocation2 + $0x48] sm:$0xff]
          %v3005 = vld [vmem:[#allocation2 + $0x50] sm:$0xff]
          %v3006 = vld [vmem:[#allocation2 + $0x58] sm:$0xff]
          %v3007 = vld [vmem:[#allocation2 + $0x60] sm:$0xff]
          %v3008 = vld [vmem:[#allocation2 + $0x68] sm:$0xff]
          %v3009 = vld [vmem:[#allocation2 + $0x70] sm:$0xff]
          %v3010 = vld [vmem:[#allocation2 + $0x78] sm:$0xff]
          %v3011 = vld [vmem:[#allocation2 + $0x80] sm:$0xff]
          %v3012 = vld [vmem:[#allocation2 + $0x88] sm:$0xff]
          %v3013 = vld [vmem:[#allocation2 + $0x90] sm:$0xff]
          %v3014 = vld [vmem:[#allocation2 + $0x98] sm:$0xff]
          %v3015 = vld [vmem:[#allocation2 + $0xa0] sm:$0xff]
          %v3016 = vld [vmem:[#allocation2 + $0xa8] sm:$0xff]
          %v3017 = vld [vmem:[#allocation2 + $0xb0] sm:$0xff]
          %v3018 = vld [vmem:[#allocation2 + $0xb8] sm:$0xff]
          %v3019 = vld [vmem:[#allocation2 + $0xc0] sm:$0xff]
          %v3020 = vld [vmem:[#allocation2 + $0xc8] sm:$0xff]
          %v3021 = vld [vmem:[#allocation2 + $0xd0] sm:$0xff]
          %v3022 = vld [vmem:[#allocation2 + $0xd8] sm:$0xff]
          %v3023 = vld [vmem:[#allocation2 + $0xe0] sm:$0xff]
          %v3024 = vld [vmem:[#allocation2 + $0xe8] sm:$0xff]
          %v3025 = vld [vmem:[#allocation2 + $0xf0] sm:$0xff]
          %v3026 = vld [vmem:[#allocation2 + $0xf8] sm:$0xff]
          %3027 = vst [vmem:[#allocation3] sm:$0xff] %v2995
          %3028 = vst [vmem:[#allocation3 + $0x8] sm:$0xff] %v2996
          %3029 = vst [vmem:[#allocation3 + $0x10] sm:$0xff] %v2997
          %3030 = vst [vmem:[#allocation3 + $0x18] sm:$0xff] %v2998
          %3031 = vst [vmem:[#allocation3 + $0x20] sm:$0xff] %v2999
          %3032 = vst [vmem:[#allocation3 + $0x28] sm:$0xff] %v3000
          %3033 = vst [vmem:[#allocation3 + $0x30] sm:$0xff] %v3001
          %3034 = vst [vmem:[#allocation3 + $0x38] sm:$0xff] %v3002
          %3035 = vst [vmem:[#allocation3 + $0x40] sm:$0xff] %v3003
          %3036 = vst [vmem:[#allocation3 + $0x48] sm:$0xff] %v3004
          %3037 = vst [vmem:[#allocation3 + $0x50] sm:$0xff] %v3005
          %3038 = vst [vmem:[#allocation3 + $0x58] sm:$0xff] %v3006
          %3039 = vst [vmem:[#allocation3 + $0x60] sm:$0xff] %v3007
          %3040 = vst [vmem:[#allocation3 + $0x68] sm:$0xff] %v3008
          %3041 = vst [vmem:[#allocation3 + $0x70] sm:$0xff] %v3009
          %3042 = vst [vmem:[#allocation3 + $0x78] sm:$0xff] %v3010
          %3043 = vst [vmem:[#allocation3 + $0x80] sm:$0xff] %v3011
          %3044 = vst [vmem:[#allocation3 + $0x88] sm:$0xff] %v3012
          %3045 = vst [vmem:[#allocation3 + $0x90] sm:$0xff] %v3013
          %3046 = vst [vmem:[#allocation3 + $0x98] sm:$0xff] %v3014
          %3047 = vst [vmem:[#allocation3 + $0xa0] sm:$0xff] %v3015
          %3048 = vst [vmem:[#allocation3 + $0xa8] sm:$0xff] %v3016
          %3049 = vst [vmem:[#allocation3 + $0xb0] sm:$0xff] %v3017
          %3050 = vst [vmem:[#allocation3 + $0xb8] sm:$0xff] %v3018
          %3051 = vst [vmem:[#allocation3 + $0xc0] sm:$0xff] %v3019
          %3052 = vst [vmem:[#allocation3 + $0xc8] sm:$0xff] %v3020
          %3053 = vst [vmem:[#allocation3 + $0xd0] sm:$0xff] %v3021
          %3054 = vst [vmem:[#allocation3 + $0xd8] sm:$0xff] %v3022
          %3055 = vst [vmem:[#allocation3 + $0xe0] sm:$0xff] %v3023
          %3056 = vst [vmem:[#allocation3 + $0xe8] sm:$0xff] %v3024
          %3057 = vst [vmem:[#allocation3 + $0xf0] sm:$0xff] %v3025
          %3058 = vst [vmem:[#allocation3 + $0xf8] sm:$0xff] %v3026
        $region48: #{tpu_custom_call.1} parent=39 // pred_fallthru
          _
        %s3059 = sand.u32 %s176, 1
        %s3060 = scalar_lea.sflag [#allocation6], %s3059
        %s3061 = sand.u32 %s176, 1
        %s3062 = smul.addr %s3061, 256
        %s3063 = scalar_lea.vmem [#allocation5], %s3062
        // Predicated region
        $region49: #{tpu_custom_call.1} parent=39 // pred_check
          %p3064 = pneg %p160
        $region50: #{tpu_custom_call.1} parent=39 // pred_check_branch
          %3066 = sbr.rel (%p3064) target = $region52
        $region51: #{tpu_custom_call.1} parent=39 // pred_region
          %s3068 = ssub.s32 4096, 4096
          %3069 = vsyncadd [#allocation4], %s3068
          %s3070 = sshll.u32 [#allocation3], 4
          %s3071 = int_to_ptr.vmem [resolvable:$true] %s3070
          %3076 = dma.vmem_to_hbm [thread:$0]  %s3071, 4096, %s5, [#allocation4], 256, 256, 16
        $region52: #{tpu_custom_call.1} parent=39 // pred_fallthru
          _
        // Predicated region
        $region53: #{tpu_custom_call.1} parent=39 // pred_check
          %p3077 = pneg %p186
        $region54: #{tpu_custom_call.1} parent=39 // pred_check_branch
          %3079 = sbr.rel (%p3077) target = $region56
        $region55: #{tpu_custom_call.1} parent=39 // pred_region
          %s3080 = smul.u32 2, %s22
          %s3082 = ssub.s32 4096, 4096
          %3083 = vsyncadd %s3060, %s3082
          %s3084 = smul.addr %s3080, 16
          %s3085 = smul.addr %s3084, 128
          %s3086 = scalar_lea.hbm %s6, %s3085
          %s3087 = sshll.u32 %s3063, 4
          %s3088 = int_to_ptr.vmem [resolvable:$true] %s3087
          %3093 = dma.vmem_to_hbm [thread:$0]  %s3088, 4096, %s3086, %s3060, 128, 128, 8
        $region56: #{tpu_custom_call.1} parent=39 // pred_fallthru
          _
        // Predicated region
        $region57: #{tpu_custom_call.1} parent=39 // pred_check
          %p3094 = pneg %p160
        $region58: #{tpu_custom_call.1} parent=39 // pred_check_branch
          %3096 = sbr.rel (%p3094) target = $region60
        $region59: #{tpu_custom_call.1} parent=39 // pred_region
          %3097 = dma.done [#allocation4], 4096
        $region60: #{tpu_custom_call.1} parent=39 // pred_fallthru
          _
      $region40: #{tpu_custom_call.1} parent=5 // pred_fallthru
        _
      %p3098 = scmp.le.s32.totalorder 2, %s17
      // Predicated region
      $region61: #{tpu_custom_call.1} parent=5 // pred_check
        %p3099 = pneg %p3098
      $region62: #{tpu_custom_call.1} parent=5 // pred_check_branch
        %3101 = sbr.rel (%p3099) target = $region64
      $region63: #{tpu_custom_call.1} parent=5 // pred_region
        %s3102 = ssub.s32 %s17, 2
        // Predicated region
        $region65: #{tpu_custom_call.1} parent=63 // pred_check
          %p3103 = pneg %p192
        $region66: #{tpu_custom_call.1} parent=63 // pred_check_branch
          %3105 = sbr.rel (%p3103) target = $region68
        $region67: #{tpu_custom_call.1} parent=63 // pred_region
          %s3106 = sand.u32 %s177, 1
          %s3107 = scalar_lea.sflag [#allocation6], %s3106
          %s3108 = sand.u32 %s177, 1
          %s3109 = smul.addr %s3108, 256
          %s3110 = scalar_lea.vmem [#allocation5], %s3109
          %3111 = dma.done %s3107, 4096
        $region68: #{tpu_custom_call.1} parent=63 // pred_fallthru
          _
      $region64: #{tpu_custom_call.1} parent=5 // pred_fallthru
        _
    $region6: #{tpu_custom_call.1} parent=1 // loop_footer
      %s21 = sadd.s32 1, %s17
    $region7: #{tpu_custom_call.1} parent=1 // loop_footer_branch
      %16 = sbr.rel target = $region3
    $region8: #{tpu_custom_call.1} parent=1 // loop_exit
      _
    %3112 = vsyncpa [#allocation4], 1
    %s3113 = scalar_lea.sflag [#allocation4], 1
    %3114 = vsyncpa %s3113, 1
    %3115 = vsyncpa [#allocation6], 1
    %s3116 = scalar_lea.sflag [#allocation6], 1
    %3117 = vsyncpa %s3116, 1

</llo_original>
